<compile_context>
chip_gen: v6e
topology: v6e:2x2x1
jax: 0.10.0
libtpu: 0.0.40
codegen_flags: <defaults>
</compile_context>

<pallas_src>
import functools

import jax
import jax.numpy as jnp
from jax import lax
from jax.experimental import pallas as pl
from jax.experimental.pallas import tpu as pltpu


def gru_block_kernel(gi_ref, whh_ref, bhn_ref, out_ref, h_ref):
    """Runs T timesteps of the GRU recurrence on one (batch-block, seq-block).

    gi_ref  : (Bb, T, 3H) bf16  precomputed x_t @ W_ih^T with b_ih (all gates) and
                                b_hh (r,z gates) folded in; gate order (r, z, n)
    whh_ref : (H, 3H)     bf16  hidden->hidden weights, pre-transposed, resident
    bhn_ref : (1, H)      f32   b_hh for the n gate (the only bias left in the loop)
    out_ref : (Bb, T, H)  f32   hidden states, written batch-major (no transpose)
    h_ref   : (Bb, H)     f32   VMEM scratch carrying h_{t-1} across seq grid steps
    """
    @pl.when(pl.program_id(1) == 0)            # new batch block -> h0 = zeros (as in module)
    def _():
        h_ref[...] = jnp.zeros_like(h_ref)

    Bb, T, G = gi_ref.shape
    H = G // 3

    w_hh = whh_ref[...]                                        # bf16, fetched once
    b_hn = jnp.broadcast_to(bhn_ref[...], (Bb, H))             # broadcast hoisted out of loop

    h = h_ref[...]                                             # (Bb, H) f32
    # Static unroll: t is a compile-time constant, so every Gi load / out store is a
    # static slice (no dynamic addressing on the serial critical path).
    # TODO(synk): if a bundle dump at the real size shows spill vld/vst, switch to an
    # outer lax.fori_loop with a small inner unroll to bound vreg live ranges.
    for t in range(T):
        gh = jnp.dot(h.astype(w_hh.dtype), w_hh,
                     preferred_element_type=jnp.float32)       # (Bb, 3H) f32, bf16 MXU operands
        r = jax.nn.sigmoid(gi_ref[:, t, 0:H].astype(jnp.float32) + gh[:, 0:H])
        z = jax.nn.sigmoid(gi_ref[:, t, H:2 * H].astype(jnp.float32) + gh[:, H:2 * H])
        n = jnp.tanh(gi_ref[:, t, 2 * H:].astype(jnp.float32)
                     + r * (gh[:, 2 * H:] + b_hn))
        h = n + z * (h - n)                                    # == (1-z)*n + z*h, one VPU op fewer
        out_ref[:, t, :] = h.astype(out_ref.dtype)

    h_ref[...] = h


def gru_encoder_t_forward(y, w_ih, w_hh, b_ih, b_hh, *, block_t=32, num_batch_blocks=1):
    """y: (B, S, D) -> (B, S, H).  Matches gru_encoder_t.forward (single-layer GRU, h0=0).

    block_t          : timesteps per grid step (>=16 recommended; amortizes grid overhead).
    num_batch_blocks : leading "parallel" grid axis.  Set to 2 on v7x when B >= 16 to shard
                       the serial recurrence across its two TensorCores; leave 1 on
                       single-TensorCore chips (v5e/v6e).
    """
    B, S, D = y.shape
    H = w_hh.shape[1]
    assert w_ih.shape == (3 * H, D) and w_hh.shape == (3 * H, H)
    assert H % 128 == 0, "hidden size must be a multiple of 128 (true for the real H=768)"
    assert block_t % 8 == 0 and num_batch_blocks >= 1

    # Batch: pad so every batch block is a multiple of 8 rows (sublane alignment).
    b_quant = 8 * num_batch_blocks
    B_pad = ((B + b_quant - 1) // b_quant) * b_quant
    block_b = B_pad // num_batch_blocks
    # Sequence: T timesteps per grid step (T equals full seq dim when S <= block_t).
    T = block_t if S > block_t else S
    S_pad = ((S + T - 1) // T) * T

    # Pad y (B,S,D) rather than gi (B,S,3H): avoids materializing an extra, 3x larger
    # padded copy of the projected gates in HBM.
    if B_pad != B or S_pad != S:
        y = jnp.pad(y, ((0, B_pad - B), (0, S_pad - S), (0, 0)))

    # ---- Hoisted input projection: one full-occupancy bf16 MXU matmul (f32 acc). ----
    # Fold b_ih (all gates) + b_hh (r,z gates) into Gi; b_hh[n] must stay inside r*(.).
    fused_b = jnp.concatenate([b_ih[:2 * H] + b_hh[:2 * H], b_ih[2 * H:]])        # (3H,)
    wih_t = jnp.transpose(w_ih).astype(jnp.bfloat16)                              # (D, 3H)
    gi = jnp.dot(y.reshape(B_pad * S_pad, D).astype(jnp.bfloat16), wih_t,
                 preferred_element_type=jnp.float32) + fused_b
    gi = gi.astype(jnp.bfloat16).reshape(B_pad, S_pad, 3 * H)   # bf16: halves HBM + VMEM stream

    whh_t = jnp.transpose(w_hh).astype(jnp.bfloat16)                              # (H, 3H)
    b_hn = b_hh[2 * H:].reshape(1, H).astype(jnp.float32)                         # n-gate hidden bias

    # Resident operands: constant index_map + single buffer (double-buffering them buys
    # nothing and would cost an extra ~3.5 MiB of VMEM at the real H=768).
    resident = pl.Buffered(1)

    out = pl.pallas_call(
        gru_block_kernel,
        out_shape=jax.ShapeDtypeStruct((B_pad, S_pad, H), jnp.float32),
        grid_spec=pltpu.PrefetchScalarGridSpec(
            num_scalar_prefetch=0,
            grid=(num_batch_blocks, S_pad // T),
            in_specs=[
                pl.BlockSpec((block_b, T, 3 * H), lambda b, i: (b, i, 0)),        # streamed Gi
                pl.BlockSpec((H, 3 * H), lambda b, i: (0, 0), pipeline_mode=resident),
                pl.BlockSpec((1, H), lambda b, i: (0, 0), pipeline_mode=resident),
            ],
            out_specs=pl.BlockSpec((block_b, T, H), lambda b, i: (b, i, 0)),      # batch-major out
            scratch_shapes=[pltpu.VMEM((block_b, H), jnp.float32)],               # carried hidden h
        ),
        compiler_params=pltpu.CompilerParams(
            # Batch blocks are independent recurrences -> "parallel" (v7x megacore sharding);
            # the time axis is inherently serial -> "arbitrary".
            dimension_semantics=("parallel", "arbitrary"),
            # Keep the larger T block fully buffered under v5e's 16 MiB scoped default.
            vmem_limit_bytes=32 * 1024 * 1024,
        ),
    )(gi, whh_t, b_hn)

    # Padded rows / trailing padded timesteps hold garbage and are sliced off; the carried
    # final h is not exposed (the module discards nn.GRU's h_n as well).
    return out[:B, :S, :]


def gru_reference(y, w_ih, w_hh, b_ih, b_hh):
    """Pure-JAX f32 (highest precision) reference of PyTorch nn.GRU, single layer, h0=0."""
    B, S, D = y.shape
    H = w_hh.shape[1]
    x = jnp.transpose(y, (1, 0, 2))  # (S, B, D)

    def step(h, x_t):
        gi = jnp.dot(x_t, w_ih.T, precision=lax.Precision.HIGHEST) + b_ih
        gh = jnp.dot(h, w_hh.T, precision=lax.Precision.HIGHEST) + b_hh
        r = jax.nn.sigmoid(gi[:, :H] + gh[:, :H])
        z = jax.nn.sigmoid(gi[:, H:2 * H] + gh[:, H:2 * H])
        n = jnp.tanh(gi[:, 2 * H:] + r * gh[:, 2 * H:])
        h_new = (1.0 - z) * n + z * h
        return h_new, h_new

    h0 = jnp.zeros((B, H), jnp.float32)
    _, outs = lax.scan(step, h0, x)
    return jnp.transpose(outs, (1, 0, 2))


if __name__ == "__main__":
    # Small stand-in for the real module (D = H = 768): feature sizes scaled to 128.
    # B=6 / S=20 deliberately exercise the batch + seq padding paths; block_t=8 keeps
    # several seq grid steps at this tiny size (default block_t=32 is for real shapes).
    B, S, D, H = 6, 20, 128, 128

    key = jax.random.PRNGKey(0)
    k_y, k_wih, k_whh, k_bih, k_bhh = jax.random.split(key, 5)

    bound = 1.0 / float(jnp.sqrt(jnp.float32(H)))   # PyTorch GRU default init range
    w_ih = jax.random.uniform(k_wih, (3 * H, D), jnp.float32, -bound, bound)
    w_hh = jax.random.uniform(k_whh, (3 * H, H), jnp.float32, -bound, bound)
    b_ih = jax.random.uniform(k_bih, (3 * H,), jnp.float32, -bound, bound)
    b_hh = jax.random.uniform(k_bhh, (3 * H,), jnp.float32, -bound, bound)
    y = jax.random.normal(k_y, (B, S, D), jnp.float32)

    fwd = jax.jit(functools.partial(gru_encoder_t_forward, block_t=8))
    out = jax.block_until_ready(fwd(y, w_ih, w_hh, b_ih, b_hh))

    ref = gru_reference(y, w_ih, w_hh, b_ih, b_hh)
    assert out.shape == (B, S, H), out.shape
    max_err = float(jnp.max(jnp.abs(out - ref)))
    mean_err = float(jnp.mean(jnp.abs(out - ref)))
    # bf16 MXU operands + bf16-stored Gi vs an f32-HIGHEST reference; error compounds
    # through the recurrence, so the tolerance is looser than a pure-f32 comparison.
    assert max_err < 8e-2 and mean_err < 1e-2, f"max {max_err}, mean {mean_err}"

    # Same result when the batch is sharded over the leading "parallel" grid axis
    # (the v7x two-TensorCore configuration).
    fwd2 = jax.jit(functools.partial(gru_encoder_t_forward, block_t=8, num_batch_blocks=2))
    out2 = jax.block_until_ready(fwd2(y, w_ih, w_hh, b_ih, b_hh))
    assert float(jnp.max(jnp.abs(out2 - out))) < 1e-5

    print("KERNEL_OK")
</pallas_src>

<mosaic_0001>
module attributes {stable_mosaic.version = 11 : i64} {
  func.func @gru_block_kernel(%arg0: i32, %arg1: i32, %arg2: memref<8x8x384xbf16, #tpu.memory_space<vmem>>, %arg3: memref<128x384xbf16, #tpu.memory_space<vmem>>, %arg4: memref<1x128xf32, #tpu.memory_space<vmem>>, %arg5: memref<8x8x128xf32, #tpu.memory_space<vmem>>, %arg6: memref<8x128xf32, #tpu.memory_space<vmem>>) attributes {dimension_semantics = [#tpu.dimension_semantics<parallel>, #tpu.dimension_semantics<arbitrary>], iteration_bounds = array<i64: 1, 3>, scalar_prefetch = 0 : i64, scratch_operands = 1 : i64, tpu.core_type = #tpu.core_type<tc>, window_params = [{transform_indices = @transform_0, window_bounds = array<i64: 8, 8, 384>}, {pipeline_mode = #tpu.pipeline_mode<synchronous>, transform_indices = @transform_1, window_bounds = array<i64: 128, 384>}, {pipeline_mode = #tpu.pipeline_mode<synchronous>, transform_indices = @transform_2, window_bounds = array<i64: 1, 128>}, {transform_indices = @transform_3, window_bounds = array<i64: 8, 8, 128>}]} {
    %c0_i32 = arith.constant 0 : i32
    %0 = arith.cmpi eq, %arg1, %c0_i32 : i32
    %1 = arith.extui %0 : i1 to i32
    %c0_i32_0 = arith.constant 0 : i32
    %2 = arith.cmpi ne, %1, %c0_i32_0 : i32
    scf.if %2 {
      %cst_118 = arith.constant 0.000000e+00 : f32
      %297 = vector.broadcast %cst_118 : f32 to vector<8x128xf32>
      %c0_119 = arith.constant 0 : index
      %c0_120 = arith.constant 0 : index
      %298 = vector.load %arg6[%c0_119, %c0_120] : memref<8x128xf32, #tpu.memory_space<vmem>>, vector<8x128xf32>
      tpu.vector_store %arg6[%c0_119, %c0_120], %297 {strides = array<i32>} : memref<8x128xf32, #tpu.memory_space<vmem>>, vector<8x128xf32>,
    } else {
    }
    %c0 = arith.constant 0 : index
    %c0_1 = arith.constant 0 : index
    %3 = vector.load %arg3[%c0, %c0_1] : memref<128x384xbf16, #tpu.memory_space<vmem>>, vector<128x384xbf16>
    %c0_2 = arith.constant 0 : index
    %c0_3 = arith.constant 0 : index
    %4 = vector.load %arg4[%c0_2, %c0_3] : memref<1x128xf32, #tpu.memory_space<vmem>>, vector<1x128xf32>
    %5 = vector.shape_cast %4 : vector<1x128xf32> to vector<1x128xf32>
    %6 = vector.broadcast %5 : vector<1x128xf32> to vector<8x128xf32>
    %c0_4 = arith.constant 0 : index
    %c0_5 = arith.constant 0 : index
    %7 = vector.load %arg6[%c0_4, %c0_5] : memref<8x128xf32, #tpu.memory_space<vmem>>, vector<8x128xf32>
    %8 = arith.truncf %7 : vector<8x128xf32> to vector<8x128xbf16>
    %cst = arith.constant dense<0.000000e+00> : vector<8x384xf32>
    %9 = tpu.matmul %8, %3, %cst {dimension_numbers = #tpu.dot_dimension_numbers<[1], [0], [0], [1], [0, 0, 1, 1], [], []>} : vector<8x128xbf16>, vector<128x384xbf16>, vector<8x384xf32> -> vector<8x384xf32>
    %c0_6 = arith.constant 0 : index
    %c0_7 = arith.constant 0 : index
    %c0_8 = arith.constant 0 : index
    %10 = vector.load %arg2[%c0_6, %c0_7, %c0_8] : memref<8x8x384xbf16, #tpu.memory_space<vmem>>, vector<8x1x128xbf16>
    %11 = vector.shape_cast %10 : vector<8x1x128xbf16> to vector<8x128xbf16>
    %12 = arith.extf %11 : vector<8x128xbf16> to vector<8x128xf32>
    %13 = vector.extract_strided_slice %9 {offsets = [0, 0], sizes = [8, 128], strides = [1, 1]} : vector<8x384xf32> to vector<8x128xf32>
    %14 = arith.addf %12, %13 : vector<8x128xf32>
    %15 = arith.negf %14 : vector<8x128xf32>
    %16 = math.exp %15 : vector<8x128xf32>
    %cst_9 = arith.constant 1.000000e+00 : f32
    %17 = vector.broadcast %cst_9 : f32 to vector<8x128xf32>
    %18 = arith.addf %17, %16 : vector<8x128xf32>
    %19 = arith.divf %17, %18 : vector<8x128xf32>
    %c0_10 = arith.constant 0 : index
    %c0_11 = arith.constant 0 : index
    %c128 = arith.constant 128 : index
    %20 = vector.load %arg2[%c0_10, %c0_11, %c128] : memref<8x8x384xbf16, #tpu.memory_space<vmem>>, vector<8x1x128xbf16>
    %21 = vector.shape_cast %20 : vector<8x1x128xbf16> to vector<8x128xbf16>
    %22 = arith.extf %21 : vector<8x128xbf16> to vector<8x128xf32>
    %23 = vector.extract_strided_slice %9 {offsets = [0, 128], sizes = [8, 128], strides = [1, 1]} : vector<8x384xf32> to vector<8x128xf32>
    %24 = arith.addf %22, %23 : vector<8x128xf32>
    %25 = arith.negf %24 : vector<8x128xf32>
    %26 = math.exp %25 : vector<8x128xf32>
    %cst_12 = arith.constant 1.000000e+00 : f32
    %27 = vector.broadcast %cst_12 : f32 to vector<8x128xf32>
    %28 = arith.addf %27, %26 : vector<8x128xf32>
    %29 = arith.divf %27, %28 : vector<8x128xf32>
    %c0_13 = arith.constant 0 : index
    %c0_14 = arith.constant 0 : index
    %c256 = arith.constant 256 : index
    %30 = vector.load %arg2[%c0_13, %c0_14, %c256] : memref<8x8x384xbf16, #tpu.memory_space<vmem>>, vector<8x1x128xbf16>
    %31 = vector.shape_cast %30 : vector<8x1x128xbf16> to vector<8x128xbf16>
    %32 = arith.extf %31 : vector<8x128xbf16> to vector<8x128xf32>
    %33 = vector.extract_strided_slice %9 {offsets = [0, 256], sizes = [8, 128], strides = [1, 1]} : vector<8x384xf32> to vector<8x128xf32>
    %34 = arith.addf %33, %6 : vector<8x128xf32>
    %35 = arith.mulf %19, %34 : vector<8x128xf32>
    %36 = arith.addf %32, %35 : vector<8x128xf32>
    %37 = math.tanh %36 : vector<8x128xf32>
    %38 = arith.subf %7, %37 : vector<8x128xf32>
    %39 = arith.mulf %29, %38 : vector<8x128xf32>
    %40 = arith.addf %37, %39 : vector<8x128xf32>
    %c0_15 = arith.constant 0 : index
    %c0_16 = arith.constant 0 : index
    %c0_17 = arith.constant 0 : index
    %41 = vector.load %arg5[%c0_15, %c0_16, %c0_17] : memref<8x8x128xf32, #tpu.memory_space<vmem>>, vector<8x1x128xf32>
    %42 = vector.shape_cast %41 : vector<8x1x128xf32> to vector<8x128xf32>
    %43 = vector.shape_cast %40 : vector<8x128xf32> to vector<8x1x128xf32>
    tpu.vector_store %arg5[%c0_15, %c0_16, %c0_17], %43 {strides = array<i32>} : memref<8x8x128xf32, #tpu.memory_space<vmem>>, vector<8x1x128xf32>,
    %44 = arith.truncf %40 : vector<8x128xf32> to vector<8x128xbf16>
    %cst_18 = arith.constant dense<0.000000e+00> : vector<8x384xf32>
    %45 = tpu.matmul %44, %3, %cst_18 {dimension_numbers = #tpu.dot_dimension_numbers<[1], [0], [0], [1], [0, 0, 1, 1], [], []>} : vector<8x128xbf16>, vector<128x384xbf16>, vector<8x384xf32> -> vector<8x384xf32>
    %c0_19 = arith.constant 0 : index
    %c1 = arith.constant 1 : index
    %c0_20 = arith.constant 0 : index
    %46 = vector.load %arg2[%c0_19, %c1, %c0_20] : memref<8x8x384xbf16, #tpu.memory_space<vmem>>, vector<8x1x128xbf16>
    %47 = vector.shape_cast %46 : vector<8x1x128xbf16> to vector<8x128xbf16>
    %48 = arith.extf %47 : vector<8x128xbf16> to vector<8x128xf32>
    %49 = vector.extract_strided_slice %45 {offsets = [0, 0], sizes = [8, 128], strides = [1, 1]} : vector<8x384xf32> to vector<8x128xf32>
    %50 = arith.addf %48, %49 : vector<8x128xf32>
    %51 = arith.negf %50 : vector<8x128xf32>
    %52 = math.exp %51 : vector<8x128xf32>
    %cst_21 = arith.constant 1.000000e+00 : f32
    %53 = vector.broadcast %cst_21 : f32 to vector<8x128xf32>
    %54 = arith.addf %53, %52 : vector<8x128xf32>
    %55 = arith.divf %53, %54 : vector<8x128xf32>
    %c0_22 = arith.constant 0 : index
    %c1_23 = arith.constant 1 : index
    %c128_24 = arith.constant 128 : index
    %56 = vector.load %arg2[%c0_22, %c1_23, %c128_24] : memref<8x8x384xbf16, #tpu.memory_space<vmem>>, vector<8x1x128xbf16>
    %57 = vector.shape_cast %56 : vector<8x1x128xbf16> to vector<8x128xbf16>
    %58 = arith.extf %57 : vector<8x128xbf16> to vector<8x128xf32>
    %59 = vector.extract_strided_slice %45 {offsets = [0, 128], sizes = [8, 128], strides = [1, 1]} : vector<8x384xf32> to vector<8x128xf32>
    %60 = arith.addf %58, %59 : vector<8x128xf32>
    %61 = arith.negf %60 : vector<8x128xf32>
    %62 = math.exp %61 : vector<8x128xf32>
    %cst_25 = arith.constant 1.000000e+00 : f32
    %63 = vector.broadcast %cst_25 : f32 to vector<8x128xf32>
    %64 = arith.addf %63, %62 : vector<8x128xf32>
    %65 = arith.divf %63, %64 : vector<8x128xf32>
    %c0_26 = arith.constant 0 : index
    %c1_27 = arith.constant 1 : index
    %c256_28 = arith.constant 256 : index
    %66 = vector.load %arg2[%c0_26, %c1_27, %c256_28] : memref<8x8x384xbf16, #tpu.memory_space<vmem>>, vector<8x1x128xbf16>
    %67 = vector.shape_cast %66 : vector<8x1x128xbf16> to vector<8x128xbf16>
    %68 = arith.extf %67 : vector<8x128xbf16> to vector<8x128xf32>
    %69 = vector.extract_strided_slice %45 {offsets = [0, 256], sizes = [8, 128], strides = [1, 1]} : vector<8x384xf32> to vector<8x128xf32>
    %70 = arith.addf %69, %6 : vector<8x128xf32>
    %71 = arith.mulf %55, %70 : vector<8x128xf32>
    %72 = arith.addf %68, %71 : vector<8x128xf32>
    %73 = math.tanh %72 : vector<8x128xf32>
    %74 = arith.subf %40, %73 : vector<8x128xf32>
    %75 = arith.mulf %65, %74 : vector<8x128xf32>
    %76 = arith.addf %73, %75 : vector<8x128xf32>
    %c0_29 = arith.constant 0 : index
    %c1_30 = arith.constant 1 : index
    %c0_31 = arith.constant 0 : index
    %77 = vector.load %arg5[%c0_29, %c1_30, %c0_31] : memref<8x8x128xf32, #tpu.memory_space<vmem>>, vector<8x1x128xf32>
    %78 = vector.shape_cast %77 : vector<8x1x128xf32> to vector<8x128xf32>
    %79 = vector.shape_cast %76 : vector<8x128xf32> to vector<8x1x128xf32>
    tpu.vector_store %arg5[%c0_29, %c1_30, %c0_31], %79 {strides = array<i32>} : memref<8x8x128xf32, #tpu.memory_space<vmem>>, vector<8x1x128xf32>,
    %80 = arith.truncf %76 : vector<8x128xf32> to vector<8x128xbf16>
    %cst_32 = arith.constant dense<0.000000e+00> : vector<8x384xf32>
    %81 = tpu.matmul %80, %3, %cst_32 {dimension_numbers = #tpu.dot_dimension_numbers<[1], [0], [0], [1], [0, 0, 1, 1], [], []>} : vector<8x128xbf16>, vector<128x384xbf16>, vector<8x384xf32> -> vector<8x384xf32>
    %c0_33 = arith.constant 0 : index
    %c2 = arith.constant 2 : index
    %c0_34 = arith.constant 0 : index
    %82 = vector.load %arg2[%c0_33, %c2, %c0_34] : memref<8x8x384xbf16, #tpu.memory_space<vmem>>, vector<8x1x128xbf16>
    %83 = vector.shape_cast %82 : vector<8x1x128xbf16> to vector<8x128xbf16>
    %84 = arith.extf %83 : vector<8x128xbf16> to vector<8x128xf32>
    %85 = vector.extract_strided_slice %81 {offsets = [0, 0], sizes = [8, 128], strides = [1, 1]} : vector<8x384xf32> to vector<8x128xf32>
    %86 = arith.addf %84, %85 : vector<8x128xf32>
    %87 = arith.negf %86 : vector<8x128xf32>
    %88 = math.exp %87 : vector<8x128xf32>
    %cst_35 = arith.constant 1.000000e+00 : f32
    %89 = vector.broadcast %cst_35 : f32 to vector<8x128xf32>
    %90 = arith.addf %89, %88 : vector<8x128xf32>
    %91 = arith.divf %89, %90 : vector<8x128xf32>
    %c0_36 = arith.constant 0 : index
    %c2_37 = arith.constant 2 : index
    %c128_38 = arith.constant 128 : index
    %92 = vector.load %arg2[%c0_36, %c2_37, %c128_38] : memref<8x8x384xbf16, #tpu.memory_space<vmem>>, vector<8x1x128xbf16>
    %93 = vector.shape_cast %92 : vector<8x1x128xbf16> to vector<8x128xbf16>
    %94 = arith.extf %93 : vector<8x128xbf16> to vector<8x128xf32>
    %95 = vector.extract_strided_slice %81 {offsets = [0, 128], sizes = [8, 128], strides = [1, 1]} : vector<8x384xf32> to vector<8x128xf32>
    %96 = arith.addf %94, %95 : vector<8x128xf32>
    %97 = arith.negf %96 : vector<8x128xf32>
    %98 = math.exp %97 : vector<8x128xf32>
    %cst_39 = arith.constant 1.000000e+00 : f32
    %99 = vector.broadcast %cst_39 : f32 to vector<8x128xf32>
    %100 = arith.addf %99, %98 : vector<8x128xf32>
    %101 = arith.divf %99, %100 : vector<8x128xf32>
    %c0_40 = arith.constant 0 : index
    %c2_41 = arith.constant 2 : index
    %c256_42 = arith.constant 256 : index
    %102 = vector.load %arg2[%c0_40, %c2_41, %c256_42] : memref<8x8x384xbf16, #tpu.memory_space<vmem>>, vector<8x1x128xbf16>
    %103 = vector.shape_cast %102 : vector<8x1x128xbf16> to vector<8x128xbf16>
    %104 = arith.extf %103 : vector<8x128xbf16> to vector<8x128xf32>
    %105 = vector.extract_strided_slice %81 {offsets = [0, 256], sizes = [8, 128], strides = [1, 1]} : vector<8x384xf32> to vector<8x128xf32>
    %106 = arith.addf %105, %6 : vector<8x128xf32>
    %107 = arith.mulf %91, %106 : vector<8x128xf32>
    %108 = arith.addf %104, %107 : vector<8x128xf32>
    %109 = math.tanh %108 : vector<8x128xf32>
    %110 = arith.subf %76, %109 : vector<8x128xf32>
    %111 = arith.mulf %101, %110 : vector<8x128xf32>
    %112 = arith.addf %109, %111 : vector<8x128xf32>
    %c0_43 = arith.constant 0 : index
    %c2_44 = arith.constant 2 : index
    %c0_45 = arith.constant 0 : index
    %113 = vector.load %arg5[%c0_43, %c2_44, %c0_45] : memref<8x8x128xf32, #tpu.memory_space<vmem>>, vector<8x1x128xf32>
    %114 = vector.shape_cast %113 : vector<8x1x128xf32> to vector<8x128xf32>
    %115 = vector.shape_cast %112 : vector<8x128xf32> to vector<8x1x128xf32>
    tpu.vector_store %arg5[%c0_43, %c2_44, %c0_45], %115 {strides = array<i32>} : memref<8x8x128xf32, #tpu.memory_space<vmem>>, vector<8x1x128xf32>,
    %116 = arith.truncf %112 : vector<8x128xf32> to vector<8x128xbf16>
    %cst_46 = arith.constant dense<0.000000e+00> : vector<8x384xf32>
    %117 = tpu.matmul %116, %3, %cst_46 {dimension_numbers = #tpu.dot_dimension_numbers<[1], [0], [0], [1], [0, 0, 1, 1], [], []>} : vector<8x128xbf16>, vector<128x384xbf16>, vector<8x384xf32> -> vector<8x384xf32>
    %c0_47 = arith.constant 0 : index
    %c3 = arith.constant 3 : index
    %c0_48 = arith.constant 0 : index
    %118 = vector.load %arg2[%c0_47, %c3, %c0_48] : memref<8x8x384xbf16, #tpu.memory_space<vmem>>, vector<8x1x128xbf16>
    %119 = vector.shape_cast %118 : vector<8x1x128xbf16> to vector<8x128xbf16>
    %120 = arith.extf %119 : vector<8x128xbf16> to vector<8x128xf32>
    %121 = vector.extract_strided_slice %117 {offsets = [0, 0], sizes = [8, 128], strides = [1, 1]} : vector<8x384xf32> to vector<8x128xf32>
    %122 = arith.addf %120, %121 : vector<8x128xf32>
    %123 = arith.negf %122 : vector<8x128xf32>
    %124 = math.exp %123 : vector<8x128xf32>
    %cst_49 = arith.constant 1.000000e+00 : f32
    %125 = vector.broadcast %cst_49 : f32 to vector<8x128xf32>
    %126 = arith.addf %125, %124 : vector<8x128xf32>
    %127 = arith.divf %125, %126 : vector<8x128xf32>
    %c0_50 = arith.constant 0 : index
    %c3_51 = arith.constant 3 : index
    %c128_52 = arith.constant 128 : index
    %128 = vector.load %arg2[%c0_50, %c3_51, %c128_52] : memref<8x8x384xbf16, #tpu.memory_space<vmem>>, vector<8x1x128xbf16>
    %129 = vector.shape_cast %128 : vector<8x1x128xbf16> to vector<8x128xbf16>
    %130 = arith.extf %129 : vector<8x128xbf16> to vector<8x128xf32>
    %131 = vector.extract_strided_slice %117 {offsets = [0, 128], sizes = [8, 128], strides = [1, 1]} : vector<8x384xf32> to vector<8x128xf32>
    %132 = arith.addf %130, %131 : vector<8x128xf32>
    %133 = arith.negf %132 : vector<8x128xf32>
    %134 = math.exp %133 : vector<8x128xf32>
    %cst_53 = arith.constant 1.000000e+00 : f32
    %135 = vector.broadcast %cst_53 : f32 to vector<8x128xf32>
    %136 = arith.addf %135, %134 : vector<8x128xf32>
    %137 = arith.divf %135, %136 : vector<8x128xf32>
    %c0_54 = arith.constant 0 : index
    %c3_55 = arith.constant 3 : index
    %c256_56 = arith.constant 256 : index
    %138 = vector.load %arg2[%c0_54, %c3_55, %c256_56] : memref<8x8x384xbf16, #tpu.memory_space<vmem>>, vector<8x1x128xbf16>
    %139 = vector.shape_cast %138 : vector<8x1x128xbf16> to vector<8x128xbf16>
    %140 = arith.extf %139 : vector<8x128xbf16> to vector<8x128xf32>
    %141 = vector.extract_strided_slice %117 {offsets = [0, 256], sizes = [8, 128], strides = [1, 1]} : vector<8x384xf32> to vector<8x128xf32>
    %142 = arith.addf %141, %6 : vector<8x128xf32>
    %143 = arith.mulf %127, %142 : vector<8x128xf32>
    %144 = arith.addf %140, %143 : vector<8x128xf32>
    %145 = math.tanh %144 : vector<8x128xf32>
    %146 = arith.subf %112, %145 : vector<8x128xf32>
    %147 = arith.mulf %137, %146 : vector<8x128xf32>
    %148 = arith.addf %145, %147 : vector<8x128xf32>
    %c0_57 = arith.constant 0 : index
    %c3_58 = arith.constant 3 : index
    %c0_59 = arith.constant 0 : index
    %149 = vector.load %arg5[%c0_57, %c3_58, %c0_59] : memref<8x8x128xf32, #tpu.memory_space<vmem>>, vector<8x1x128xf32>
    %150 = vector.shape_cast %149 : vector<8x1x128xf32> to vector<8x128xf32>
    %151 = vector.shape_cast %148 : vector<8x128xf32> to vector<8x1x128xf32>
    tpu.vector_store %arg5[%c0_57, %c3_58, %c0_59], %151 {strides = array<i32>} : memref<8x8x128xf32, #tpu.memory_space<vmem>>, vector<8x1x128xf32>,
    %152 = arith.truncf %148 : vector<8x128xf32> to vector<8x128xbf16>
    %cst_60 = arith.constant dense<0.000000e+00> : vector<8x384xf32>
    %153 = tpu.matmul %152, %3, %cst_60 {dimension_numbers = #tpu.dot_dimension_numbers<[1], [0], [0], [1], [0, 0, 1, 1], [], []>} : vector<8x128xbf16>, vector<128x384xbf16>, vector<8x384xf32> -> vector<8x384xf32>
    %c0_61 = arith.constant 0 : index
    %c4 = arith.constant 4 : index
    %c0_62 = arith.constant 0 : index
    %154 = vector.load %arg2[%c0_61, %c4, %c0_62] : memref<8x8x384xbf16, #tpu.memory_space<vmem>>, vector<8x1x128xbf16>
    %155 = vector.shape_cast %154 : vector<8x1x128xbf16> to vector<8x128xbf16>
    %156 = arith.extf %155 : vector<8x128xbf16> to vector<8x128xf32>
    %157 = vector.extract_strided_slice %153 {offsets = [0, 0], sizes = [8, 128], strides = [1, 1]} : vector<8x384xf32> to vector<8x128xf32>
    %158 = arith.addf %156, %157 : vector<8x128xf32>
    %159 = arith.negf %158 : vector<8x128xf32>
    %160 = math.exp %159 : vector<8x128xf32>
    %cst_63 = arith.constant 1.000000e+00 : f32
    %161 = vector.broadcast %cst_63 : f32 to vector<8x128xf32>
    %162 = arith.addf %161, %160 : vector<8x128xf32>
    %163 = arith.divf %161, %162 : vector<8x128xf32>
    %c0_64 = arith.constant 0 : index
    %c4_65 = arith.constant 4 : index
    %c128_66 = arith.constant 128 : index
    %164 = vector.load %arg2[%c0_64, %c4_65, %c128_66] : memref<8x8x384xbf16, #tpu.memory_space<vmem>>, vector<8x1x128xbf16>
    %165 = vector.shape_cast %164 : vector<8x1x128xbf16> to vector<8x128xbf16>
    %166 = arith.extf %165 : vector<8x128xbf16> to vector<8x128xf32>
    %167 = vector.extract_strided_slice %153 {offsets = [0, 128], sizes = [8, 128], strides = [1, 1]} : vector<8x384xf32> to vector<8x128xf32>
    %168 = arith.addf %166, %167 : vector<8x128xf32>
    %169 = arith.negf %168 : vector<8x128xf32>
    %170 = math.exp %169 : vector<8x128xf32>
    %cst_67 = arith.constant 1.000000e+00 : f32
    %171 = vector.broadcast %cst_67 : f32 to vector<8x128xf32>
    %172 = arith.addf %171, %170 : vector<8x128xf32>
    %173 = arith.divf %171, %172 : vector<8x128xf32>
    %c0_68 = arith.constant 0 : index
    %c4_69 = arith.constant 4 : index
    %c256_70 = arith.constant 256 : index
    %174 = vector.load %arg2[%c0_68, %c4_69, %c256_70] : memref<8x8x384xbf16, #tpu.memory_space<vmem>>, vector<8x1x128xbf16>
    %175 = vector.shape_cast %174 : vector<8x1x128xbf16> to vector<8x128xbf16>
    %176 = arith.extf %175 : vector<8x128xbf16> to vector<8x128xf32>
    %177 = vector.extract_strided_slice %153 {offsets = [0, 256], sizes = [8, 128], strides = [1, 1]} : vector<8x384xf32> to vector<8x128xf32>
    %178 = arith.addf %177, %6 : vector<8x128xf32>
    %179 = arith.mulf %163, %178 : vector<8x128xf32>
    %180 = arith.addf %176, %179 : vector<8x128xf32>
    %181 = math.tanh %180 : vector<8x128xf32>
    %182 = arith.subf %148, %181 : vector<8x128xf32>
    %183 = arith.mulf %173, %182 : vector<8x128xf32>
    %184 = arith.addf %181, %183 : vector<8x128xf32>
    %c0_71 = arith.constant 0 : index
    %c4_72 = arith.constant 4 : index
    %c0_73 = arith.constant 0 : index
    %185 = vector.load %arg5[%c0_71, %c4_72, %c0_73] : memref<8x8x128xf32, #tpu.memory_space<vmem>>, vector<8x1x128xf32>
    %186 = vector.shape_cast %185 : vector<8x1x128xf32> to vector<8x128xf32>
    %187 = vector.shape_cast %184 : vector<8x128xf32> to vector<8x1x128xf32>
    tpu.vector_store %arg5[%c0_71, %c4_72, %c0_73], %187 {strides = array<i32>} : memref<8x8x128xf32, #tpu.memory_space<vmem>>, vector<8x1x128xf32>,
    %188 = arith.truncf %184 : vector<8x128xf32> to vector<8x128xbf16>
    %cst_74 = arith.constant dense<0.000000e+00> : vector<8x384xf32>
    %189 = tpu.matmul %188, %3, %cst_74 {dimension_numbers = #tpu.dot_dimension_numbers<[1], [0], [0], [1], [0, 0, 1, 1], [], []>} : vector<8x128xbf16>, vector<128x384xbf16>, vector<8x384xf32> -> vector<8x384xf32>
    %c0_75 = arith.constant 0 : index
    %c5 = arith.constant 5 : index
    %c0_76 = arith.constant 0 : index
    %190 = vector.load %arg2[%c0_75, %c5, %c0_76] : memref<8x8x384xbf16, #tpu.memory_space<vmem>>, vector<8x1x128xbf16>
    %191 = vector.shape_cast %190 : vector<8x1x128xbf16> to vector<8x128xbf16>
    %192 = arith.extf %191 : vector<8x128xbf16> to vector<8x128xf32>
    %193 = vector.extract_strided_slice %189 {offsets = [0, 0], sizes = [8, 128], strides = [1, 1]} : vector<8x384xf32> to vector<8x128xf32>
    %194 = arith.addf %192, %193 : vector<8x128xf32>
    %195 = arith.negf %194 : vector<8x128xf32>
    %196 = math.exp %195 : vector<8x128xf32>
    %cst_77 = arith.constant 1.000000e+00 : f32
    %197 = vector.broadcast %cst_77 : f32 to vector<8x128xf32>
    %198 = arith.addf %197, %196 : vector<8x128xf32>
    %199 = arith.divf %197, %198 : vector<8x128xf32>
    %c0_78 = arith.constant 0 : index
    %c5_79 = arith.constant 5 : index
    %c128_80 = arith.constant 128 : index
    %200 = vector.load %arg2[%c0_78, %c5_79, %c128_80] : memref<8x8x384xbf16, #tpu.memory_space<vmem>>, vector<8x1x128xbf16>
    %201 = vector.shape_cast %200 : vector<8x1x128xbf16> to vector<8x128xbf16>
    %202 = arith.extf %201 : vector<8x128xbf16> to vector<8x128xf32>
    %203 = vector.extract_strided_slice %189 {offsets = [0, 128], sizes = [8, 128], strides = [1, 1]} : vector<8x384xf32> to vector<8x128xf32>
    %204 = arith.addf %202, %203 : vector<8x128xf32>
    %205 = arith.negf %204 : vector<8x128xf32>
    %206 = math.exp %205 : vector<8x128xf32>
    %cst_81 = arith.constant 1.000000e+00 : f32
    %207 = vector.broadcast %cst_81 : f32 to vector<8x128xf32>
    %208 = arith.addf %207, %206 : vector<8x128xf32>
    %209 = arith.divf %207, %208 : vector<8x128xf32>
    %c0_82 = arith.constant 0 : index
    %c5_83 = arith.constant 5 : index
    %c256_84 = arith.constant 256 : index
    %210 = vector.load %arg2[%c0_82, %c5_83, %c256_84] : memref<8x8x384xbf16, #tpu.memory_space<vmem>>, vector<8x1x128xbf16>
    %211 = vector.shape_cast %210 : vector<8x1x128xbf16> to vector<8x128xbf16>
    %212 = arith.extf %211 : vector<8x128xbf16> to vector<8x128xf32>
    %213 = vector.extract_strided_slice %189 {offsets = [0, 256], sizes = [8, 128], strides = [1, 1]} : vector<8x384xf32> to vector<8x128xf32>
    %214 = arith.addf %213, %6 : vector<8x128xf32>
    %215 = arith.mulf %199, %214 : vector<8x128xf32>
    %216 = arith.addf %212, %215 : vector<8x128xf32>
    %217 = math.tanh %216 : vector<8x128xf32>
    %218 = arith.subf %184, %217 : vector<8x128xf32>
    %219 = arith.mulf %209, %218 : vector<8x128xf32>
    %220 = arith.addf %217, %219 : vector<8x128xf32>
    %c0_85 = arith.constant 0 : index
    %c5_86 = arith.constant 5 : index
    %c0_87 = arith.constant 0 : index
    %221 = vector.load %arg5[%c0_85, %c5_86, %c0_87] : memref<8x8x128xf32, #tpu.memory_space<vmem>>, vector<8x1x128xf32>
    %222 = vector.shape_cast %221 : vector<8x1x128xf32> to vector<8x128xf32>
    %223 = vector.shape_cast %220 : vector<8x128xf32> to vector<8x1x128xf32>
    tpu.vector_store %arg5[%c0_85, %c5_86, %c0_87], %223 {strides = array<i32>} : memref<8x8x128xf32, #tpu.memory_space<vmem>>, vector<8x1x128xf32>,
    %224 = arith.truncf %220 : vector<8x128xf32> to vector<8x128xbf16>
    %cst_88 = arith.constant dense<0.000000e+00> : vector<8x384xf32>
    %225 = tpu.matmul %224, %3, %cst_88 {dimension_numbers = #tpu.dot_dimension_numbers<[1], [0], [0], [1], [0, 0, 1, 1], [], []>} : vector<8x128xbf16>, vector<128x384xbf16>, vector<8x384xf32> -> vector<8x384xf32>
    %c0_89 = arith.constant 0 : index
    %c6 = arith.constant 6 : index
    %c0_90 = arith.constant 0 : index
    %226 = vector.load %arg2[%c0_89, %c6, %c0_90] : memref<8x8x384xbf16, #tpu.memory_space<vmem>>, vector<8x1x128xbf16>
    %227 = vector.shape_cast %226 : vector<8x1x128xbf16> to vector<8x128xbf16>
    %228 = arith.extf %227 : vector<8x128xbf16> to vector<8x128xf32>
    %229 = vector.extract_strided_slice %225 {offsets = [0, 0], sizes = [8, 128], strides = [1, 1]} : vector<8x384xf32> to vector<8x128xf32>
    %230 = arith.addf %228, %229 : vector<8x128xf32>
    %231 = arith.negf %230 : vector<8x128xf32>
    %232 = math.exp %231 : vector<8x128xf32>
    %cst_91 = arith.constant 1.000000e+00 : f32
    %233 = vector.broadcast %cst_91 : f32 to vector<8x128xf32>
    %234 = arith.addf %233, %232 : vector<8x128xf32>
    %235 = arith.divf %233, %234 : vector<8x128xf32>
    %c0_92 = arith.constant 0 : index
    %c6_93 = arith.constant 6 : index
    %c128_94 = arith.constant 128 : index
    %236 = vector.load %arg2[%c0_92, %c6_93, %c128_94] : memref<8x8x384xbf16, #tpu.memory_space<vmem>>, vector<8x1x128xbf16>
    %237 = vector.shape_cast %236 : vector<8x1x128xbf16> to vector<8x128xbf16>
    %238 = arith.extf %237 : vector<8x128xbf16> to vector<8x128xf32>
    %239 = vector.extract_strided_slice %225 {offsets = [0, 128], sizes = [8, 128], strides = [1, 1]} : vector<8x384xf32> to vector<8x128xf32>
    %240 = arith.addf %238, %239 : vector<8x128xf32>
    %241 = arith.negf %240 : vector<8x128xf32>
    %242 = math.exp %241 : vector<8x128xf32>
    %cst_95 = arith.constant 1.000000e+00 : f32
    %243 = vector.broadcast %cst_95 : f32 to vector<8x128xf32>
    %244 = arith.addf %243, %242 : vector<8x128xf32>
    %245 = arith.divf %243, %244 : vector<8x128xf32>
    %c0_96 = arith.constant 0 : index
    %c6_97 = arith.constant 6 : index
    %c256_98 = arith.constant 256 : index
    %246 = vector.load %arg2[%c0_96, %c6_97, %c256_98] : memref<8x8x384xbf16, #tpu.memory_space<vmem>>, vector<8x1x128xbf16>
    %247 = vector.shape_cast %246 : vector<8x1x128xbf16> to vector<8x128xbf16>
    %248 = arith.extf %247 : vector<8x128xbf16> to vector<8x128xf32>
    %249 = vector.extract_strided_slice %225 {offsets = [0, 256], sizes = [8, 128], strides = [1, 1]} : vector<8x384xf32> to vector<8x128xf32>
    %250 = arith.addf %249, %6 : vector<8x128xf32>
    %251 = arith.mulf %235, %250 : vector<8x128xf32>
    %252 = arith.addf %248, %251 : vector<8x128xf32>
    %253 = math.tanh %252 : vector<8x128xf32>
    %254 = arith.subf %220, %253 : vector<8x128xf32>
    %255 = arith.mulf %245, %254 : vector<8x128xf32>
    %256 = arith.addf %253, %255 : vector<8x128xf32>
    %c0_99 = arith.constant 0 : index
    %c6_100 = arith.constant 6 : index
    %c0_101 = arith.constant 0 : index
    %257 = vector.load %arg5[%c0_99, %c6_100, %c0_101] : memref<8x8x128xf32, #tpu.memory_space<vmem>>, vector<8x1x128xf32>
    %258 = vector.shape_cast %257 : vector<8x1x128xf32> to vector<8x128xf32>
    %259 = vector.shape_cast %256 : vector<8x128xf32> to vector<8x1x128xf32>
    tpu.vector_store %arg5[%c0_99, %c6_100, %c0_101], %259 {strides = array<i32>} : memref<8x8x128xf32, #tpu.memory_space<vmem>>, vector<8x1x128xf32>,
    %260 = arith.truncf %256 : vector<8x128xf32> to vector<8x128xbf16>
    %cst_102 = arith.constant dense<0.000000e+00> : vector<8x384xf32>
    %261 = tpu.matmul %260, %3, %cst_102 {dimension_numbers = #tpu.dot_dimension_numbers<[1], [0], [0], [1], [0, 0, 1, 1], [], []>} : vector<8x128xbf16>, vector<128x384xbf16>, vector<8x384xf32> -> vector<8x384xf32>
    %c0_103 = arith.constant 0 : index
    %c7 = arith.constant 7 : index
    %c0_104 = arith.constant 0 : index
    %262 = vector.load %arg2[%c0_103, %c7, %c0_104] : memref<8x8x384xbf16, #tpu.memory_space<vmem>>, vector<8x1x128xbf16>
    %263 = vector.shape_cast %262 : vector<8x1x128xbf16> to vector<8x128xbf16>
    %264 = arith.extf %263 : vector<8x128xbf16> to vector<8x128xf32>
    %265 = vector.extract_strided_slice %261 {offsets = [0, 0], sizes = [8, 128], strides = [1, 1]} : vector<8x384xf32> to vector<8x128xf32>
    %266 = arith.addf %264, %265 : vector<8x128xf32>
    %267 = arith.negf %266 : vector<8x128xf32>
    %268 = math.exp %267 : vector<8x128xf32>
    %cst_105 = arith.constant 1.000000e+00 : f32
    %269 = vector.broadcast %cst_105 : f32 to vector<8x128xf32>
    %270 = arith.addf %269, %268 : vector<8x128xf32>
    %271 = arith.divf %269, %270 : vector<8x128xf32>
    %c0_106 = arith.constant 0 : index
    %c7_107 = arith.constant 7 : index
    %c128_108 = arith.constant 128 : index
    %272 = vector.load %arg2[%c0_106, %c7_107, %c128_108] : memref<8x8x384xbf16, #tpu.memory_space<vmem>>, vector<8x1x128xbf16>
    %273 = vector.shape_cast %272 : vector<8x1x128xbf16> to vector<8x128xbf16>
    %274 = arith.extf %273 : vector<8x128xbf16> to vector<8x128xf32>
    %275 = vector.extract_strided_slice %261 {offsets = [0, 128], sizes = [8, 128], strides = [1, 1]} : vector<8x384xf32> to vector<8x128xf32>
    %276 = arith.addf %274, %275 : vector<8x128xf32>
    %277 = arith.negf %276 : vector<8x128xf32>
    %278 = math.exp %277 : vector<8x128xf32>
    %cst_109 = arith.constant 1.000000e+00 : f32
    %279 = vector.broadcast %cst_109 : f32 to vector<8x128xf32>
    %280 = arith.addf %279, %278 : vector<8x128xf32>
    %281 = arith.divf %279, %280 : vector<8x128xf32>
    %c0_110 = arith.constant 0 : index
    %c7_111 = arith.constant 7 : index
    %c256_112 = arith.constant 256 : index
    %282 = vector.load %arg2[%c0_110, %c7_111, %c256_112] : memref<8x8x384xbf16, #tpu.memory_space<vmem>>, vector<8x1x128xbf16>
    %283 = vector.shape_cast %282 : vector<8x1x128xbf16> to vector<8x128xbf16>
    %284 = arith.extf %283 : vector<8x128xbf16> to vector<8x128xf32>
    %285 = vector.extract_strided_slice %261 {offsets = [0, 256], sizes = [8, 128], strides = [1, 1]} : vector<8x384xf32> to vector<8x128xf32>
    %286 = arith.addf %285, %6 : vector<8x128xf32>
    %287 = arith.mulf %271, %286 : vector<8x128xf32>
    %288 = arith.addf %284, %287 : vector<8x128xf32>
    %289 = math.tanh %288 : vector<8x128xf32>
    %290 = arith.subf %256, %289 : vector<8x128xf32>
    %291 = arith.mulf %281, %290 : vector<8x128xf32>
    %292 = arith.addf %289, %291 : vector<8x128xf32>
    %c0_113 = arith.constant 0 : index
    %c7_114 = arith.constant 7 : index
    %c0_115 = arith.constant 0 : index
    %293 = vector.load %arg5[%c0_113, %c7_114, %c0_115] : memref<8x8x128xf32, #tpu.memory_space<vmem>>, vector<8x1x128xf32>
    %294 = vector.shape_cast %293 : vector<8x1x128xf32> to vector<8x128xf32>
    %295 = vector.shape_cast %292 : vector<8x128xf32> to vector<8x1x128xf32>
    tpu.vector_store %arg5[%c0_113, %c7_114, %c0_115], %295 {strides = array<i32>} : memref<8x8x128xf32, #tpu.memory_space<vmem>>, vector<8x1x128xf32>,
    %c0_116 = arith.constant 0 : index
    %c0_117 = arith.constant 0 : index
    %296 = vector.load %arg6[%c0_116, %c0_117] : memref<8x128xf32, #tpu.memory_space<vmem>>, vector<8x128xf32>
    tpu.vector_store %arg6[%c0_116, %c0_117], %292 {strides = array<i32>} : memref<8x128xf32, #tpu.memory_space<vmem>>, vector<8x128xf32>,
    return
  }
  func.func @transform_0(%arg0: i32, %arg1: i32) -> (i32, i32, i32) {
    %c0_i32 = arith.constant 0 : i32
    %c0_i32_0 = arith.constant 0 : i32
    return %arg0, %arg1, %c0_i32 : i32, i32, i32
  }
  func.func @transform_1(%arg0: i32, %arg1: i32) -> (i32, i32) {
    %c0_i32 = arith.constant 0 : i32
    %c0_i32_0 = arith.constant 0 : i32
    %c0_i32_1 = arith.constant 0 : i32
    return %c0_i32, %c0_i32_0 : i32, i32
  }
  func.func @transform_2(%arg0: i32, %arg1: i32) -> (i32, i32) {
    %c0_i32 = arith.constant 0 : i32
    %c0_i32_0 = arith.constant 0 : i32
    %c0_i32_1 = arith.constant 0 : i32
    return %c0_i32, %c0_i32_0 : i32, i32
  }
  func.func @transform_3(%arg0: i32, %arg1: i32) -> (i32, i32, i32) {
    %c0_i32 = arith.constant 0 : i32
    %c0_i32_0 = arith.constant 0 : i32
    return %arg0, %arg1, %c0_i32 : i32, i32, i32
  }
}

</mosaic_0001>

<llo_original>
// kernel: gru_encoder_t_forward.1
$region0: #{gru_encoder_t_forward.1}
  #allocation0 [shape = 'u32[]', space=smem, size = 0x4, offset = 0x4, fixed_abs, tag = 'smem constant byte address 0x4 - core index']
  #allocation1 [shape = 'u32[144,128]{1,0:T(1,128)}', space=vmem, size = 0x12000, scoped, tag = 'internal scratch']
  #allocation2 [shape = 'f32[8,128]{1,0:T(8,128)}', space=vmem, size = 0x1000, scoped, tag = 'scratch operand']
  %s0 = inlined_call_operand.vmem [shape: bf16[8,24,384], index: 0, kind: input, shape index: {}]
  %s1 = inlined_call_operand.vmem [shape: bf16[128,384], index: 1, kind: input, shape index: {}]
  %s2 = inlined_call_operand.vmem [shape: f32[1,128], index: 2, kind: input, shape index: {}]
  %s3 = inlined_call_operand.vmem [shape: f32[8,24,128], index: 3, kind: output, shape index: {}]
  %s4 = sld [smem:[#allocation0]]
  $region109: #{gru_encoder_t_forward.1} parent=0
    _
  %s6 = ssub.s32 1, %s4
  %s7 = scalar_select 0, %s6, %s4
  $region1: #{gru_encoder_t_forward.1} parent=0
    #allocation3 [shape = 'u8[98304]{0}', space=vmem, size = 0x18000, scoped, tag = 'input window, operand 0']
    #allocation4 [shape = 'u8[65536]{0}', space=vmem, size = 0x10000, scoped, tag = 'output window, operand 0']
    loop: start=0, step=1, limit=5
    $region2: #{gru_encoder_t_forward.1} parent=1 // loop_pre_header
      _
    $region3: #{gru_encoder_t_forward.1} parent=1 // loop_header
      %s9 = sphi 0, %s13
      %p10 = scmp.ge.s32.totalorder %s9, 5
      %s16 = sphi 0, %s28
      %s17 = sphi 0, %s24
      %s18 = sphi 0, %s16
      %s19 = sphi 0, %s17
      %s20 = sphi 0, %s18
      %s21 = sphi 0, %s19
      %s33 = sphi 0, %s35
      %s36 = sphi 0, %s33
      %s37 = sphi 0, %s36
      %s53 = sphi 0, %s37
      %s57 = sphi 0, %s57
      %s59 = sphi 0, %s57
      %s60 = sphi 0, %s59
      %s74 = sphi 0, %s60
      %s78 = sphi 0, %s78
      %s80 = sphi 0, %s78
      %s81 = sphi 0, %s80
      %s95 = sphi 0, %s81
      %s103 = sphi 0, %s105
      %s106 = sphi 0, %s103
      %s107 = sphi 0, %s106
      %s123 = sphi 0, %s107
    $region4: #{gru_encoder_t_forward.1} parent=1 // loop_header_branch
      %12 = sbr.rel (%p10) target = $region8
    $region5: #{gru_encoder_t_forward.1} parent=1 // loop_body
      %s14 = ssub.s32 %s9, 1
      %s15 = ssub.s32 %s9, 2
      %s22 = sadd.s32 1, %s17
      %p23 = scmp.ge.s32.totalorder %s22, 3
      %s24 = scalar_select %p23, 0, %s22
      %s25 = sadd.s32 1, %s16
      %s26 = scalar_select %p23, %s25, %s16
      %p27 = scmp.ge.s32.totalorder %s26, 1
      %s28 = scalar_select %p27, 0, %s26
      %s29 = ssub.s32 %s16, %s28
      %s30 = ssub.s32 %s17, %s24
      %s31 = sor.u32 %s29, %s30
      %p32 = scmp.eq.s32.totalorder %s31, 0
      %s34 = sadd.s32 %s33, 1
      %s35 = scalar_select %p32, %s33, %s34
      %p38 = pneg %p32
      %p39 = scmp.eq.s32.totalorder %s9, 2
      %p40 = por %p38, %p39
      %p41 = scmp.ne.s32.totalorder %s33, %s36
      %p42 = scmp.eq.s32.totalorder %s9, 0
      %p43 = por %p41, %p42
      %p44 = scmp.ne.s32.totalorder %s33, %s36
      %p45 = scmp.eq.s32.totalorder %s14, 2
      %p46 = por %p44, %p45
      %p47 = scmp.ne.s32.totalorder %s36, %s37
      %p48 = scmp.eq.s32.totalorder %s14, 0
      %p49 = por %p47, %p48
      %p50 = scmp.ne.s32.totalorder %s36, %s37
      %p51 = scmp.eq.s32.totalorder %s15, 2
      %p52 = por %p50, %p51
      %p54 = scmp.ne.s32.totalorder %s37, %s53
      %p55 = scmp.eq.s32.totalorder %s15, 0
      %p56 = por %p54, %p55
      %s58 = sadd.s32 %s57, 1
      %p61 = scmp.eq.s32.totalorder %s9, 2
      %p62 = scmp.ne.s32.totalorder %s57, %s59
      %p63 = scmp.eq.s32.totalorder %s9, 0
      %p64 = por %p62, %p63
      %p65 = scmp.ne.s32.totalorder %s57, %s59
      %p66 = scmp.eq.s32.totalorder %s14, 2
      %p67 = por %p65, %p66
      %p68 = scmp.ne.s32.totalorder %s59, %s60
      %p69 = scmp.eq.s32.totalorder %s14, 0
      %p70 = por %p68, %p69
      %p71 = scmp.ne.s32.totalorder %s59, %s60
      %p72 = scmp.eq.s32.totalorder %s15, 2
      %p73 = por %p71, %p72
      %p75 = scmp.ne.s32.totalorder %s60, %s74
      %p76 = scmp.eq.s32.totalorder %s15, 0
      %p77 = por %p75, %p76
      %s79 = sadd.s32 %s78, 1
      %p82 = scmp.eq.s32.totalorder %s9, 2
      %p83 = scmp.ne.s32.totalorder %s78, %s80
      %p84 = scmp.eq.s32.totalorder %s9, 0
      %p85 = por %p83, %p84
      %p86 = scmp.ne.s32.totalorder %s78, %s80
      %p87 = scmp.eq.s32.totalorder %s14, 2
      %p88 = por %p86, %p87
      %p89 = scmp.ne.s32.totalorder %s80, %s81
      %p90 = scmp.eq.s32.totalorder %s14, 0
      %p91 = por %p89, %p90
      %p92 = scmp.ne.s32.totalorder %s80, %s81
      %p93 = scmp.eq.s32.totalorder %s15, 2
      %p94 = por %p92, %p93
      %p96 = scmp.ne.s32.totalorder %s81, %s95
      %p97 = scmp.eq.s32.totalorder %s15, 0
      %p98 = por %p96, %p97
      %s99 = ssub.s32 %s16, %s28
      %s100 = ssub.s32 %s17, %s24
      %s101 = sor.u32 %s99, %s100
      %p102 = scmp.eq.s32.totalorder %s101, 0
      %s104 = sadd.s32 %s103, 1
      %s105 = scalar_select %p102, %s103, %s104
      %p108 = pneg %p102
      %p109 = scmp.eq.s32.totalorder %s9, 2
      %p110 = por %p108, %p109
      %p111 = scmp.ne.s32.totalorder %s103, %s106
      %p112 = scmp.eq.s32.totalorder %s9, 0
      %p113 = por %p111, %p112
      %p114 = scmp.ne.s32.totalorder %s103, %s106
      %p115 = scmp.eq.s32.totalorder %s14, 2
      %p116 = por %p114, %p115
      %p117 = scmp.ne.s32.totalorder %s106, %s107
      %p118 = scmp.eq.s32.totalorder %s14, 0
      %p119 = por %p117, %p118
      %p120 = scmp.ne.s32.totalorder %s106, %s107
      %p121 = scmp.eq.s32.totalorder %s15, 2
      %p122 = por %p120, %p121
      %p124 = scmp.ne.s32.totalorder %s107, %s123
      %p125 = scmp.eq.s32.totalorder %s15, 0
      %p126 = por %p124, %p125
      %p127 = scmp.le.s32.totalorder 1, %s9
      %p128 = scmp.lt.s32.totalorder %s9, 4
      %p129 = pnand %p127, %p128
      %p130 = pneg %p129
      // Predicated region
      $region9: #{gru_encoder_t_forward.1} parent=5 // pred_check
        _
      $region10: #{gru_encoder_t_forward.1} parent=5 // pred_check_branch
        %132 = sbr.rel (%p129) target = $region12
      $region11: #{gru_encoder_t_forward.1} parent=5 // pred_region
        %s133 = ssub.s32 %s9, 1
        // Predicated region
        $region13: #{gru_encoder_t_forward.1} parent=11 // pred_check
          %p134 = pneg %p70
        $region14: #{gru_encoder_t_forward.1} parent=11 // pred_check_branch
          %136 = sbr.rel (%p134) target = $region16
        $region15: #{gru_encoder_t_forward.1} parent=11 // pred_region
          _
        $region16: #{gru_encoder_t_forward.1} parent=11 // pred_fallthru
          _
        // Predicated region
        $region17: #{gru_encoder_t_forward.1} parent=11 // pred_check
          %p137 = pneg %p91
        $region18: #{gru_encoder_t_forward.1} parent=11 // pred_check_branch
          %139 = sbr.rel (%p137) target = $region20
        $region19: #{gru_encoder_t_forward.1} parent=11 // pred_region
          _
        $region20: #{gru_encoder_t_forward.1} parent=11 // pred_fallthru
          _
      $region12: #{gru_encoder_t_forward.1} parent=5 // pred_fallthru
        _
      %p140 = scmp.lt.s32.totalorder %s9, 3
      // Predicated region
      $region21: #{gru_encoder_t_forward.1} parent=5 // pred_check
        %p141 = pneg %p140
      $region22: #{gru_encoder_t_forward.1} parent=5 // pred_check_branch
        %143 = sbr.rel (%p141) target = $region24
      $region23: #{gru_encoder_t_forward.1} parent=5 // pred_region
        // Predicated region
        $region25: #{gru_encoder_t_forward.1} parent=23 // pred_check
          %p144 = pneg %p43
        $region26: #{gru_encoder_t_forward.1} parent=23 // pred_check_branch
          %146 = sbr.rel (%p144) target = $region28
        $region27: #{gru_encoder_t_forward.1} parent=23 // pred_region
          %s147 = sand.u32 %s33, 1
          %s148 = sand.u32 %s33, 1
          %s149 = smul.addr %s148, 96
          %s150 = scalar_lea.vmem [#allocation3], %s149
          %s151 = smul.u32 8, %s16
          %s152 = smul.addr %s17, 3
          %s153 = smul.addr %s151, 9
          %s154 = sadd.s32 %s152, %s153
          %s155 = smul.addr %s154, 4
          %s156 = scalar_lea.vmem %s0, %s155
          // Predicated region
          $region29: #{gru_encoder_t_forward.1} parent=27 // pred_check
            _
          $region30: #{gru_encoder_t_forward.1} parent=27 // pred_check_branch
            %158 = sbr.rel (0) target = $region32
          $region31: #{gru_encoder_t_forward.1} parent=27 // pred_region
            // Predicated region
            $region33: #{gru_encoder_t_forward.1} parent=31 // pred_check
              _
            $region34: #{gru_encoder_t_forward.1} parent=31 // pred_check_branch
              %160 = sbr.rel (0) target = $region36
            $region35: #{gru_encoder_t_forward.1} parent=31 // pred_region
              %s161 = scalar_lea.vmem %s156, 8
              %s162 = scalar_lea.vmem %s150, 8 [#allocation3]
              loop: start=0, step=1, limit=1
              $region37: #{gru_encoder_t_forward.1} parent=35 // loop_pre_header
                _
              $region38: #{gru_encoder_t_forward.1} parent=35 // loop_header
                %s164 = sphi 0, %s168
                %p165 = scmp.ge.s32.totalorder %s164, 1
                %s169 = sphi %s156, %s156
                %s170 = sphi %s150, %s150
              $region39: #{gru_encoder_t_forward.1} parent=35 // loop_header_branch
                %167 = sbr.rel (%p165) target = $region43
              $region40: #{gru_encoder_t_forward.1} parent=35 // loop_body
                %v171 = vld [vmem:[%s169] sm:$0xff]
                %172 = vst [vmem:[%s170] sm:$0xff] %v171
                %v173 = vld [vmem:[%s169 + $0x24] sm:$0xff]
                %174 = vst [vmem:[%s170 + $0xc] sm:$0xff] %v173
                %v175 = vld [vmem:[%s169 + $0x48] sm:$0xff]
                %176 = vst [vmem:[%s170 + $0x18] sm:$0xff] %v175
                %v177 = vld [vmem:[%s169 + $0x6c] sm:$0xff]
                %178 = vst [vmem:[%s170 + $0x24] sm:$0xff] %v177
                %v179 = vld [vmem:[%s169 + $0x90] sm:$0xff]
                %180 = vst [vmem:[%s170 + $0x30] sm:$0xff] %v179
                %v181 = vld [vmem:[%s169 + $0xb4] sm:$0xff]
                %182 = vst [vmem:[%s170 + $0x3c] sm:$0xff] %v181
                %v183 = vld [vmem:[%s169 + $0xd8] sm:$0xff]
                %184 = vst [vmem:[%s170 + $0x48] sm:$0xff] %v183
                %v185 = vld [vmem:[%s169 + $0xfc] sm:$0xff]
                %186 = vst [vmem:[%s170 + $0x54] sm:$0xff] %v185
              $region41: #{gru_encoder_t_forward.1} parent=35 // loop_footer
                %s168 = sadd.s32 1, %s164
              $region42: #{gru_encoder_t_forward.1} parent=35 // loop_footer_branch
                %163 = sbr.rel target = $region38
              $region43: #{gru_encoder_t_forward.1} parent=35 // loop_exit
                _
              %s188 = ssub.s32 16, 1
              loop: start=0, step=1, limit=1
              $region44: #{gru_encoder_t_forward.1} parent=35 // loop_pre_header
                _
              $region45: #{gru_encoder_t_forward.1} parent=35 // loop_header
                %s190 = sphi 0, %s194
                %p191 = scmp.ge.s32.totalorder %s190, 1
                %s195 = sphi %s161, %s161
                %s196 = sphi %s162, %s162
              $region46: #{gru_encoder_t_forward.1} parent=35 // loop_header_branch
                %193 = sbr.rel (%p191) target = $region50
              $region47: #{gru_encoder_t_forward.1} parent=35 // loop_body
                %v197 = vld [vmem:[%s195] sm:%s188]
                %198 = vst [vmem:[%s196] sm:%s188] %v197
                %v199 = vld [vmem:[%s195 + $0x24] sm:%s188]
                %200 = vst [vmem:[%s196 + $0xc] sm:%s188] %v199
                %v201 = vld [vmem:[%s195 + $0x48] sm:%s188]
                %202 = vst [vmem:[%s196 + $0x18] sm:%s188] %v201
                %v203 = vld [vmem:[%s195 + $0x6c] sm:%s188]
                %204 = vst [vmem:[%s196 + $0x24] sm:%s188] %v203
                %v205 = vld [vmem:[%s195 + $0x90] sm:%s188]
                %206 = vst [vmem:[%s196 + $0x30] sm:%s188] %v205
                %v207 = vld [vmem:[%s195 + $0xb4] sm:%s188]
                %208 = vst [vmem:[%s196 + $0x3c] sm:%s188] %v207
                %v209 = vld [vmem:[%s195 + $0xd8] sm:%s188]
                %210 = vst [vmem:[%s196 + $0x48] sm:%s188] %v209
                %v211 = vld [vmem:[%s195 + $0xfc] sm:%s188]
                %212 = vst [vmem:[%s196 + $0x54] sm:%s188] %v211
              $region48: #{gru_encoder_t_forward.1} parent=35 // loop_footer
                %s194 = sadd.s32 1, %s190
              $region49: #{gru_encoder_t_forward.1} parent=35 // loop_footer_branch
                %189 = sbr.rel target = $region45
              $region50: #{gru_encoder_t_forward.1} parent=35 // loop_exit
                _
            $region36: #{gru_encoder_t_forward.1} parent=31 // pred_fallthru
              _
          $region32: #{gru_encoder_t_forward.1} parent=27 // pred_fallthru
            _
          %213 = vnop
        $region28: #{gru_encoder_t_forward.1} parent=23 // pred_fallthru
          _
      $region24: #{gru_encoder_t_forward.1} parent=5 // pred_fallthru
        _
      %p214 = scmp.le.s32.totalorder 1, %s9
      %p215 = scmp.lt.s32.totalorder %s9, 4
      %p216 = pnand %p214, %p215
      %p217 = pneg %p216
      // Predicated region
      $region51: #{gru_encoder_t_forward.1} parent=5 // pred_check
        _
      $region52: #{gru_encoder_t_forward.1} parent=5 // pred_check_branch
        %219 = sbr.rel (%p216) target = $region54
      $region53: #{gru_encoder_t_forward.1} parent=5 // pred_region
        %s220 = ssub.s32 %s9, 1
        %s221 = sand.u32 %s36, 1
        %s222 = sand.u32 %s36, 1
        %s223 = smul.addr %s222, 96
        %s224 = scalar_lea.vmem [#allocation3], %s223
        // Predicated region
        $region55: #{gru_encoder_t_forward.1} parent=53 // pred_check
          %p225 = pneg %p49
        $region56: #{gru_encoder_t_forward.1} parent=53 // pred_check_branch
          %227 = sbr.rel (%p225) target = $region58
        $region57: #{gru_encoder_t_forward.1} parent=53 // pred_region
          _
        $region58: #{gru_encoder_t_forward.1} parent=53 // pred_fallthru
          _
        %s228 = sand.u32 %s36, 1
        %s229 = sand.u32 %s36, 1
        %s230 = smul.addr %s229, 96
        %s231 = scalar_lea.vmem [#allocation3], %s230
        %p232 = pneg %p49
        %p233 = pneg %p46
        %p234 = pneg %p70
        %p235 = pneg %p67
        %p236 = pneg %p91
        %p237 = pneg %p88
        %p238 = pneg %p119
        %p239 = pneg %p116
        %s240 = sand.u32 %s106, 1
        %s241 = sand.u32 %s106, 1
        %s242 = smul.addr %s241, 64
        %s243 = scalar_lea.vmem [#allocation4], %s242
        %s244 = smul.u32 8, %s18
        %s245 = smul.u32 8, %s18
        %p247 = scmp.eq.s32.totalorder %s19, 0
        // Predicated region
        $region59: #{gru_encoder_t_forward.1} parent=53 // pred_check
          %p248 = pneg %p247
        $region60: #{gru_encoder_t_forward.1} parent=53 // pred_check_branch
          %250 = sbr.rel (%p248) target = $region62
        $region61: #{gru_encoder_t_forward.1} parent=53 // pred_region
          %251 = vst [vmem:[#allocation2] sm:$0xff] 0.0
        $region62: #{gru_encoder_t_forward.1} parent=53 // pred_fallthru
          _
        %v252 = vld [vmem:[%s1] sm:$0xff]
        %v253 = vld [vmem:[%s1 + $0x8] sm:$0xf]
        %v254 = vld [vmem:[%s1 + $0xc] sm:$0xff]
        %v255 = vld [vmem:[%s1 + $0x14] sm:$0xf]
        %v256 = vld [vmem:[%s1 + $0x18] sm:$0xff]
        %v257 = vld [vmem:[%s1 + $0x20] sm:$0xf]
        %v258 = vld [vmem:[%s1 + $0x24] sm:$0xff]
        %v259 = vld [vmem:[%s1 + $0x2c] sm:$0xf]
        %v260 = vld [vmem:[%s1 + $0x30] sm:$0xff]
        %v261 = vld [vmem:[%s1 + $0x38] sm:$0xf]
        %v262 = vld [vmem:[%s1 + $0x3c] sm:$0xff]
        %v263 = vld [vmem:[%s1 + $0x44] sm:$0xf]
        %v264 = vld [vmem:[%s1 + $0x48] sm:$0xff]
        %v265 = vld [vmem:[%s1 + $0x50] sm:$0xf]
        %v266 = vld [vmem:[%s1 + $0x54] sm:$0xff]
        %v267 = vld [vmem:[%s1 + $0x5c] sm:$0xf]
        %v268 = vld [vmem:[%s1 + $0x60] sm:$0xff]
        %v269 = vld [vmem:[%s1 + $0x68] sm:$0xf]
        %v270 = vld [vmem:[%s1 + $0x6c] sm:$0xff]
        %v271 = vld [vmem:[%s1 + $0x74] sm:$0xf]
        %v272 = vld [vmem:[%s1 + $0x78] sm:$0xff]
        %v273 = vld [vmem:[%s1 + $0x80] sm:$0xf]
        %v274 = vld [vmem:[%s1 + $0x84] sm:$0xff]
        %v275 = vld [vmem:[%s1 + $0x8c] sm:$0xf]
        %v276 = vld [vmem:[%s1 + $0x90] sm:$0xff]
        %v277 = vld [vmem:[%s1 + $0x98] sm:$0xf]
        %v278 = vld [vmem:[%s1 + $0x9c] sm:$0xff]
        %v279 = vld [vmem:[%s1 + $0xa4] sm:$0xf]
        %v280 = vld [vmem:[%s1 + $0xa8] sm:$0xff]
        %v281 = vld [vmem:[%s1 + $0xb0] sm:$0xf]
        %v282 = vld [vmem:[%s1 + $0xb4] sm:$0xff]
        %v283 = vld [vmem:[%s1 + $0xbc] sm:$0xf]
        %v284 = vld [vmem:[%s2] sm:$0x1]
        %v286 = vlaneseq
        %v287 = vshrl.u32 %v286, 7
        %v288 = vsub.s32 0, %v287
        %v289 = vrot.slane %v284, %v288
        %v291 = vld [vmem:[#allocation2] sm:$0xff]
        %v292 = vpack.c.bf16 %v291, %v291
        %v325 = vunpack.c.l.b16 %v252
        %v326 = vunpack.c.h.b16 %v252
        %v327 = vunpack.c.l.b16 %v253
        %v328 = vunpack.c.l.b16 %v254
        %v329 = vunpack.c.h.b16 %v254
        %v330 = vunpack.c.l.b16 %v255
        %v331 = vunpack.c.l.b16 %v256
        %v332 = vunpack.c.h.b16 %v256
        %v333 = vunpack.c.l.b16 %v257
        %v334 = vunpack.c.l.b16 %v258
        %v335 = vunpack.c.h.b16 %v258
        %v336 = vunpack.c.l.b16 %v259
        %v337 = vunpack.c.l.b16 %v260
        %v338 = vunpack.c.h.b16 %v260
        %v339 = vunpack.c.l.b16 %v261
        %v340 = vunpack.c.l.b16 %v262
        %v341 = vunpack.c.h.b16 %v262
        %v342 = vunpack.c.l.b16 %v263
        %v343 = vunpack.c.l.b16 %v264
        %v344 = vunpack.c.h.b16 %v264
        %v345 = vunpack.c.l.b16 %v265
        %v346 = vunpack.c.l.b16 %v266
        %v347 = vunpack.c.h.b16 %v266
        %v348 = vunpack.c.l.b16 %v267
        %v349 = vunpack.c.l.b16 %v268
        %v350 = vunpack.c.h.b16 %v268
        %v351 = vunpack.c.l.b16 %v269
        %v352 = vunpack.c.l.b16 %v270
        %v353 = vunpack.c.h.b16 %v270
        %v354 = vunpack.c.l.b16 %v271
        %v355 = vunpack.c.l.b16 %v272
        %v356 = vunpack.c.h.b16 %v272
        %v357 = vunpack.c.l.b16 %v273
        %v358 = vunpack.c.l.b16 %v274
        %v359 = vunpack.c.h.b16 %v274
        %v360 = vunpack.c.l.b16 %v275
        %v361 = vunpack.c.l.b16 %v276
        %v362 = vunpack.c.h.b16 %v276
        %v363 = vunpack.c.l.b16 %v277
        %v364 = vunpack.c.l.b16 %v278
        %v365 = vunpack.c.h.b16 %v278
        %v366 = vunpack.c.l.b16 %v279
        %v367 = vunpack.c.l.b16 %v280
        %v368 = vunpack.c.h.b16 %v280
        %v369 = vunpack.c.l.b16 %v281
        %v370 = vunpack.c.l.b16 %v282
        %v371 = vunpack.c.h.b16 %v282
        %v372 = vunpack.c.l.b16 %v283
        %v373 = vpack.c.b16 %v328, %v325
        %v374 = vpack.c.b16 %v329, %v326
        %v375 = vpack.c.b16 %v330, %v327
        %v376 = vpack.c.b16 %v334, %v331
        %v377 = vpack.c.b16 %v335, %v332
        %v378 = vpack.c.b16 %v336, %v333
        %v379 = vpack.c.b16 %v340, %v337
        %v380 = vpack.c.b16 %v341, %v338
        %v381 = vpack.c.b16 %v342, %v339
        %v382 = vpack.c.b16 %v346, %v343
        %v383 = vpack.c.b16 %v347, %v344
        %v384 = vpack.c.b16 %v348, %v345
        %v385 = vpack.c.b16 %v352, %v349
        %v386 = vpack.c.b16 %v353, %v350
        %v387 = vpack.c.b16 %v354, %v351
        %v388 = vpack.c.b16 %v358, %v355
        %v389 = vpack.c.b16 %v359, %v356
        %v390 = vpack.c.b16 %v360, %v357
        %v391 = vpack.c.b16 %v364, %v361
        %v392 = vpack.c.b16 %v365, %v362
        %v393 = vpack.c.b16 %v366, %v363
        %v394 = vpack.c.b16 %v370, %v367
        %v395 = vpack.c.b16 %v371, %v368
        %v396 = vpack.c.b16 %v372, %v369
        %421 = vmatprep.subr.bf16.mxu0 %v395
        %422 = vmatpush1.bf16.msra.mxu0 %v394
        %423 = vmatprep.subr.bf16.mxu0 %v392
        %424 = vmatpush1.bf16.msra.mxu0 %v391
        %425 = vmatprep.subr.bf16.mxu0 %v389
        %426 = vmatpush1.bf16.msra.mxu0 %v388
        %427 = vmatprep.subr.bf16.mxu0 %v386
        %428 = vmatpush1.bf16.msra.mxu0 %v385
        %429 = vmatprep.subr.bf16.mxu0 %v383
        %430 = vmatpush1.bf16.msra.mxu0 %v382
        %431 = vmatprep.subr.bf16.mxu0 %v380
        %432 = vmatpush1.bf16.msra.mxu0 %v379
        %433 = vmatprep.subr.bf16.mxu0 %v377
        %434 = vmatpush1.bf16.msra.mxu0 %v376
        %435 = vmatprep.subr.bf16.mxu0 %v374
        %436 = vmatpush1.bf16.msra.mxu0 %v373
        %437 = vmatprep.subr.bf16.mxu0 0
        %438 = vmatpush2.bf16.msra.mxu0 0
        %439 = vmatprep.subr.bf16.mxu0 0
        %440 = vmatpush2.bf16.msra.mxu0 0
        %441 = vmatprep.subr.bf16.mxu0 0
        %442 = vmatpush2.bf16.msra.mxu0 0
        %443 = vmatprep.subr.bf16.mxu0 0
        %444 = vmatpush2.bf16.msra.mxu0 0
        %445 = vmatprep.subr.bf16.mxu0 0
        %446 = vmatpush2.bf16.msra.mxu0 0
        %447 = vmatprep.subr.bf16.mxu0 0
        %448 = vmatpush2.bf16.msra.mxu0 0
        %449 = vmatprep.subr.bf16.mxu0 0
        %450 = vmatpush2.bf16.msra.mxu0 0
        %451 = vmatprep.subr.bf16.mxu0 0
        %452 = vmatpush2.bf16.msra.mxu0 0
        %453 = vmatprep.mubr.bf16.mxu0 0
        %454 = vmatmul.mubr.bf16.gmra.mxu0 %v292
        %v455 = vpop.f32.mrf.mxu0
        %v456 = vadd.f32 0.0, %v455
        %v457 = vpop.f32.mrf.mxu0
        %v458 = vadd.f32 0.0, %v457
        %v459 = vpop.f32.mrf.mxu0
        %v460 = vpop.f32.mrf.mxu0
        %461 = vdwg.mxu0
        %462 = vmatprep.subr.bf16.mxu0 0
        %463 = vmatpush1.bf16.msra.mxu0 %v396
        %464 = vmatprep.subr.bf16.mxu0 0
        %465 = vmatpush1.bf16.msra.mxu0 %v393
        %466 = vmatprep.subr.bf16.mxu0 0
        %467 = vmatpush1.bf16.msra.mxu0 %v390
        %468 = vmatprep.subr.bf16.mxu0 0
        %469 = vmatpush1.bf16.msra.mxu0 %v387
        %470 = vmatprep.subr.bf16.mxu0 0
        %471 = vmatpush1.bf16.msra.mxu0 %v384
        %472 = vmatprep.subr.bf16.mxu0 0
        %473 = vmatpush1.bf16.msra.mxu0 %v381
        %474 = vmatprep.subr.bf16.mxu0 0
        %475 = vmatpush1.bf16.msra.mxu0 %v378
        %476 = vmatprep.subr.bf16.mxu0 0
        %477 = vmatpush1.bf16.msra.mxu0 %v375
        %478 = vmatprep.subr.bf16.mxu0 0
        %479 = vmatpush2.bf16.msra.mxu0 0
        %480 = vmatprep.subr.bf16.mxu0 0
        %481 = vmatpush2.bf16.msra.mxu0 0
        %482 = vmatprep.subr.bf16.mxu0 0
        %483 = vmatpush2.bf16.msra.mxu0 0
        %484 = vmatprep.subr.bf16.mxu0 0
        %485 = vmatpush2.bf16.msra.mxu0 0
        %486 = vmatprep.subr.bf16.mxu0 0
        %487 = vmatpush2.bf16.msra.mxu0 0
        %488 = vmatprep.subr.bf16.mxu0 0
        %489 = vmatpush2.bf16.msra.mxu0 0
        %490 = vmatprep.subr.bf16.mxu0 0
        %491 = vmatpush2.bf16.msra.mxu0 0
        %492 = vmatprep.subr.bf16.mxu0 0
        %493 = vmatpush2.bf16.msra.mxu0 0
        %494 = vmatprep.mubr.bf16.mxu0 0
        %495 = vmatmul.mubr.bf16.gmra.mxu0 %v292
        %v496 = vpop.f32.mrf.mxu0
        %v497 = vadd.f32 0.0, %v496
        %v498 = vpop.f32.mrf.mxu0
        %v499 = vpop.f32.mrf.mxu0
        %v500 = vpop.f32.mrf.mxu0
        %501 = vdwg.mxu0
        %v502 = vld [vmem:[%s224] sm:$0x1]
        %v503 = vld [vmem:[%s224 + $0xc] sm:$0x1]
        %v504 = vld [vmem:[%s224 + $0x18] sm:$0x1]
        %v505 = vld [vmem:[%s224 + $0x24] sm:$0x1]
        %v506 = vld [vmem:[%s224 + $0x30] sm:$0x1]
        %v507 = vld [vmem:[%s224 + $0x3c] sm:$0x1]
        %v508 = vld [vmem:[%s224 + $0x48] sm:$0x1]
        %v509 = vld [vmem:[%s224 + $0x54] sm:$0x1]
        %v510 = vunpack.c.l.bf16 %v502
        %v511 = vunpack.c.l.bf16 %v503
        %v512 = vunpack.c.l.bf16 %v504
        %v513 = vunpack.c.l.bf16 %v505
        %v514 = vunpack.c.l.bf16 %v506
        %v515 = vunpack.c.l.bf16 %v507
        %v516 = vunpack.c.l.bf16 %v508
        %v517 = vunpack.c.l.bf16 %v509
        %v519 = vrot.slane %v456, 1
        %v520 = vrot.slane %v456, 2
        %v521 = vrot.slane %v456, 3
        %v522 = vrot.slane %v456, 4
        %v523 = vrot.slane %v456, 5
        %v524 = vrot.slane %v456, 6
        %v525 = vrot.slane %v456, 7
        %v534 = vadd.f32 %v510, %v456
        %v535 = vadd.f32 %v511, %v519
        %v536 = vadd.f32 %v512, %v520
        %v537 = vadd.f32 %v513, %v521
        %v538 = vadd.f32 %v514, %v522
        %v539 = vadd.f32 %v515, %v523
        %v540 = vadd.f32 %v516, %v524
        %v541 = vadd.f32 %v517, %v525
        %v542 = vxor.u32 %v534, 2147483648
        %v543 = vxor.u32 %v535, 2147483648
        %v544 = vxor.u32 %v536, 2147483648
        %v545 = vxor.u32 %v537, 2147483648
        %v546 = vxor.u32 %v538, 2147483648
        %v547 = vxor.u32 %v539, 2147483648
        %v548 = vxor.u32 %v540, 2147483648
        %v549 = vxor.u32 %v541, 2147483648
        %v550 = vmul.f32 %v542, 1.442695
        %v551 = vpow.pop %v550
        %v552 = vmul.f32 %v543, 1.442695
        %v553 = vpow.pop %v552
        %v554 = vmul.f32 %v544, 1.442695
        %v555 = vpow.pop %v554
        %v556 = vmul.f32 %v545, 1.442695
        %v557 = vpow.pop %v556
        %v558 = vmul.f32 %v546, 1.442695
        %v559 = vpow.pop %v558
        %v560 = vmul.f32 %v547, 1.442695
        %v561 = vpow.pop %v560
        %v562 = vmul.f32 %v548, 1.442695
        %v563 = vpow.pop %v562
        %v564 = vmul.f32 %v549, 1.442695
        %v565 = vpow.pop %v564
        %v566 = vadd.f32 %v551, 1.0
        %v567 = vadd.f32 %v553, 1.0
        %v568 = vadd.f32 %v555, 1.0
        %v569 = vadd.f32 %v557, 1.0
        %v570 = vadd.f32 %v559, 1.0
        %v571 = vadd.f32 %v561, 1.0
        %v572 = vadd.f32 %v563, 1.0
        %v573 = vadd.f32 %v565, 1.0
        %v574 = vrcp.pop %v566
        %v575 = vmul.f32 1.0, %v574
        %v576 = vrcp.pop %v567
        %v577 = vmul.f32 1.0, %v576
        %v578 = vrcp.pop %v568
        %v579 = vmul.f32 1.0, %v578
        %v580 = vrcp.pop %v569
        %v581 = vmul.f32 1.0, %v580
        %v582 = vrcp.pop %v570
        %v583 = vmul.f32 1.0, %v582
        %v584 = vrcp.pop %v571
        %v585 = vmul.f32 1.0, %v584
        %v586 = vrcp.pop %v572
        %v587 = vmul.f32 1.0, %v586
        %v588 = vrcp.pop %v573
        %v589 = vmul.f32 1.0, %v588
        %v590 = vld [vmem:[%s224 + $0x4] sm:$0x1]
        %v591 = vld [vmem:[%s224 + $0x10] sm:$0x1]
        %v592 = vld [vmem:[%s224 + $0x1c] sm:$0x1]
        %v593 = vld [vmem:[%s224 + $0x28] sm:$0x1]
        %v594 = vld [vmem:[%s224 + $0x34] sm:$0x1]
        %v595 = vld [vmem:[%s224 + $0x40] sm:$0x1]
        %v596 = vld [vmem:[%s224 + $0x4c] sm:$0x1]
        %v597 = vld [vmem:[%s224 + $0x58] sm:$0x1]
        %v598 = vunpack.c.l.bf16 %v590
        %v599 = vunpack.c.l.bf16 %v591
        %v600 = vunpack.c.l.bf16 %v592
        %v601 = vunpack.c.l.bf16 %v593
        %v602 = vunpack.c.l.bf16 %v594
        %v603 = vunpack.c.l.bf16 %v595
        %v604 = vunpack.c.l.bf16 %v596
        %v605 = vunpack.c.l.bf16 %v597
        %v607 = vrot.slane %v458, 1
        %v608 = vrot.slane %v458, 2
        %v609 = vrot.slane %v458, 3
        %v610 = vrot.slane %v458, 4
        %v611 = vrot.slane %v458, 5
        %v612 = vrot.slane %v458, 6
        %v613 = vrot.slane %v458, 7
        %v622 = vadd.f32 %v598, %v458
        %v623 = vadd.f32 %v599, %v607
        %v624 = vadd.f32 %v600, %v608
        %v625 = vadd.f32 %v601, %v609
        %v626 = vadd.f32 %v602, %v610
        %v627 = vadd.f32 %v603, %v611
        %v628 = vadd.f32 %v604, %v612
        %v629 = vadd.f32 %v605, %v613
        %v630 = vxor.u32 %v622, 2147483648
        %v631 = vxor.u32 %v623, 2147483648
        %v632 = vxor.u32 %v624, 2147483648
        %v633 = vxor.u32 %v625, 2147483648
        %v634 = vxor.u32 %v626, 2147483648
        %v635 = vxor.u32 %v627, 2147483648
        %v636 = vxor.u32 %v628, 2147483648
        %v637 = vxor.u32 %v629, 2147483648
        %v638 = vmul.f32 %v630, 1.442695
        %v639 = vpow.pop %v638
        %v640 = vmul.f32 %v631, 1.442695
        %v641 = vpow.pop %v640
        %v642 = vmul.f32 %v632, 1.442695
        %v643 = vpow.pop %v642
        %v644 = vmul.f32 %v633, 1.442695
        %v645 = vpow.pop %v644
        %v646 = vmul.f32 %v634, 1.442695
        %v647 = vpow.pop %v646
        %v648 = vmul.f32 %v635, 1.442695
        %v649 = vpow.pop %v648
        %v650 = vmul.f32 %v636, 1.442695
        %v651 = vpow.pop %v650
        %v652 = vmul.f32 %v637, 1.442695
        %v653 = vpow.pop %v652
        %v654 = vadd.f32 %v639, 1.0
        %v655 = vadd.f32 %v641, 1.0
        %v656 = vadd.f32 %v643, 1.0
        %v657 = vadd.f32 %v645, 1.0
        %v658 = vadd.f32 %v647, 1.0
        %v659 = vadd.f32 %v649, 1.0
        %v660 = vadd.f32 %v651, 1.0
        %v661 = vadd.f32 %v653, 1.0
        %v662 = vrcp.pop %v654
        %v663 = vmul.f32 1.0, %v662
        %v664 = vrcp.pop %v655
        %v665 = vmul.f32 1.0, %v664
        %v666 = vrcp.pop %v656
        %v667 = vmul.f32 1.0, %v666
        %v668 = vrcp.pop %v657
        %v669 = vmul.f32 1.0, %v668
        %v670 = vrcp.pop %v658
        %v671 = vmul.f32 1.0, %v670
        %v672 = vrcp.pop %v659
        %v673 = vmul.f32 1.0, %v672
        %v674 = vrcp.pop %v660
        %v675 = vmul.f32 1.0, %v674
        %v676 = vrcp.pop %v661
        %v677 = vmul.f32 1.0, %v676
        %v678 = vld [vmem:[%s224 + $0x8] sm:$0x1]
        %v679 = vld [vmem:[%s224 + $0x14] sm:$0x1]
        %v680 = vld [vmem:[%s224 + $0x20] sm:$0x1]
        %v681 = vld [vmem:[%s224 + $0x2c] sm:$0x1]
        %v682 = vld [vmem:[%s224 + $0x38] sm:$0x1]
        %v683 = vld [vmem:[%s224 + $0x44] sm:$0x1]
        %v684 = vld [vmem:[%s224 + $0x50] sm:$0x1]
        %v685 = vld [vmem:[%s224 + $0x5c] sm:$0x1]
        %v686 = vunpack.c.l.bf16 %v678
        %v687 = vunpack.c.l.bf16 %v679
        %v688 = vunpack.c.l.bf16 %v680
        %v689 = vunpack.c.l.bf16 %v681
        %v690 = vunpack.c.l.bf16 %v682
        %v691 = vunpack.c.l.bf16 %v683
        %v692 = vunpack.c.l.bf16 %v684
        %v693 = vunpack.c.l.bf16 %v685
        %v694 = vadd.f32 %v497, %v289
        %v696 = vrot.slane %v694, 1
        %v697 = vrot.slane %v694, 2
        %v698 = vrot.slane %v694, 3
        %v699 = vrot.slane %v694, 4
        %v700 = vrot.slane %v694, 5
        %v701 = vrot.slane %v694, 6
        %v702 = vrot.slane %v694, 7
        %v711 = vmul.f32 %v575, %v694
        %v712 = vmul.f32 %v577, %v696
        %v713 = vmul.f32 %v579, %v697
        %v714 = vmul.f32 %v581, %v698
        %v715 = vmul.f32 %v583, %v699
        %v716 = vmul.f32 %v585, %v700
        %v717 = vmul.f32 %v587, %v701
        %v718 = vmul.f32 %v589, %v702
        %v719 = vadd.f32 %v686, %v711
        %v720 = vadd.f32 %v687, %v712
        %v721 = vadd.f32 %v688, %v713
        %v722 = vadd.f32 %v689, %v714
        %v723 = vadd.f32 %v690, %v715
        %v724 = vadd.f32 %v691, %v716
        %v725 = vadd.f32 %v692, %v717
        %v726 = vadd.f32 %v693, %v718
        %v727 = vtanh.pop %v719
        %v728 = vtanh.pop %v720
        %v729 = vtanh.pop %v721
        %v730 = vtanh.pop %v722
        %v731 = vtanh.pop %v723
        %v732 = vtanh.pop %v724
        %v733 = vtanh.pop %v725
        %v734 = vtanh.pop %v726
        %v743 = vrot.slane %v728, 7
        %vm744 = vcmask 1041409
        %v745 = vsel %vm744, %v743, %v727
        %v746 = vrot.slane %v729, 6
        %vm747 = vcmask 1042434
        %v748 = vsel %vm747, %v746, %v745
        %v749 = vrot.slane %v730, 5
        %vm750 = vcmask 1043459
        %v751 = vsel %vm750, %v749, %v748
        %v752 = vrot.slane %v731, 4
        %vm753 = vcmask 1044484
        %v754 = vsel %vm753, %v752, %v751
        %v755 = vrot.slane %v732, 3
        %vm756 = vcmask 1045509
        %v757 = vsel %vm756, %v755, %v754
        %v758 = vrot.slane %v733, 2
        %vm759 = vcmask 1046534
        %v760 = vsel %vm759, %v758, %v757
        %v761 = vrot.slane %v734, 1
        %vm762 = vcmask 1047559
        %v763 = vsel %vm762, %v761, %v760
        %v765 = vsub.f32 %v291, %v763
        %v767 = vrot.slane %v765, 1
        %v768 = vrot.slane %v765, 2
        %v769 = vrot.slane %v765, 3
        %v770 = vrot.slane %v765, 4
        %v771 = vrot.slane %v765, 5
        %v772 = vrot.slane %v765, 6
        %v773 = vrot.slane %v765, 7
        %v782 = vmul.f32 %v663, %v765
        %v783 = vmul.f32 %v665, %v767
        %v784 = vmul.f32 %v667, %v768
        %v785 = vmul.f32 %v669, %v769
        %v786 = vmul.f32 %v671, %v770
        %v787 = vmul.f32 %v673, %v771
        %v788 = vmul.f32 %v675, %v772
        %v789 = vmul.f32 %v677, %v773
        %v790 = vadd.f32 %v727, %v782
        %v791 = vadd.f32 %v728, %v783
        %v792 = vadd.f32 %v729, %v784
        %v793 = vadd.f32 %v730, %v785
        %v794 = vadd.f32 %v731, %v786
        %v795 = vadd.f32 %v732, %v787
        %v796 = vadd.f32 %v733, %v788
        %v797 = vadd.f32 %v734, %v789
        %798 = vst [vmem:[%s243] sm:$0x1] %v790
        %799 = vst [vmem:[%s243 + $0x8] sm:$0x1] %v791
        %800 = vst [vmem:[%s243 + $0x10] sm:$0x1] %v792
        %801 = vst [vmem:[%s243 + $0x18] sm:$0x1] %v793
        %802 = vst [vmem:[%s243 + $0x20] sm:$0x1] %v794
        %803 = vst [vmem:[%s243 + $0x28] sm:$0x1] %v795
        %804 = vst [vmem:[%s243 + $0x30] sm:$0x1] %v796
        %805 = vst [vmem:[%s243 + $0x38] sm:$0x1] %v797
        %v806 = vpack.c.bf16 %v790, %v790
        %v807 = vpack.c.bf16 %v791, %v791
        %v808 = vpack.c.bf16 %v792, %v792
        %v809 = vpack.c.bf16 %v793, %v793
        %v810 = vpack.c.bf16 %v794, %v794
        %v811 = vpack.c.bf16 %v795, %v795
        %v812 = vpack.c.bf16 %v796, %v796
        %v813 = vpack.c.bf16 %v797, %v797
        %v822 = vunpack.c.l.b16 %v806
        %v823 = vunpack.c.l.b16 %v807
        %v824 = vunpack.c.l.b16 %v808
        %v825 = vunpack.c.l.b16 %v809
        %v826 = vunpack.c.l.b16 %v810
        %v827 = vunpack.c.l.b16 %v811
        %v828 = vunpack.c.l.b16 %v812
        %v829 = vunpack.c.l.b16 %v813
        %v830 = vrot.slane %v823, 7
        %v831 = vsel %vm744, %v830, %v822
        %v832 = vrot.slane %v824, 6
        %v833 = vsel %vm747, %v832, %v831
        %v834 = vrot.slane %v825, 5
        %v835 = vsel %vm750, %v834, %v833
        %v836 = vrot.slane %v826, 4
        %v837 = vsel %vm753, %v836, %v835
        %v838 = vrot.slane %v827, 3
        %v839 = vsel %vm756, %v838, %v837
        %v840 = vrot.slane %v828, 2
        %v841 = vsel %vm759, %v840, %v839
        %v842 = vrot.slane %v829, 1
        %v843 = vsel %vm762, %v842, %v841
        %v844 = vpack.c.b16 %v843, %v843
        %846 = vmatprep.subr.bf16.mxu0 %v395
        %847 = vmatpush1.bf16.msra.mxu0 %v394
        %848 = vmatprep.subr.bf16.mxu0 %v392
        %849 = vmatpush1.bf16.msra.mxu0 %v391
        %850 = vmatprep.subr.bf16.mxu0 %v389
        %851 = vmatpush1.bf16.msra.mxu0 %v388
        %852 = vmatprep.subr.bf16.mxu0 %v386
        %853 = vmatpush1.bf16.msra.mxu0 %v385
        %854 = vmatprep.subr.bf16.mxu0 %v383
        %855 = vmatpush1.bf16.msra.mxu0 %v382
        %856 = vmatprep.subr.bf16.mxu0 %v380
        %857 = vmatpush1.bf16.msra.mxu0 %v379
        %858 = vmatprep.subr.bf16.mxu0 %v377
        %859 = vmatpush1.bf16.msra.mxu0 %v376
        %860 = vmatprep.subr.bf16.mxu0 %v374
        %861 = vmatpush1.bf16.msra.mxu0 %v373
        %862 = vmatprep.subr.bf16.mxu0 0
        %863 = vmatpush2.bf16.msra.mxu0 0
        %864 = vmatprep.subr.bf16.mxu0 0
        %865 = vmatpush2.bf16.msra.mxu0 0
        %866 = vmatprep.subr.bf16.mxu0 0
        %867 = vmatpush2.bf16.msra.mxu0 0
        %868 = vmatprep.subr.bf16.mxu0 0
        %869 = vmatpush2.bf16.msra.mxu0 0
        %870 = vmatprep.subr.bf16.mxu0 0
        %871 = vmatpush2.bf16.msra.mxu0 0
        %872 = vmatprep.subr.bf16.mxu0 0
        %873 = vmatpush2.bf16.msra.mxu0 0
        %874 = vmatprep.subr.bf16.mxu0 0
        %875 = vmatpush2.bf16.msra.mxu0 0
        %876 = vmatprep.subr.bf16.mxu0 0
        %877 = vmatpush2.bf16.msra.mxu0 0
        %878 = vmatprep.mubr.bf16.mxu0 0
        %879 = vmatmul.mubr.bf16.gmra.mxu0 %v844
        %v880 = vpop.f32.mrf.mxu0
        %v881 = vadd.f32 0.0, %v880
        %v882 = vpop.f32.mrf.mxu0
        %v883 = vadd.f32 0.0, %v882
        %v884 = vpop.f32.mrf.mxu0
        %v885 = vpop.f32.mrf.mxu0
        %886 = vdwg.mxu0
        %887 = vmatprep.subr.bf16.mxu0 0
        %888 = vmatpush1.bf16.msra.mxu0 %v396
        %889 = vmatprep.subr.bf16.mxu0 0
        %890 = vmatpush1.bf16.msra.mxu0 %v393
        %891 = vmatprep.subr.bf16.mxu0 0
        %892 = vmatpush1.bf16.msra.mxu0 %v390
        %893 = vmatprep.subr.bf16.mxu0 0
        %894 = vmatpush1.bf16.msra.mxu0 %v387
        %895 = vmatprep.subr.bf16.mxu0 0
        %896 = vmatpush1.bf16.msra.mxu0 %v384
        %897 = vmatprep.subr.bf16.mxu0 0
        %898 = vmatpush1.bf16.msra.mxu0 %v381
        %899 = vmatprep.subr.bf16.mxu0 0
        %900 = vmatpush1.bf16.msra.mxu0 %v378
        %901 = vmatprep.subr.bf16.mxu0 0
        %902 = vmatpush1.bf16.msra.mxu0 %v375
        %903 = vmatprep.subr.bf16.mxu0 0
        %904 = vmatpush2.bf16.msra.mxu0 0
        %905 = vmatprep.subr.bf16.mxu0 0
        %906 = vmatpush2.bf16.msra.mxu0 0
        %907 = vmatprep.subr.bf16.mxu0 0
        %908 = vmatpush2.bf16.msra.mxu0 0
        %909 = vmatprep.subr.bf16.mxu0 0
        %910 = vmatpush2.bf16.msra.mxu0 0
        %911 = vmatprep.subr.bf16.mxu0 0
        %912 = vmatpush2.bf16.msra.mxu0 0
        %913 = vmatprep.subr.bf16.mxu0 0
        %914 = vmatpush2.bf16.msra.mxu0 0
        %915 = vmatprep.subr.bf16.mxu0 0
        %916 = vmatpush2.bf16.msra.mxu0 0
        %917 = vmatprep.subr.bf16.mxu0 0
        %918 = vmatpush2.bf16.msra.mxu0 0
        %919 = vmatprep.mubr.bf16.mxu0 0
        %920 = vmatmul.mubr.bf16.gmra.mxu0 %v844
        %v921 = vpop.f32.mrf.mxu0
        %v922 = vadd.f32 0.0, %v921
        %v923 = vpop.f32.mrf.mxu0
        %v924 = vpop.f32.mrf.mxu0
        %v925 = vpop.f32.mrf.mxu0
        %926 = vdwg.mxu0
        %v927 = vld [vmem:[%s224] sm:$0x1]
        %v928 = vld [vmem:[%s224 + $0xc] sm:$0x1]
        %v929 = vld [vmem:[%s224 + $0x18] sm:$0x1]
        %v930 = vld [vmem:[%s224 + $0x24] sm:$0x1]
        %v931 = vld [vmem:[%s224 + $0x30] sm:$0x1]
        %v932 = vld [vmem:[%s224 + $0x3c] sm:$0x1]
        %v933 = vld [vmem:[%s224 + $0x48] sm:$0x1]
        %v934 = vld [vmem:[%s224 + $0x54] sm:$0x1]
        %v935 = vunpack.c.l.bf16 %v927
        %v936 = vunpack.c.l.bf16 %v928
        %v937 = vunpack.c.l.bf16 %v929
        %v938 = vunpack.c.l.bf16 %v930
        %v939 = vunpack.c.l.bf16 %v931
        %v940 = vunpack.c.l.bf16 %v932
        %v941 = vunpack.c.l.bf16 %v933
        %v942 = vunpack.c.l.bf16 %v934
        %v944 = vrot.slane %v881, 7
        %v945 = vrot.slane %v881, 1
        %v946 = vrot.slane %v881, 2
        %v947 = vrot.slane %v881, 3
        %v948 = vrot.slane %v881, 4
        %v949 = vrot.slane %v881, 5
        %v950 = vrot.slane %v881, 6
        %v959 = vadd.f32 %v935, %v944
        %v960 = vadd.f32 %v936, %v881
        %v961 = vadd.f32 %v937, %v945
        %v962 = vadd.f32 %v938, %v946
        %v963 = vadd.f32 %v939, %v947
        %v964 = vadd.f32 %v940, %v948
        %v965 = vadd.f32 %v941, %v949
        %v966 = vadd.f32 %v942, %v950
        %v967 = vxor.u32 %v959, 2147483648
        %v968 = vxor.u32 %v960, 2147483648
        %v969 = vxor.u32 %v961, 2147483648
        %v970 = vxor.u32 %v962, 2147483648
        %v971 = vxor.u32 %v963, 2147483648
        %v972 = vxor.u32 %v964, 2147483648
        %v973 = vxor.u32 %v965, 2147483648
        %v974 = vxor.u32 %v966, 2147483648
        %v975 = vmul.f32 %v967, 1.442695
        %v976 = vpow.pop %v975
        %v977 = vmul.f32 %v968, 1.442695
        %v978 = vpow.pop %v977
        %v979 = vmul.f32 %v969, 1.442695
        %v980 = vpow.pop %v979
        %v981 = vmul.f32 %v970, 1.442695
        %v982 = vpow.pop %v981
        %v983 = vmul.f32 %v971, 1.442695
        %v984 = vpow.pop %v983
        %v985 = vmul.f32 %v972, 1.442695
        %v986 = vpow.pop %v985
        %v987 = vmul.f32 %v973, 1.442695
        %v988 = vpow.pop %v987
        %v989 = vmul.f32 %v974, 1.442695
        %v990 = vpow.pop %v989
        %v991 = vadd.f32 %v976, 1.0
        %v992 = vadd.f32 %v978, 1.0
        %v993 = vadd.f32 %v980, 1.0
        %v994 = vadd.f32 %v982, 1.0
        %v995 = vadd.f32 %v984, 1.0
        %v996 = vadd.f32 %v986, 1.0
        %v997 = vadd.f32 %v988, 1.0
        %v998 = vadd.f32 %v990, 1.0
        %v999 = vrcp.pop %v991
        %v1000 = vmul.f32 1.0, %v999
        %v1001 = vrcp.pop %v992
        %v1002 = vmul.f32 1.0, %v1001
        %v1003 = vrcp.pop %v993
        %v1004 = vmul.f32 1.0, %v1003
        %v1005 = vrcp.pop %v994
        %v1006 = vmul.f32 1.0, %v1005
        %v1007 = vrcp.pop %v995
        %v1008 = vmul.f32 1.0, %v1007
        %v1009 = vrcp.pop %v996
        %v1010 = vmul.f32 1.0, %v1009
        %v1011 = vrcp.pop %v997
        %v1012 = vmul.f32 1.0, %v1011
        %v1013 = vrcp.pop %v998
        %v1014 = vmul.f32 1.0, %v1013
        %v1015 = vld [vmem:[%s224 + $0x4] sm:$0x1]
        %v1016 = vld [vmem:[%s224 + $0x10] sm:$0x1]
        %v1017 = vld [vmem:[%s224 + $0x1c] sm:$0x1]
        %v1018 = vld [vmem:[%s224 + $0x28] sm:$0x1]
        %v1019 = vld [vmem:[%s224 + $0x34] sm:$0x1]
        %v1020 = vld [vmem:[%s224 + $0x40] sm:$0x1]
        %v1021 = vld [vmem:[%s224 + $0x4c] sm:$0x1]
        %v1022 = vld [vmem:[%s224 + $0x58] sm:$0x1]
        %v1023 = vunpack.c.l.bf16 %v1015
        %v1024 = vunpack.c.l.bf16 %v1016
        %v1025 = vunpack.c.l.bf16 %v1017
        %v1026 = vunpack.c.l.bf16 %v1018
        %v1027 = vunpack.c.l.bf16 %v1019
        %v1028 = vunpack.c.l.bf16 %v1020
        %v1029 = vunpack.c.l.bf16 %v1021
        %v1030 = vunpack.c.l.bf16 %v1022
        %v1032 = vrot.slane %v883, 7
        %v1033 = vrot.slane %v883, 1
        %v1034 = vrot.slane %v883, 2
        %v1035 = vrot.slane %v883, 3
        %v1036 = vrot.slane %v883, 4
        %v1037 = vrot.slane %v883, 5
        %v1038 = vrot.slane %v883, 6
        %v1047 = vadd.f32 %v1023, %v1032
        %v1048 = vadd.f32 %v1024, %v883
        %v1049 = vadd.f32 %v1025, %v1033
        %v1050 = vadd.f32 %v1026, %v1034
        %v1051 = vadd.f32 %v1027, %v1035
        %v1052 = vadd.f32 %v1028, %v1036
        %v1053 = vadd.f32 %v1029, %v1037
        %v1054 = vadd.f32 %v1030, %v1038
        %v1055 = vxor.u32 %v1047, 2147483648
        %v1056 = vxor.u32 %v1048, 2147483648
        %v1057 = vxor.u32 %v1049, 2147483648
        %v1058 = vxor.u32 %v1050, 2147483648
        %v1059 = vxor.u32 %v1051, 2147483648
        %v1060 = vxor.u32 %v1052, 2147483648
        %v1061 = vxor.u32 %v1053, 2147483648
        %v1062 = vxor.u32 %v1054, 2147483648
        %v1063 = vmul.f32 %v1055, 1.442695
        %v1064 = vpow.pop %v1063
        %v1065 = vmul.f32 %v1056, 1.442695
        %v1066 = vpow.pop %v1065
        %v1067 = vmul.f32 %v1057, 1.442695
        %v1068 = vpow.pop %v1067
        %v1069 = vmul.f32 %v1058, 1.442695
        %v1070 = vpow.pop %v1069
        %v1071 = vmul.f32 %v1059, 1.442695
        %v1072 = vpow.pop %v1071
        %v1073 = vmul.f32 %v1060, 1.442695
        %v1074 = vpow.pop %v1073
        %v1075 = vmul.f32 %v1061, 1.442695
        %v1076 = vpow.pop %v1075
        %v1077 = vmul.f32 %v1062, 1.442695
        %v1078 = vpow.pop %v1077
        %v1079 = vadd.f32 %v1064, 1.0
        %v1080 = vadd.f32 %v1066, 1.0
        %v1081 = vadd.f32 %v1068, 1.0
        %v1082 = vadd.f32 %v1070, 1.0
        %v1083 = vadd.f32 %v1072, 1.0
        %v1084 = vadd.f32 %v1074, 1.0
        %v1085 = vadd.f32 %v1076, 1.0
        %v1086 = vadd.f32 %v1078, 1.0
        %v1087 = vrcp.pop %v1079
        %v1088 = vmul.f32 1.0, %v1087
        %v1089 = vrcp.pop %v1080
        %v1090 = vmul.f32 1.0, %v1089
        %v1091 = vrcp.pop %v1081
        %v1092 = vmul.f32 1.0, %v1091
        %v1093 = vrcp.pop %v1082
        %v1094 = vmul.f32 1.0, %v1093
        %v1095 = vrcp.pop %v1083
        %v1096 = vmul.f32 1.0, %v1095
        %v1097 = vrcp.pop %v1084
        %v1098 = vmul.f32 1.0, %v1097
        %v1099 = vrcp.pop %v1085
        %v1100 = vmul.f32 1.0, %v1099
        %v1101 = vrcp.pop %v1086
        %v1102 = vmul.f32 1.0, %v1101
        %v1103 = vld [vmem:[%s224 + $0x8] sm:$0x1]
        %v1104 = vld [vmem:[%s224 + $0x14] sm:$0x1]
        %v1105 = vld [vmem:[%s224 + $0x20] sm:$0x1]
        %v1106 = vld [vmem:[%s224 + $0x2c] sm:$0x1]
        %v1107 = vld [vmem:[%s224 + $0x38] sm:$0x1]
        %v1108 = vld [vmem:[%s224 + $0x44] sm:$0x1]
        %v1109 = vld [vmem:[%s224 + $0x50] sm:$0x1]
        %v1110 = vld [vmem:[%s224 + $0x5c] sm:$0x1]
        %v1111 = vunpack.c.l.bf16 %v1103
        %v1112 = vunpack.c.l.bf16 %v1104
        %v1113 = vunpack.c.l.bf16 %v1105
        %v1114 = vunpack.c.l.bf16 %v1106
        %v1115 = vunpack.c.l.bf16 %v1107
        %v1116 = vunpack.c.l.bf16 %v1108
        %v1117 = vunpack.c.l.bf16 %v1109
        %v1118 = vunpack.c.l.bf16 %v1110
        %v1119 = vadd.f32 %v922, %v289
        %v1121 = vrot.slane %v1119, 7
        %v1122 = vrot.slane %v1119, 1
        %v1123 = vrot.slane %v1119, 2
        %v1124 = vrot.slane %v1119, 3
        %v1125 = vrot.slane %v1119, 4
        %v1126 = vrot.slane %v1119, 5
        %v1127 = vrot.slane %v1119, 6
        %v1136 = vmul.f32 %v1000, %v1121
        %v1137 = vmul.f32 %v1002, %v1119
        %v1138 = vmul.f32 %v1004, %v1122
        %v1139 = vmul.f32 %v1006, %v1123
        %v1140 = vmul.f32 %v1008, %v1124
        %v1141 = vmul.f32 %v1010, %v1125
        %v1142 = vmul.f32 %v1012, %v1126
        %v1143 = vmul.f32 %v1014, %v1127
        %v1144 = vadd.f32 %v1111, %v1136
        %v1145 = vadd.f32 %v1112, %v1137
        %v1146 = vadd.f32 %v1113, %v1138
        %v1147 = vadd.f32 %v1114, %v1139
        %v1148 = vadd.f32 %v1115, %v1140
        %v1149 = vadd.f32 %v1116, %v1141
        %v1150 = vadd.f32 %v1117, %v1142
        %v1151 = vadd.f32 %v1118, %v1143
        %v1152 = vtanh.pop %v1144
        %v1153 = vtanh.pop %v1145
        %v1154 = vtanh.pop %v1146
        %v1155 = vtanh.pop %v1147
        %v1156 = vtanh.pop %v1148
        %v1157 = vtanh.pop %v1149
        %v1158 = vtanh.pop %v1150
        %v1159 = vtanh.pop %v1151
        %v1168 = vrot.slane %v1152, 1
        %v1169 = vrot.slane %v1153, 1
        %v1170 = vrot.slane %v1154, 1
        %v1171 = vrot.slane %v1155, 1
        %v1172 = vrot.slane %v1156, 1
        %v1173 = vrot.slane %v1157, 1
        %v1174 = vrot.slane %v1158, 1
        %v1175 = vrot.slane %v1159, 1
        %v1184 = vsub.f32 %v790, %v1168
        %v1185 = vsub.f32 %v791, %v1169
        %v1186 = vsub.f32 %v792, %v1170
        %v1187 = vsub.f32 %v793, %v1171
        %v1188 = vsub.f32 %v794, %v1172
        %v1189 = vsub.f32 %v795, %v1173
        %v1190 = vsub.f32 %v796, %v1174
        %v1191 = vsub.f32 %v797, %v1175
        %v1200 = vrot.slane %v1184, 7
        %v1201 = vrot.slane %v1185, 7
        %v1202 = vrot.slane %v1186, 7
        %v1203 = vrot.slane %v1187, 7
        %v1204 = vrot.slane %v1188, 7
        %v1205 = vrot.slane %v1189, 7
        %v1206 = vrot.slane %v1190, 7
        %v1207 = vrot.slane %v1191, 7
        %v1216 = vmul.f32 %v1088, %v1200
        %v1217 = vmul.f32 %v1090, %v1201
        %v1218 = vmul.f32 %v1092, %v1202
        %v1219 = vmul.f32 %v1094, %v1203
        %v1220 = vmul.f32 %v1096, %v1204
        %v1221 = vmul.f32 %v1098, %v1205
        %v1222 = vmul.f32 %v1100, %v1206
        %v1223 = vmul.f32 %v1102, %v1207
        %v1224 = vadd.f32 %v1152, %v1216
        %v1225 = vadd.f32 %v1153, %v1217
        %v1226 = vadd.f32 %v1154, %v1218
        %v1227 = vadd.f32 %v1155, %v1219
        %v1228 = vadd.f32 %v1156, %v1220
        %v1229 = vadd.f32 %v1157, %v1221
        %v1230 = vadd.f32 %v1158, %v1222
        %v1231 = vadd.f32 %v1159, %v1223
        %1232 = vst [vmem:[%s243] sm:$0x2] %v1224
        %1233 = vst [vmem:[%s243 + $0x8] sm:$0x2] %v1225
        %1234 = vst [vmem:[%s243 + $0x10] sm:$0x2] %v1226
        %1235 = vst [vmem:[%s243 + $0x18] sm:$0x2] %v1227
        %1236 = vst [vmem:[%s243 + $0x20] sm:$0x2] %v1228
        %1237 = vst [vmem:[%s243 + $0x28] sm:$0x2] %v1229
        %1238 = vst [vmem:[%s243 + $0x30] sm:$0x2] %v1230
        %1239 = vst [vmem:[%s243 + $0x38] sm:$0x2] %v1231
        %v1240 = vpack.c.bf16 %v1224, %v1224
        %v1241 = vpack.c.bf16 %v1225, %v1225
        %v1242 = vpack.c.bf16 %v1226, %v1226
        %v1243 = vpack.c.bf16 %v1227, %v1227
        %v1244 = vpack.c.bf16 %v1228, %v1228
        %v1245 = vpack.c.bf16 %v1229, %v1229
        %v1246 = vpack.c.bf16 %v1230, %v1230
        %v1247 = vpack.c.bf16 %v1231, %v1231
        %v1256 = vunpack.c.l.b16 %v1240
        %v1257 = vunpack.c.l.b16 %v1241
        %v1258 = vunpack.c.l.b16 %v1242
        %v1259 = vunpack.c.l.b16 %v1243
        %v1260 = vunpack.c.l.b16 %v1244
        %v1261 = vunpack.c.l.b16 %v1245
        %v1262 = vunpack.c.l.b16 %v1246
        %v1263 = vunpack.c.l.b16 %v1247
        %v1264 = vrot.slane %v1256, 1
        %v1265 = vsel %vm744, %v1257, %v1264
        %v1266 = vrot.slane %v1258, 7
        %v1267 = vsel %vm747, %v1266, %v1265
        %v1268 = vrot.slane %v1259, 6
        %v1269 = vsel %vm750, %v1268, %v1267
        %v1270 = vrot.slane %v1260, 5
        %v1271 = vsel %vm753, %v1270, %v1269
        %v1272 = vrot.slane %v1261, 4
        %v1273 = vsel %vm756, %v1272, %v1271
        %v1274 = vrot.slane %v1262, 3
        %v1275 = vsel %vm759, %v1274, %v1273
        %v1276 = vrot.slane %v1263, 2
        %v1277 = vsel %vm762, %v1276, %v1275
        %v1278 = vpack.c.b16 %v1277, %v1277
        %1280 = vmatprep.subr.bf16.mxu0 %v395
        %1281 = vmatpush1.bf16.msra.mxu0 %v394
        %1282 = vmatprep.subr.bf16.mxu0 %v392
        %1283 = vmatpush1.bf16.msra.mxu0 %v391
        %1284 = vmatprep.subr.bf16.mxu0 %v389
        %1285 = vmatpush1.bf16.msra.mxu0 %v388
        %1286 = vmatprep.subr.bf16.mxu0 %v386
        %1287 = vmatpush1.bf16.msra.mxu0 %v385
        %1288 = vmatprep.subr.bf16.mxu0 %v383
        %1289 = vmatpush1.bf16.msra.mxu0 %v382
        %1290 = vmatprep.subr.bf16.mxu0 %v380
        %1291 = vmatpush1.bf16.msra.mxu0 %v379
        %1292 = vmatprep.subr.bf16.mxu0 %v377
        %1293 = vmatpush1.bf16.msra.mxu0 %v376
        %1294 = vmatprep.subr.bf16.mxu0 %v374
        %1295 = vmatpush1.bf16.msra.mxu0 %v373
        %1296 = vmatprep.subr.bf16.mxu0 0
        %1297 = vmatpush2.bf16.msra.mxu0 0
        %1298 = vmatprep.subr.bf16.mxu0 0
        %1299 = vmatpush2.bf16.msra.mxu0 0
        %1300 = vmatprep.subr.bf16.mxu0 0
        %1301 = vmatpush2.bf16.msra.mxu0 0
        %1302 = vmatprep.subr.bf16.mxu0 0
        %1303 = vmatpush2.bf16.msra.mxu0 0
        %1304 = vmatprep.subr.bf16.mxu0 0
        %1305 = vmatpush2.bf16.msra.mxu0 0
        %1306 = vmatprep.subr.bf16.mxu0 0
        %1307 = vmatpush2.bf16.msra.mxu0 0
        %1308 = vmatprep.subr.bf16.mxu0 0
        %1309 = vmatpush2.bf16.msra.mxu0 0
        %1310 = vmatprep.subr.bf16.mxu0 0
        %1311 = vmatpush2.bf16.msra.mxu0 0
        %1312 = vmatprep.mubr.bf16.mxu0 0
        %1313 = vmatmul.mubr.bf16.gmra.mxu0 %v1278
        %v1314 = vpop.f32.mrf.mxu0
        %v1315 = vadd.f32 0.0, %v1314
        %v1316 = vpop.f32.mrf.mxu0
        %v1317 = vadd.f32 0.0, %v1316
        %v1318 = vpop.f32.mrf.mxu0
        %v1319 = vpop.f32.mrf.mxu0
        %1320 = vdwg.mxu0
        %1321 = vmatprep.subr.bf16.mxu0 0
        %1322 = vmatpush1.bf16.msra.mxu0 %v396
        %1323 = vmatprep.subr.bf16.mxu0 0
        %1324 = vmatpush1.bf16.msra.mxu0 %v393
        %1325 = vmatprep.subr.bf16.mxu0 0
        %1326 = vmatpush1.bf16.msra.mxu0 %v390
        %1327 = vmatprep.subr.bf16.mxu0 0
        %1328 = vmatpush1.bf16.msra.mxu0 %v387
        %1329 = vmatprep.subr.bf16.mxu0 0
        %1330 = vmatpush1.bf16.msra.mxu0 %v384
        %1331 = vmatprep.subr.bf16.mxu0 0
        %1332 = vmatpush1.bf16.msra.mxu0 %v381
        %1333 = vmatprep.subr.bf16.mxu0 0
        %1334 = vmatpush1.bf16.msra.mxu0 %v378
        %1335 = vmatprep.subr.bf16.mxu0 0
        %1336 = vmatpush1.bf16.msra.mxu0 %v375
        %1337 = vmatprep.subr.bf16.mxu0 0
        %1338 = vmatpush2.bf16.msra.mxu0 0
        %1339 = vmatprep.subr.bf16.mxu0 0
        %1340 = vmatpush2.bf16.msra.mxu0 0
        %1341 = vmatprep.subr.bf16.mxu0 0
        %1342 = vmatpush2.bf16.msra.mxu0 0
        %1343 = vmatprep.subr.bf16.mxu0 0
        %1344 = vmatpush2.bf16.msra.mxu0 0
        %1345 = vmatprep.subr.bf16.mxu0 0
        %1346 = vmatpush2.bf16.msra.mxu0 0
        %1347 = vmatprep.subr.bf16.mxu0 0
        %1348 = vmatpush2.bf16.msra.mxu0 0
        %1349 = vmatprep.subr.bf16.mxu0 0
        %1350 = vmatpush2.bf16.msra.mxu0 0
        %1351 = vmatprep.subr.bf16.mxu0 0
        %1352 = vmatpush2.bf16.msra.mxu0 0
        %1353 = vmatprep.mubr.bf16.mxu0 0
        %1354 = vmatmul.mubr.bf16.gmra.mxu0 %v1278
        %v1355 = vpop.f32.mrf.mxu0
        %v1356 = vadd.f32 0.0, %v1355
        %v1357 = vpop.f32.mrf.mxu0
        %v1358 = vpop.f32.mrf.mxu0
        %v1359 = vpop.f32.mrf.mxu0
        %1360 = vdwg.mxu0
        %v1361 = vld [vmem:[%s224] sm:$0x2]
        %v1362 = vld [vmem:[%s224 + $0xc] sm:$0x2]
        %v1363 = vld [vmem:[%s224 + $0x18] sm:$0x2]
        %v1364 = vld [vmem:[%s224 + $0x24] sm:$0x2]
        %v1365 = vld [vmem:[%s224 + $0x30] sm:$0x2]
        %v1366 = vld [vmem:[%s224 + $0x3c] sm:$0x2]
        %v1367 = vld [vmem:[%s224 + $0x48] sm:$0x2]
        %v1368 = vld [vmem:[%s224 + $0x54] sm:$0x2]
        %v1369 = vunpack.c.l.bf16 %v1361
        %v1370 = vunpack.c.l.bf16 %v1362
        %v1371 = vunpack.c.l.bf16 %v1363
        %v1372 = vunpack.c.l.bf16 %v1364
        %v1373 = vunpack.c.l.bf16 %v1365
        %v1374 = vunpack.c.l.bf16 %v1366
        %v1375 = vunpack.c.l.bf16 %v1367
        %v1376 = vunpack.c.l.bf16 %v1368
        %v1378 = vrot.slane %v1315, 6
        %v1379 = vrot.slane %v1315, 7
        %v1380 = vrot.slane %v1315, 1
        %v1381 = vrot.slane %v1315, 2
        %v1382 = vrot.slane %v1315, 3
        %v1383 = vrot.slane %v1315, 4
        %v1384 = vrot.slane %v1315, 5
        %v1393 = vadd.f32 %v1369, %v1378
        %v1394 = vadd.f32 %v1370, %v1379
        %v1395 = vadd.f32 %v1371, %v1315
        %v1396 = vadd.f32 %v1372, %v1380
        %v1397 = vadd.f32 %v1373, %v1381
        %v1398 = vadd.f32 %v1374, %v1382
        %v1399 = vadd.f32 %v1375, %v1383
        %v1400 = vadd.f32 %v1376, %v1384
        %v1401 = vxor.u32 %v1393, 2147483648
        %v1402 = vxor.u32 %v1394, 2147483648
        %v1403 = vxor.u32 %v1395, 2147483648
        %v1404 = vxor.u32 %v1396, 2147483648
        %v1405 = vxor.u32 %v1397, 2147483648
        %v1406 = vxor.u32 %v1398, 2147483648
        %v1407 = vxor.u32 %v1399, 2147483648
        %v1408 = vxor.u32 %v1400, 2147483648
        %v1409 = vmul.f32 %v1401, 1.442695
        %v1410 = vpow.pop %v1409
        %v1411 = vmul.f32 %v1402, 1.442695
        %v1412 = vpow.pop %v1411
        %v1413 = vmul.f32 %v1403, 1.442695
        %v1414 = vpow.pop %v1413
        %v1415 = vmul.f32 %v1404, 1.442695
        %v1416 = vpow.pop %v1415
        %v1417 = vmul.f32 %v1405, 1.442695
        %v1418 = vpow.pop %v1417
        %v1419 = vmul.f32 %v1406, 1.442695
        %v1420 = vpow.pop %v1419
        %v1421 = vmul.f32 %v1407, 1.442695
        %v1422 = vpow.pop %v1421
        %v1423 = vmul.f32 %v1408, 1.442695
        %v1424 = vpow.pop %v1423
        %v1425 = vadd.f32 %v1410, 1.0
        %v1426 = vadd.f32 %v1412, 1.0
        %v1427 = vadd.f32 %v1414, 1.0
        %v1428 = vadd.f32 %v1416, 1.0
        %v1429 = vadd.f32 %v1418, 1.0
        %v1430 = vadd.f32 %v1420, 1.0
        %v1431 = vadd.f32 %v1422, 1.0
        %v1432 = vadd.f32 %v1424, 1.0
        %v1433 = vrcp.pop %v1425
        %v1434 = vmul.f32 1.0, %v1433
        %v1435 = vrcp.pop %v1426
        %v1436 = vmul.f32 1.0, %v1435
        %v1437 = vrcp.pop %v1427
        %v1438 = vmul.f32 1.0, %v1437
        %v1439 = vrcp.pop %v1428
        %v1440 = vmul.f32 1.0, %v1439
        %v1441 = vrcp.pop %v1429
        %v1442 = vmul.f32 1.0, %v1441
        %v1443 = vrcp.pop %v1430
        %v1444 = vmul.f32 1.0, %v1443
        %v1445 = vrcp.pop %v1431
        %v1446 = vmul.f32 1.0, %v1445
        %v1447 = vrcp.pop %v1432
        %v1448 = vmul.f32 1.0, %v1447
        %v1449 = vld [vmem:[%s224 + $0x4] sm:$0x2]
        %v1450 = vld [vmem:[%s224 + $0x10] sm:$0x2]
        %v1451 = vld [vmem:[%s224 + $0x1c] sm:$0x2]
        %v1452 = vld [vmem:[%s224 + $0x28] sm:$0x2]
        %v1453 = vld [vmem:[%s224 + $0x34] sm:$0x2]
        %v1454 = vld [vmem:[%s224 + $0x40] sm:$0x2]
        %v1455 = vld [vmem:[%s224 + $0x4c] sm:$0x2]
        %v1456 = vld [vmem:[%s224 + $0x58] sm:$0x2]
        %v1457 = vunpack.c.l.bf16 %v1449
        %v1458 = vunpack.c.l.bf16 %v1450
        %v1459 = vunpack.c.l.bf16 %v1451
        %v1460 = vunpack.c.l.bf16 %v1452
        %v1461 = vunpack.c.l.bf16 %v1453
        %v1462 = vunpack.c.l.bf16 %v1454
        %v1463 = vunpack.c.l.bf16 %v1455
        %v1464 = vunpack.c.l.bf16 %v1456
        %v1466 = vrot.slane %v1317, 6
        %v1467 = vrot.slane %v1317, 7
        %v1468 = vrot.slane %v1317, 1
        %v1469 = vrot.slane %v1317, 2
        %v1470 = vrot.slane %v1317, 3
        %v1471 = vrot.slane %v1317, 4
        %v1472 = vrot.slane %v1317, 5
        %v1481 = vadd.f32 %v1457, %v1466
        %v1482 = vadd.f32 %v1458, %v1467
        %v1483 = vadd.f32 %v1459, %v1317
        %v1484 = vadd.f32 %v1460, %v1468
        %v1485 = vadd.f32 %v1461, %v1469
        %v1486 = vadd.f32 %v1462, %v1470
        %v1487 = vadd.f32 %v1463, %v1471
        %v1488 = vadd.f32 %v1464, %v1472
        %v1489 = vxor.u32 %v1481, 2147483648
        %v1490 = vxor.u32 %v1482, 2147483648
        %v1491 = vxor.u32 %v1483, 2147483648
        %v1492 = vxor.u32 %v1484, 2147483648
        %v1493 = vxor.u32 %v1485, 2147483648
        %v1494 = vxor.u32 %v1486, 2147483648
        %v1495 = vxor.u32 %v1487, 2147483648
        %v1496 = vxor.u32 %v1488, 2147483648
        %v1497 = vmul.f32 %v1489, 1.442695
        %v1498 = vpow.pop %v1497
        %v1499 = vmul.f32 %v1490, 1.442695
        %v1500 = vpow.pop %v1499
        %v1501 = vmul.f32 %v1491, 1.442695
        %v1502 = vpow.pop %v1501
        %v1503 = vmul.f32 %v1492, 1.442695
        %v1504 = vpow.pop %v1503
        %v1505 = vmul.f32 %v1493, 1.442695
        %v1506 = vpow.pop %v1505
        %v1507 = vmul.f32 %v1494, 1.442695
        %v1508 = vpow.pop %v1507
        %v1509 = vmul.f32 %v1495, 1.442695
        %v1510 = vpow.pop %v1509
        %v1511 = vmul.f32 %v1496, 1.442695
        %v1512 = vpow.pop %v1511
        %v1513 = vadd.f32 %v1498, 1.0
        %v1514 = vadd.f32 %v1500, 1.0
        %v1515 = vadd.f32 %v1502, 1.0
        %v1516 = vadd.f32 %v1504, 1.0
        %v1517 = vadd.f32 %v1506, 1.0
        %v1518 = vadd.f32 %v1508, 1.0
        %v1519 = vadd.f32 %v1510, 1.0
        %v1520 = vadd.f32 %v1512, 1.0
        %v1521 = vrcp.pop %v1513
        %v1522 = vmul.f32 1.0, %v1521
        %v1523 = vrcp.pop %v1514
        %v1524 = vmul.f32 1.0, %v1523
        %v1525 = vrcp.pop %v1515
        %v1526 = vmul.f32 1.0, %v1525
        %v1527 = vrcp.pop %v1516
        %v1528 = vmul.f32 1.0, %v1527
        %v1529 = vrcp.pop %v1517
        %v1530 = vmul.f32 1.0, %v1529
        %v1531 = vrcp.pop %v1518
        %v1532 = vmul.f32 1.0, %v1531
        %v1533 = vrcp.pop %v1519
        %v1534 = vmul.f32 1.0, %v1533
        %v1535 = vrcp.pop %v1520
        %v1536 = vmul.f32 1.0, %v1535
        %v1537 = vld [vmem:[%s224 + $0x8] sm:$0x2]
        %v1538 = vld [vmem:[%s224 + $0x14] sm:$0x2]
        %v1539 = vld [vmem:[%s224 + $0x20] sm:$0x2]
        %v1540 = vld [vmem:[%s224 + $0x2c] sm:$0x2]
        %v1541 = vld [vmem:[%s224 + $0x38] sm:$0x2]
        %v1542 = vld [vmem:[%s224 + $0x44] sm:$0x2]
        %v1543 = vld [vmem:[%s224 + $0x50] sm:$0x2]
        %v1544 = vld [vmem:[%s224 + $0x5c] sm:$0x2]
        %v1545 = vunpack.c.l.bf16 %v1537
        %v1546 = vunpack.c.l.bf16 %v1538
        %v1547 = vunpack.c.l.bf16 %v1539
        %v1548 = vunpack.c.l.bf16 %v1540
        %v1549 = vunpack.c.l.bf16 %v1541
        %v1550 = vunpack.c.l.bf16 %v1542
        %v1551 = vunpack.c.l.bf16 %v1543
        %v1552 = vunpack.c.l.bf16 %v1544
        %v1553 = vadd.f32 %v1356, %v289
        %v1555 = vrot.slane %v1553, 6
        %v1556 = vrot.slane %v1553, 7
        %v1557 = vrot.slane %v1553, 1
        %v1558 = vrot.slane %v1553, 2
        %v1559 = vrot.slane %v1553, 3
        %v1560 = vrot.slane %v1553, 4
        %v1561 = vrot.slane %v1553, 5
        %v1570 = vmul.f32 %v1434, %v1555
        %v1571 = vmul.f32 %v1436, %v1556
        %v1572 = vmul.f32 %v1438, %v1553
        %v1573 = vmul.f32 %v1440, %v1557
        %v1574 = vmul.f32 %v1442, %v1558
        %v1575 = vmul.f32 %v1444, %v1559
        %v1576 = vmul.f32 %v1446, %v1560
        %v1577 = vmul.f32 %v1448, %v1561
        %v1578 = vadd.f32 %v1545, %v1570
        %v1579 = vadd.f32 %v1546, %v1571
        %v1580 = vadd.f32 %v1547, %v1572
        %v1581 = vadd.f32 %v1548, %v1573
        %v1582 = vadd.f32 %v1549, %v1574
        %v1583 = vadd.f32 %v1550, %v1575
        %v1584 = vadd.f32 %v1551, %v1576
        %v1585 = vadd.f32 %v1552, %v1577
        %v1586 = vtanh.pop %v1578
        %v1587 = vtanh.pop %v1579
        %v1588 = vtanh.pop %v1580
        %v1589 = vtanh.pop %v1581
        %v1590 = vtanh.pop %v1582
        %v1591 = vtanh.pop %v1583
        %v1592 = vtanh.pop %v1584
        %v1593 = vtanh.pop %v1585
        %v1602 = vrot.slane %v1586, 1
        %v1603 = vrot.slane %v1587, 1
        %v1604 = vrot.slane %v1588, 1
        %v1605 = vrot.slane %v1589, 1
        %v1606 = vrot.slane %v1590, 1
        %v1607 = vrot.slane %v1591, 1
        %v1608 = vrot.slane %v1592, 1
        %v1609 = vrot.slane %v1593, 1
        %v1618 = vsub.f32 %v1224, %v1602
        %v1619 = vsub.f32 %v1225, %v1603
        %v1620 = vsub.f32 %v1226, %v1604
        %v1621 = vsub.f32 %v1227, %v1605
        %v1622 = vsub.f32 %v1228, %v1606
        %v1623 = vsub.f32 %v1229, %v1607
        %v1624 = vsub.f32 %v1230, %v1608
        %v1625 = vsub.f32 %v1231, %v1609
        %v1634 = vrot.slane %v1618, 7
        %v1635 = vrot.slane %v1619, 7
        %v1636 = vrot.slane %v1620, 7
        %v1637 = vrot.slane %v1621, 7
        %v1638 = vrot.slane %v1622, 7
        %v1639 = vrot.slane %v1623, 7
        %v1640 = vrot.slane %v1624, 7
        %v1641 = vrot.slane %v1625, 7
        %v1650 = vmul.f32 %v1522, %v1634
        %v1651 = vmul.f32 %v1524, %v1635
        %v1652 = vmul.f32 %v1526, %v1636
        %v1653 = vmul.f32 %v1528, %v1637
        %v1654 = vmul.f32 %v1530, %v1638
        %v1655 = vmul.f32 %v1532, %v1639
        %v1656 = vmul.f32 %v1534, %v1640
        %v1657 = vmul.f32 %v1536, %v1641
        %v1658 = vadd.f32 %v1586, %v1650
        %v1659 = vadd.f32 %v1587, %v1651
        %v1660 = vadd.f32 %v1588, %v1652
        %v1661 = vadd.f32 %v1589, %v1653
        %v1662 = vadd.f32 %v1590, %v1654
        %v1663 = vadd.f32 %v1591, %v1655
        %v1664 = vadd.f32 %v1592, %v1656
        %v1665 = vadd.f32 %v1593, %v1657
        %1666 = vst [vmem:[%s243] sm:$0x4] %v1658
        %1667 = vst [vmem:[%s243 + $0x8] sm:$0x4] %v1659
        %1668 = vst [vmem:[%s243 + $0x10] sm:$0x4] %v1660
        %1669 = vst [vmem:[%s243 + $0x18] sm:$0x4] %v1661
        %1670 = vst [vmem:[%s243 + $0x20] sm:$0x4] %v1662
        %1671 = vst [vmem:[%s243 + $0x28] sm:$0x4] %v1663
        %1672 = vst [vmem:[%s243 + $0x30] sm:$0x4] %v1664
        %1673 = vst [vmem:[%s243 + $0x38] sm:$0x4] %v1665
        %v1674 = vpack.c.bf16 %v1658, %v1658
        %v1675 = vpack.c.bf16 %v1659, %v1659
        %v1676 = vpack.c.bf16 %v1660, %v1660
        %v1677 = vpack.c.bf16 %v1661, %v1661
        %v1678 = vpack.c.bf16 %v1662, %v1662
        %v1679 = vpack.c.bf16 %v1663, %v1663
        %v1680 = vpack.c.bf16 %v1664, %v1664
        %v1681 = vpack.c.bf16 %v1665, %v1665
        %v1690 = vunpack.c.l.b16 %v1674
        %v1691 = vunpack.c.l.b16 %v1675
        %v1692 = vunpack.c.l.b16 %v1676
        %v1693 = vunpack.c.l.b16 %v1677
        %v1694 = vunpack.c.l.b16 %v1678
        %v1695 = vunpack.c.l.b16 %v1679
        %v1696 = vunpack.c.l.b16 %v1680
        %v1697 = vunpack.c.l.b16 %v1681
        %v1698 = vrot.slane %v1690, 2
        %v1699 = vrot.slane %v1691, 1
        %v1700 = vsel %vm744, %v1699, %v1698
        %v1701 = vsel %vm747, %v1692, %v1700
        %v1702 = vrot.slane %v1693, 7
        %v1703 = vsel %vm750, %v1702, %v1701
        %v1704 = vrot.slane %v1694, 6
        %v1705 = vsel %vm753, %v1704, %v1703
        %v1706 = vrot.slane %v1695, 5
        %v1707 = vsel %vm756, %v1706, %v1705
        %v1708 = vrot.slane %v1696, 4
        %v1709 = vsel %vm759, %v1708, %v1707
        %v1710 = vrot.slane %v1697, 3
        %v1711 = vsel %vm762, %v1710, %v1709
        %v1712 = vpack.c.b16 %v1711, %v1711
        %1714 = vmatprep.subr.bf16.mxu0 %v395
        %1715 = vmatpush1.bf16.msra.mxu0 %v394
        %1716 = vmatprep.subr.bf16.mxu0 %v392
        %1717 = vmatpush1.bf16.msra.mxu0 %v391
        %1718 = vmatprep.subr.bf16.mxu0 %v389
        %1719 = vmatpush1.bf16.msra.mxu0 %v388
        %1720 = vmatprep.subr.bf16.mxu0 %v386
        %1721 = vmatpush1.bf16.msra.mxu0 %v385
        %1722 = vmatprep.subr.bf16.mxu0 %v383
        %1723 = vmatpush1.bf16.msra.mxu0 %v382
        %1724 = vmatprep.subr.bf16.mxu0 %v380
        %1725 = vmatpush1.bf16.msra.mxu0 %v379
        %1726 = vmatprep.subr.bf16.mxu0 %v377
        %1727 = vmatpush1.bf16.msra.mxu0 %v376
        %1728 = vmatprep.subr.bf16.mxu0 %v374
        %1729 = vmatpush1.bf16.msra.mxu0 %v373
        %1730 = vmatprep.subr.bf16.mxu0 0
        %1731 = vmatpush2.bf16.msra.mxu0 0
        %1732 = vmatprep.subr.bf16.mxu0 0
        %1733 = vmatpush2.bf16.msra.mxu0 0
        %1734 = vmatprep.subr.bf16.mxu0 0
        %1735 = vmatpush2.bf16.msra.mxu0 0
        %1736 = vmatprep.subr.bf16.mxu0 0
        %1737 = vmatpush2.bf16.msra.mxu0 0
        %1738 = vmatprep.subr.bf16.mxu0 0
        %1739 = vmatpush2.bf16.msra.mxu0 0
        %1740 = vmatprep.subr.bf16.mxu0 0
        %1741 = vmatpush2.bf16.msra.mxu0 0
        %1742 = vmatprep.subr.bf16.mxu0 0
        %1743 = vmatpush2.bf16.msra.mxu0 0
        %1744 = vmatprep.subr.bf16.mxu0 0
        %1745 = vmatpush2.bf16.msra.mxu0 0
        %1746 = vmatprep.mubr.bf16.mxu0 0
        %1747 = vmatmul.mubr.bf16.gmra.mxu0 %v1712
        %v1748 = vpop.f32.mrf.mxu0
        %v1749 = vadd.f32 0.0, %v1748
        %v1750 = vpop.f32.mrf.mxu0
        %v1751 = vadd.f32 0.0, %v1750
        %v1752 = vpop.f32.mrf.mxu0
        %v1753 = vpop.f32.mrf.mxu0
        %1754 = vdwg.mxu0
        %1755 = vmatprep.subr.bf16.mxu0 0
        %1756 = vmatpush1.bf16.msra.mxu0 %v396
        %1757 = vmatprep.subr.bf16.mxu0 0
        %1758 = vmatpush1.bf16.msra.mxu0 %v393
        %1759 = vmatprep.subr.bf16.mxu0 0
        %1760 = vmatpush1.bf16.msra.mxu0 %v390
        %1761 = vmatprep.subr.bf16.mxu0 0
        %1762 = vmatpush1.bf16.msra.mxu0 %v387
        %1763 = vmatprep.subr.bf16.mxu0 0
        %1764 = vmatpush1.bf16.msra.mxu0 %v384
        %1765 = vmatprep.subr.bf16.mxu0 0
        %1766 = vmatpush1.bf16.msra.mxu0 %v381
        %1767 = vmatprep.subr.bf16.mxu0 0
        %1768 = vmatpush1.bf16.msra.mxu0 %v378
        %1769 = vmatprep.subr.bf16.mxu0 0
        %1770 = vmatpush1.bf16.msra.mxu0 %v375
        %1771 = vmatprep.subr.bf16.mxu0 0
        %1772 = vmatpush2.bf16.msra.mxu0 0
        %1773 = vmatprep.subr.bf16.mxu0 0
        %1774 = vmatpush2.bf16.msra.mxu0 0
        %1775 = vmatprep.subr.bf16.mxu0 0
        %1776 = vmatpush2.bf16.msra.mxu0 0
        %1777 = vmatprep.subr.bf16.mxu0 0
        %1778 = vmatpush2.bf16.msra.mxu0 0
        %1779 = vmatprep.subr.bf16.mxu0 0
        %1780 = vmatpush2.bf16.msra.mxu0 0
        %1781 = vmatprep.subr.bf16.mxu0 0
        %1782 = vmatpush2.bf16.msra.mxu0 0
        %1783 = vmatprep.subr.bf16.mxu0 0
        %1784 = vmatpush2.bf16.msra.mxu0 0
        %1785 = vmatprep.subr.bf16.mxu0 0
        %1786 = vmatpush2.bf16.msra.mxu0 0
        %1787 = vmatprep.mubr.bf16.mxu0 0
        %1788 = vmatmul.mubr.bf16.gmra.mxu0 %v1712
        %v1789 = vpop.f32.mrf.mxu0
        %v1790 = vadd.f32 0.0, %v1789
        %v1791 = vpop.f32.mrf.mxu0
        %v1792 = vpop.f32.mrf.mxu0
        %v1793 = vpop.f32.mrf.mxu0
        %1794 = vdwg.mxu0
        %v1795 = vld [vmem:[%s224] sm:$0x2]
        %v1796 = vld [vmem:[%s224 + $0xc] sm:$0x2]
        %v1797 = vld [vmem:[%s224 + $0x18] sm:$0x2]
        %v1798 = vld [vmem:[%s224 + $0x24] sm:$0x2]
        %v1799 = vld [vmem:[%s224 + $0x30] sm:$0x2]
        %v1800 = vld [vmem:[%s224 + $0x3c] sm:$0x2]
        %v1801 = vld [vmem:[%s224 + $0x48] sm:$0x2]
        %v1802 = vld [vmem:[%s224 + $0x54] sm:$0x2]
        %v1803 = vunpack.c.l.bf16 %v1795
        %v1804 = vunpack.c.l.bf16 %v1796
        %v1805 = vunpack.c.l.bf16 %v1797
        %v1806 = vunpack.c.l.bf16 %v1798
        %v1807 = vunpack.c.l.bf16 %v1799
        %v1808 = vunpack.c.l.bf16 %v1800
        %v1809 = vunpack.c.l.bf16 %v1801
        %v1810 = vunpack.c.l.bf16 %v1802
        %v1812 = vrot.slane %v1749, 5
        %v1813 = vrot.slane %v1749, 6
        %v1814 = vrot.slane %v1749, 7
        %v1815 = vrot.slane %v1749, 1
        %v1816 = vrot.slane %v1749, 2
        %v1817 = vrot.slane %v1749, 3
        %v1818 = vrot.slane %v1749, 4
        %v1827 = vadd.f32 %v1803, %v1812
        %v1828 = vadd.f32 %v1804, %v1813
        %v1829 = vadd.f32 %v1805, %v1814
        %v1830 = vadd.f32 %v1806, %v1749
        %v1831 = vadd.f32 %v1807, %v1815
        %v1832 = vadd.f32 %v1808, %v1816
        %v1833 = vadd.f32 %v1809, %v1817
        %v1834 = vadd.f32 %v1810, %v1818
        %v1835 = vxor.u32 %v1827, 2147483648
        %v1836 = vxor.u32 %v1828, 2147483648
        %v1837 = vxor.u32 %v1829, 2147483648
        %v1838 = vxor.u32 %v1830, 2147483648
        %v1839 = vxor.u32 %v1831, 2147483648
        %v1840 = vxor.u32 %v1832, 2147483648
        %v1841 = vxor.u32 %v1833, 2147483648
        %v1842 = vxor.u32 %v1834, 2147483648
        %v1843 = vmul.f32 %v1835, 1.442695
        %v1844 = vpow.pop %v1843
        %v1845 = vmul.f32 %v1836, 1.442695
        %v1846 = vpow.pop %v1845
        %v1847 = vmul.f32 %v1837, 1.442695
        %v1848 = vpow.pop %v1847
        %v1849 = vmul.f32 %v1838, 1.442695
        %v1850 = vpow.pop %v1849
        %v1851 = vmul.f32 %v1839, 1.442695
        %v1852 = vpow.pop %v1851
        %v1853 = vmul.f32 %v1840, 1.442695
        %v1854 = vpow.pop %v1853
        %v1855 = vmul.f32 %v1841, 1.442695
        %v1856 = vpow.pop %v1855
        %v1857 = vmul.f32 %v1842, 1.442695
        %v1858 = vpow.pop %v1857
        %v1859 = vadd.f32 %v1844, 1.0
        %v1860 = vadd.f32 %v1846, 1.0
        %v1861 = vadd.f32 %v1848, 1.0
        %v1862 = vadd.f32 %v1850, 1.0
        %v1863 = vadd.f32 %v1852, 1.0
        %v1864 = vadd.f32 %v1854, 1.0
        %v1865 = vadd.f32 %v1856, 1.0
        %v1866 = vadd.f32 %v1858, 1.0
        %v1867 = vrcp.pop %v1859
        %v1868 = vmul.f32 1.0, %v1867
        %v1869 = vrcp.pop %v1860
        %v1870 = vmul.f32 1.0, %v1869
        %v1871 = vrcp.pop %v1861
        %v1872 = vmul.f32 1.0, %v1871
        %v1873 = vrcp.pop %v1862
        %v1874 = vmul.f32 1.0, %v1873
        %v1875 = vrcp.pop %v1863
        %v1876 = vmul.f32 1.0, %v1875
        %v1877 = vrcp.pop %v1864
        %v1878 = vmul.f32 1.0, %v1877
        %v1879 = vrcp.pop %v1865
        %v1880 = vmul.f32 1.0, %v1879
        %v1881 = vrcp.pop %v1866
        %v1882 = vmul.f32 1.0, %v1881
        %v1883 = vld [vmem:[%s224 + $0x4] sm:$0x2]
        %v1884 = vld [vmem:[%s224 + $0x10] sm:$0x2]
        %v1885 = vld [vmem:[%s224 + $0x1c] sm:$0x2]
        %v1886 = vld [vmem:[%s224 + $0x28] sm:$0x2]
        %v1887 = vld [vmem:[%s224 + $0x34] sm:$0x2]
        %v1888 = vld [vmem:[%s224 + $0x40] sm:$0x2]
        %v1889 = vld [vmem:[%s224 + $0x4c] sm:$0x2]
        %v1890 = vld [vmem:[%s224 + $0x58] sm:$0x2]
        %v1891 = vunpack.c.l.bf16 %v1883
        %v1892 = vunpack.c.l.bf16 %v1884
        %v1893 = vunpack.c.l.bf16 %v1885
        %v1894 = vunpack.c.l.bf16 %v1886
        %v1895 = vunpack.c.l.bf16 %v1887
        %v1896 = vunpack.c.l.bf16 %v1888
        %v1897 = vunpack.c.l.bf16 %v1889
        %v1898 = vunpack.c.l.bf16 %v1890
        %v1900 = vrot.slane %v1751, 5
        %v1901 = vrot.slane %v1751, 6
        %v1902 = vrot.slane %v1751, 7
        %v1903 = vrot.slane %v1751, 1
        %v1904 = vrot.slane %v1751, 2
        %v1905 = vrot.slane %v1751, 3
        %v1906 = vrot.slane %v1751, 4
        %v1915 = vadd.f32 %v1891, %v1900
        %v1916 = vadd.f32 %v1892, %v1901
        %v1917 = vadd.f32 %v1893, %v1902
        %v1918 = vadd.f32 %v1894, %v1751
        %v1919 = vadd.f32 %v1895, %v1903
        %v1920 = vadd.f32 %v1896, %v1904
        %v1921 = vadd.f32 %v1897, %v1905
        %v1922 = vadd.f32 %v1898, %v1906
        %v1923 = vxor.u32 %v1915, 2147483648
        %v1924 = vxor.u32 %v1916, 2147483648
        %v1925 = vxor.u32 %v1917, 2147483648
        %v1926 = vxor.u32 %v1918, 2147483648
        %v1927 = vxor.u32 %v1919, 2147483648
        %v1928 = vxor.u32 %v1920, 2147483648
        %v1929 = vxor.u32 %v1921, 2147483648
        %v1930 = vxor.u32 %v1922, 2147483648
        %v1931 = vmul.f32 %v1923, 1.442695
        %v1932 = vpow.pop %v1931
        %v1933 = vmul.f32 %v1924, 1.442695
        %v1934 = vpow.pop %v1933
        %v1935 = vmul.f32 %v1925, 1.442695
        %v1936 = vpow.pop %v1935
        %v1937 = vmul.f32 %v1926, 1.442695
        %v1938 = vpow.pop %v1937
        %v1939 = vmul.f32 %v1927, 1.442695
        %v1940 = vpow.pop %v1939
        %v1941 = vmul.f32 %v1928, 1.442695
        %v1942 = vpow.pop %v1941
        %v1943 = vmul.f32 %v1929, 1.442695
        %v1944 = vpow.pop %v1943
        %v1945 = vmul.f32 %v1930, 1.442695
        %v1946 = vpow.pop %v1945
        %v1947 = vadd.f32 %v1932, 1.0
        %v1948 = vadd.f32 %v1934, 1.0
        %v1949 = vadd.f32 %v1936, 1.0
        %v1950 = vadd.f32 %v1938, 1.0
        %v1951 = vadd.f32 %v1940, 1.0
        %v1952 = vadd.f32 %v1942, 1.0
        %v1953 = vadd.f32 %v1944, 1.0
        %v1954 = vadd.f32 %v1946, 1.0
        %v1955 = vrcp.pop %v1947
        %v1956 = vmul.f32 1.0, %v1955
        %v1957 = vrcp.pop %v1948
        %v1958 = vmul.f32 1.0, %v1957
        %v1959 = vrcp.pop %v1949
        %v1960 = vmul.f32 1.0, %v1959
        %v1961 = vrcp.pop %v1950
        %v1962 = vmul.f32 1.0, %v1961
        %v1963 = vrcp.pop %v1951
        %v1964 = vmul.f32 1.0, %v1963
        %v1965 = vrcp.pop %v1952
        %v1966 = vmul.f32 1.0, %v1965
        %v1967 = vrcp.pop %v1953
        %v1968 = vmul.f32 1.0, %v1967
        %v1969 = vrcp.pop %v1954
        %v1970 = vmul.f32 1.0, %v1969
        %v1971 = vld [vmem:[%s224 + $0x8] sm:$0x2]
        %v1972 = vld [vmem:[%s224 + $0x14] sm:$0x2]
        %v1973 = vld [vmem:[%s224 + $0x20] sm:$0x2]
        %v1974 = vld [vmem:[%s224 + $0x2c] sm:$0x2]
        %v1975 = vld [vmem:[%s224 + $0x38] sm:$0x2]
        %v1976 = vld [vmem:[%s224 + $0x44] sm:$0x2]
        %v1977 = vld [vmem:[%s224 + $0x50] sm:$0x2]
        %v1978 = vld [vmem:[%s224 + $0x5c] sm:$0x2]
        %v1979 = vunpack.c.l.bf16 %v1971
        %v1980 = vunpack.c.l.bf16 %v1972
        %v1981 = vunpack.c.l.bf16 %v1973
        %v1982 = vunpack.c.l.bf16 %v1974
        %v1983 = vunpack.c.l.bf16 %v1975
        %v1984 = vunpack.c.l.bf16 %v1976
        %v1985 = vunpack.c.l.bf16 %v1977
        %v1986 = vunpack.c.l.bf16 %v1978
        %v1987 = vadd.f32 %v1790, %v289
        %v1989 = vrot.slane %v1987, 5
        %v1990 = vrot.slane %v1987, 6
        %v1991 = vrot.slane %v1987, 7
        %v1992 = vrot.slane %v1987, 1
        %v1993 = vrot.slane %v1987, 2
        %v1994 = vrot.slane %v1987, 3
        %v1995 = vrot.slane %v1987, 4
        %v2004 = vmul.f32 %v1868, %v1989
        %v2005 = vmul.f32 %v1870, %v1990
        %v2006 = vmul.f32 %v1872, %v1991
        %v2007 = vmul.f32 %v1874, %v1987
        %v2008 = vmul.f32 %v1876, %v1992
        %v2009 = vmul.f32 %v1878, %v1993
        %v2010 = vmul.f32 %v1880, %v1994
        %v2011 = vmul.f32 %v1882, %v1995
        %v2012 = vadd.f32 %v1979, %v2004
        %v2013 = vadd.f32 %v1980, %v2005
        %v2014 = vadd.f32 %v1981, %v2006
        %v2015 = vadd.f32 %v1982, %v2007
        %v2016 = vadd.f32 %v1983, %v2008
        %v2017 = vadd.f32 %v1984, %v2009
        %v2018 = vadd.f32 %v1985, %v2010
        %v2019 = vadd.f32 %v1986, %v2011
        %v2020 = vtanh.pop %v2012
        %v2021 = vtanh.pop %v2013
        %v2022 = vtanh.pop %v2014
        %v2023 = vtanh.pop %v2015
        %v2024 = vtanh.pop %v2016
        %v2025 = vtanh.pop %v2017
        %v2026 = vtanh.pop %v2018
        %v2027 = vtanh.pop %v2019
        %v2036 = vrot.slane %v2020, 1
        %v2037 = vrot.slane %v2021, 1
        %v2038 = vrot.slane %v2022, 1
        %v2039 = vrot.slane %v2023, 1
        %v2040 = vrot.slane %v2024, 1
        %v2041 = vrot.slane %v2025, 1
        %v2042 = vrot.slane %v2026, 1
        %v2043 = vrot.slane %v2027, 1
        %v2052 = vsub.f32 %v1658, %v2036
        %v2053 = vsub.f32 %v1659, %v2037
        %v2054 = vsub.f32 %v1660, %v2038
        %v2055 = vsub.f32 %v1661, %v2039
        %v2056 = vsub.f32 %v1662, %v2040
        %v2057 = vsub.f32 %v1663, %v2041
        %v2058 = vsub.f32 %v1664, %v2042
        %v2059 = vsub.f32 %v1665, %v2043
        %v2068 = vrot.slane %v2052, 7
        %v2069 = vrot.slane %v2053, 7
        %v2070 = vrot.slane %v2054, 7
        %v2071 = vrot.slane %v2055, 7
        %v2072 = vrot.slane %v2056, 7
        %v2073 = vrot.slane %v2057, 7
        %v2074 = vrot.slane %v2058, 7
        %v2075 = vrot.slane %v2059, 7
        %v2084 = vmul.f32 %v1956, %v2068
        %v2085 = vmul.f32 %v1958, %v2069
        %v2086 = vmul.f32 %v1960, %v2070
        %v2087 = vmul.f32 %v1962, %v2071
        %v2088 = vmul.f32 %v1964, %v2072
        %v2089 = vmul.f32 %v1966, %v2073
        %v2090 = vmul.f32 %v1968, %v2074
        %v2091 = vmul.f32 %v1970, %v2075
        %v2092 = vadd.f32 %v2020, %v2084
        %v2093 = vadd.f32 %v2021, %v2085
        %v2094 = vadd.f32 %v2022, %v2086
        %v2095 = vadd.f32 %v2023, %v2087
        %v2096 = vadd.f32 %v2024, %v2088
        %v2097 = vadd.f32 %v2025, %v2089
        %v2098 = vadd.f32 %v2026, %v2090
        %v2099 = vadd.f32 %v2027, %v2091
        %2100 = vst [vmem:[%s243] sm:$0x8] %v2092
        %2101 = vst [vmem:[%s243 + $0x8] sm:$0x8] %v2093
        %2102 = vst [vmem:[%s243 + $0x10] sm:$0x8] %v2094
        %2103 = vst [vmem:[%s243 + $0x18] sm:$0x8] %v2095
        %2104 = vst [vmem:[%s243 + $0x20] sm:$0x8] %v2096
        %2105 = vst [vmem:[%s243 + $0x28] sm:$0x8] %v2097
        %2106 = vst [vmem:[%s243 + $0x30] sm:$0x8] %v2098
        %2107 = vst [vmem:[%s243 + $0x38] sm:$0x8] %v2099
        %v2108 = vpack.c.bf16 %v2092, %v2092
        %v2109 = vpack.c.bf16 %v2093, %v2093
        %v2110 = vpack.c.bf16 %v2094, %v2094
        %v2111 = vpack.c.bf16 %v2095, %v2095
        %v2112 = vpack.c.bf16 %v2096, %v2096
        %v2113 = vpack.c.bf16 %v2097, %v2097
        %v2114 = vpack.c.bf16 %v2098, %v2098
        %v2115 = vpack.c.bf16 %v2099, %v2099
        %v2124 = vunpack.c.l.b16 %v2108
        %v2125 = vunpack.c.l.b16 %v2109
        %v2126 = vunpack.c.l.b16 %v2110
        %v2127 = vunpack.c.l.b16 %v2111
        %v2128 = vunpack.c.l.b16 %v2112
        %v2129 = vunpack.c.l.b16 %v2113
        %v2130 = vunpack.c.l.b16 %v2114
        %v2131 = vunpack.c.l.b16 %v2115
        %v2132 = vrot.slane %v2124, 3
        %v2133 = vrot.slane %v2125, 2
        %v2134 = vsel %vm744, %v2133, %v2132
        %v2135 = vrot.slane %v2126, 1
        %v2136 = vsel %vm747, %v2135, %v2134
        %v2137 = vsel %vm750, %v2127, %v2136
        %v2138 = vrot.slane %v2128, 7
        %v2139 = vsel %vm753, %v2138, %v2137
        %v2140 = vrot.slane %v2129, 6
        %v2141 = vsel %vm756, %v2140, %v2139
        %v2142 = vrot.slane %v2130, 5
        %v2143 = vsel %vm759, %v2142, %v2141
        %v2144 = vrot.slane %v2131, 4
        %v2145 = vsel %vm762, %v2144, %v2143
        %v2146 = vpack.c.b16 %v2145, %v2145
        %2148 = vmatprep.subr.bf16.mxu0 %v395
        %2149 = vmatpush1.bf16.msra.mxu0 %v394
        %2150 = vmatprep.subr.bf16.mxu0 %v392
        %2151 = vmatpush1.bf16.msra.mxu0 %v391
        %2152 = vmatprep.subr.bf16.mxu0 %v389
        %2153 = vmatpush1.bf16.msra.mxu0 %v388
        %2154 = vmatprep.subr.bf16.mxu0 %v386
        %2155 = vmatpush1.bf16.msra.mxu0 %v385
        %2156 = vmatprep.subr.bf16.mxu0 %v383
        %2157 = vmatpush1.bf16.msra.mxu0 %v382
        %2158 = vmatprep.subr.bf16.mxu0 %v380
        %2159 = vmatpush1.bf16.msra.mxu0 %v379
        %2160 = vmatprep.subr.bf16.mxu0 %v377
        %2161 = vmatpush1.bf16.msra.mxu0 %v376
        %2162 = vmatprep.subr.bf16.mxu0 %v374
        %2163 = vmatpush1.bf16.msra.mxu0 %v373
        %2164 = vmatprep.subr.bf16.mxu0 0
        %2165 = vmatpush2.bf16.msra.mxu0 0
        %2166 = vmatprep.subr.bf16.mxu0 0
        %2167 = vmatpush2.bf16.msra.mxu0 0
        %2168 = vmatprep.subr.bf16.mxu0 0
        %2169 = vmatpush2.bf16.msra.mxu0 0
        %2170 = vmatprep.subr.bf16.mxu0 0
        %2171 = vmatpush2.bf16.msra.mxu0 0
        %2172 = vmatprep.subr.bf16.mxu0 0
        %2173 = vmatpush2.bf16.msra.mxu0 0
        %2174 = vmatprep.subr.bf16.mxu0 0
        %2175 = vmatpush2.bf16.msra.mxu0 0
        %2176 = vmatprep.subr.bf16.mxu0 0
        %2177 = vmatpush2.bf16.msra.mxu0 0
        %2178 = vmatprep.subr.bf16.mxu0 0
        %2179 = vmatpush2.bf16.msra.mxu0 0
        %2180 = vmatprep.mubr.bf16.mxu0 0
        %2181 = vmatmul.mubr.bf16.gmra.mxu0 %v2146
        %v2182 = vpop.f32.mrf.mxu0
        %v2183 = vadd.f32 0.0, %v2182
        %v2184 = vpop.f32.mrf.mxu0
        %v2185 = vadd.f32 0.0, %v2184
        %v2186 = vpop.f32.mrf.mxu0
        %v2187 = vpop.f32.mrf.mxu0
        %2188 = vdwg.mxu0
        %2189 = vmatprep.subr.bf16.mxu0 0
        %2190 = vmatpush1.bf16.msra.mxu0 %v396
        %2191 = vmatprep.subr.bf16.mxu0 0
        %2192 = vmatpush1.bf16.msra.mxu0 %v393
        %2193 = vmatprep.subr.bf16.mxu0 0
        %2194 = vmatpush1.bf16.msra.mxu0 %v390
        %2195 = vmatprep.subr.bf16.mxu0 0
        %2196 = vmatpush1.bf16.msra.mxu0 %v387
        %2197 = vmatprep.subr.bf16.mxu0 0
        %2198 = vmatpush1.bf16.msra.mxu0 %v384
        %2199 = vmatprep.subr.bf16.mxu0 0
        %2200 = vmatpush1.bf16.msra.mxu0 %v381
        %2201 = vmatprep.subr.bf16.mxu0 0
        %2202 = vmatpush1.bf16.msra.mxu0 %v378
        %2203 = vmatprep.subr.bf16.mxu0 0
        %2204 = vmatpush1.bf16.msra.mxu0 %v375
        %2205 = vmatprep.subr.bf16.mxu0 0
        %2206 = vmatpush2.bf16.msra.mxu0 0
        %2207 = vmatprep.subr.bf16.mxu0 0
        %2208 = vmatpush2.bf16.msra.mxu0 0
        %2209 = vmatprep.subr.bf16.mxu0 0
        %2210 = vmatpush2.bf16.msra.mxu0 0
        %2211 = vmatprep.subr.bf16.mxu0 0
        %2212 = vmatpush2.bf16.msra.mxu0 0
        %2213 = vmatprep.subr.bf16.mxu0 0
        %2214 = vmatpush2.bf16.msra.mxu0 0
        %2215 = vmatprep.subr.bf16.mxu0 0
        %2216 = vmatpush2.bf16.msra.mxu0 0
        %2217 = vmatprep.subr.bf16.mxu0 0
        %2218 = vmatpush2.bf16.msra.mxu0 0
        %2219 = vmatprep.subr.bf16.mxu0 0
        %2220 = vmatpush2.bf16.msra.mxu0 0
        %2221 = vmatprep.mubr.bf16.mxu0 0
        %2222 = vmatmul.mubr.bf16.gmra.mxu0 %v2146
        %v2223 = vpop.f32.mrf.mxu0
        %v2224 = vadd.f32 0.0, %v2223
        %v2225 = vpop.f32.mrf.mxu0
        %v2226 = vpop.f32.mrf.mxu0
        %v2227 = vpop.f32.mrf.mxu0
        %2228 = vdwg.mxu0
        %v2229 = vld [vmem:[%s224] sm:$0x4]
        %v2230 = vld [vmem:[%s224 + $0xc] sm:$0x4]
        %v2231 = vld [vmem:[%s224 + $0x18] sm:$0x4]
        %v2232 = vld [vmem:[%s224 + $0x24] sm:$0x4]
        %v2233 = vld [vmem:[%s224 + $0x30] sm:$0x4]
        %v2234 = vld [vmem:[%s224 + $0x3c] sm:$0x4]
        %v2235 = vld [vmem:[%s224 + $0x48] sm:$0x4]
        %v2236 = vld [vmem:[%s224 + $0x54] sm:$0x4]
        %v2237 = vunpack.c.l.bf16 %v2229
        %v2238 = vunpack.c.l.bf16 %v2230
        %v2239 = vunpack.c.l.bf16 %v2231
        %v2240 = vunpack.c.l.bf16 %v2232
        %v2241 = vunpack.c.l.bf16 %v2233
        %v2242 = vunpack.c.l.bf16 %v2234
        %v2243 = vunpack.c.l.bf16 %v2235
        %v2244 = vunpack.c.l.bf16 %v2236
        %v2246 = vrot.slane %v2183, 4
        %v2247 = vrot.slane %v2183, 5
        %v2248 = vrot.slane %v2183, 6
        %v2249 = vrot.slane %v2183, 7
        %v2250 = vrot.slane %v2183, 1
        %v2251 = vrot.slane %v2183, 2
        %v2252 = vrot.slane %v2183, 3
        %v2261 = vadd.f32 %v2237, %v2246
        %v2262 = vadd.f32 %v2238, %v2247
        %v2263 = vadd.f32 %v2239, %v2248
        %v2264 = vadd.f32 %v2240, %v2249
        %v2265 = vadd.f32 %v2241, %v2183
        %v2266 = vadd.f32 %v2242, %v2250
        %v2267 = vadd.f32 %v2243, %v2251
        %v2268 = vadd.f32 %v2244, %v2252
        %v2269 = vxor.u32 %v2261, 2147483648
        %v2270 = vxor.u32 %v2262, 2147483648
        %v2271 = vxor.u32 %v2263, 2147483648
        %v2272 = vxor.u32 %v2264, 2147483648
        %v2273 = vxor.u32 %v2265, 2147483648
        %v2274 = vxor.u32 %v2266, 2147483648
        %v2275 = vxor.u32 %v2267, 2147483648
        %v2276 = vxor.u32 %v2268, 2147483648
        %v2277 = vmul.f32 %v2269, 1.442695
        %v2278 = vpow.pop %v2277
        %v2279 = vmul.f32 %v2270, 1.442695
        %v2280 = vpow.pop %v2279
        %v2281 = vmul.f32 %v2271, 1.442695
        %v2282 = vpow.pop %v2281
        %v2283 = vmul.f32 %v2272, 1.442695
        %v2284 = vpow.pop %v2283
        %v2285 = vmul.f32 %v2273, 1.442695
        %v2286 = vpow.pop %v2285
        %v2287 = vmul.f32 %v2274, 1.442695
        %v2288 = vpow.pop %v2287
        %v2289 = vmul.f32 %v2275, 1.442695
        %v2290 = vpow.pop %v2289
        %v2291 = vmul.f32 %v2276, 1.442695
        %v2292 = vpow.pop %v2291
        %v2293 = vadd.f32 %v2278, 1.0
        %v2294 = vadd.f32 %v2280, 1.0
        %v2295 = vadd.f32 %v2282, 1.0
        %v2296 = vadd.f32 %v2284, 1.0
        %v2297 = vadd.f32 %v2286, 1.0
        %v2298 = vadd.f32 %v2288, 1.0
        %v2299 = vadd.f32 %v2290, 1.0
        %v2300 = vadd.f32 %v2292, 1.0
        %v2301 = vrcp.pop %v2293
        %v2302 = vmul.f32 1.0, %v2301
        %v2303 = vrcp.pop %v2294
        %v2304 = vmul.f32 1.0, %v2303
        %v2305 = vrcp.pop %v2295
        %v2306 = vmul.f32 1.0, %v2305
        %v2307 = vrcp.pop %v2296
        %v2308 = vmul.f32 1.0, %v2307
        %v2309 = vrcp.pop %v2297
        %v2310 = vmul.f32 1.0, %v2309
        %v2311 = vrcp.pop %v2298
        %v2312 = vmul.f32 1.0, %v2311
        %v2313 = vrcp.pop %v2299
        %v2314 = vmul.f32 1.0, %v2313
        %v2315 = vrcp.pop %v2300
        %v2316 = vmul.f32 1.0, %v2315
        %v2317 = vld [vmem:[%s224 + $0x4] sm:$0x4]
        %v2318 = vld [vmem:[%s224 + $0x10] sm:$0x4]
        %v2319 = vld [vmem:[%s224 + $0x1c] sm:$0x4]
        %v2320 = vld [vmem:[%s224 + $0x28] sm:$0x4]
        %v2321 = vld [vmem:[%s224 + $0x34] sm:$0x4]
        %v2322 = vld [vmem:[%s224 + $0x40] sm:$0x4]
        %v2323 = vld [vmem:[%s224 + $0x4c] sm:$0x4]
        %v2324 = vld [vmem:[%s224 + $0x58] sm:$0x4]
        %v2325 = vunpack.c.l.bf16 %v2317
        %v2326 = vunpack.c.l.bf16 %v2318
        %v2327 = vunpack.c.l.bf16 %v2319
        %v2328 = vunpack.c.l.bf16 %v2320
        %v2329 = vunpack.c.l.bf16 %v2321
        %v2330 = vunpack.c.l.bf16 %v2322
        %v2331 = vunpack.c.l.bf16 %v2323
        %v2332 = vunpack.c.l.bf16 %v2324
        %v2334 = vrot.slane %v2185, 4
        %v2335 = vrot.slane %v2185, 5
        %v2336 = vrot.slane %v2185, 6
        %v2337 = vrot.slane %v2185, 7
        %v2338 = vrot.slane %v2185, 1
        %v2339 = vrot.slane %v2185, 2
        %v2340 = vrot.slane %v2185, 3
        %v2349 = vadd.f32 %v2325, %v2334
        %v2350 = vadd.f32 %v2326, %v2335
        %v2351 = vadd.f32 %v2327, %v2336
        %v2352 = vadd.f32 %v2328, %v2337
        %v2353 = vadd.f32 %v2329, %v2185
        %v2354 = vadd.f32 %v2330, %v2338
        %v2355 = vadd.f32 %v2331, %v2339
        %v2356 = vadd.f32 %v2332, %v2340
        %v2357 = vxor.u32 %v2349, 2147483648
        %v2358 = vxor.u32 %v2350, 2147483648
        %v2359 = vxor.u32 %v2351, 2147483648
        %v2360 = vxor.u32 %v2352, 2147483648
        %v2361 = vxor.u32 %v2353, 2147483648
        %v2362 = vxor.u32 %v2354, 2147483648
        %v2363 = vxor.u32 %v2355, 2147483648
        %v2364 = vxor.u32 %v2356, 2147483648
        %v2365 = vmul.f32 %v2357, 1.442695
        %v2366 = vpow.pop %v2365
        %v2367 = vmul.f32 %v2358, 1.442695
        %v2368 = vpow.pop %v2367
        %v2369 = vmul.f32 %v2359, 1.442695
        %v2370 = vpow.pop %v2369
        %v2371 = vmul.f32 %v2360, 1.442695
        %v2372 = vpow.pop %v2371
        %v2373 = vmul.f32 %v2361, 1.442695
        %v2374 = vpow.pop %v2373
        %v2375 = vmul.f32 %v2362, 1.442695
        %v2376 = vpow.pop %v2375
        %v2377 = vmul.f32 %v2363, 1.442695
        %v2378 = vpow.pop %v2377
        %v2379 = vmul.f32 %v2364, 1.442695
        %v2380 = vpow.pop %v2379
        %v2381 = vadd.f32 %v2366, 1.0
        %v2382 = vadd.f32 %v2368, 1.0
        %v2383 = vadd.f32 %v2370, 1.0
        %v2384 = vadd.f32 %v2372, 1.0
        %v2385 = vadd.f32 %v2374, 1.0
        %v2386 = vadd.f32 %v2376, 1.0
        %v2387 = vadd.f32 %v2378, 1.0
        %v2388 = vadd.f32 %v2380, 1.0
        %v2389 = vrcp.pop %v2381
        %v2390 = vmul.f32 1.0, %v2389
        %v2391 = vrcp.pop %v2382
        %v2392 = vmul.f32 1.0, %v2391
        %v2393 = vrcp.pop %v2383
        %v2394 = vmul.f32 1.0, %v2393
        %v2395 = vrcp.pop %v2384
        %v2396 = vmul.f32 1.0, %v2395
        %v2397 = vrcp.pop %v2385
        %v2398 = vmul.f32 1.0, %v2397
        %v2399 = vrcp.pop %v2386
        %v2400 = vmul.f32 1.0, %v2399
        %v2401 = vrcp.pop %v2387
        %v2402 = vmul.f32 1.0, %v2401
        %v2403 = vrcp.pop %v2388
        %v2404 = vmul.f32 1.0, %v2403
        %v2405 = vld [vmem:[%s224 + $0x8] sm:$0x4]
        %v2406 = vld [vmem:[%s224 + $0x14] sm:$0x4]
        %v2407 = vld [vmem:[%s224 + $0x20] sm:$0x4]
        %v2408 = vld [vmem:[%s224 + $0x2c] sm:$0x4]
        %v2409 = vld [vmem:[%s224 + $0x38] sm:$0x4]
        %v2410 = vld [vmem:[%s224 + $0x44] sm:$0x4]
        %v2411 = vld [vmem:[%s224 + $0x50] sm:$0x4]
        %v2412 = vld [vmem:[%s224 + $0x5c] sm:$0x4]
        %v2413 = vunpack.c.l.bf16 %v2405
        %v2414 = vunpack.c.l.bf16 %v2406
        %v2415 = vunpack.c.l.bf16 %v2407
        %v2416 = vunpack.c.l.bf16 %v2408
        %v2417 = vunpack.c.l.bf16 %v2409
        %v2418 = vunpack.c.l.bf16 %v2410
        %v2419 = vunpack.c.l.bf16 %v2411
        %v2420 = vunpack.c.l.bf16 %v2412
        %v2421 = vadd.f32 %v2224, %v289
        %v2423 = vrot.slane %v2421, 4
        %v2424 = vrot.slane %v2421, 5
        %v2425 = vrot.slane %v2421, 6
        %v2426 = vrot.slane %v2421, 7
        %v2427 = vrot.slane %v2421, 1
        %v2428 = vrot.slane %v2421, 2
        %v2429 = vrot.slane %v2421, 3
        %v2438 = vmul.f32 %v2302, %v2423
        %v2439 = vmul.f32 %v2304, %v2424
        %v2440 = vmul.f32 %v2306, %v2425
        %v2441 = vmul.f32 %v2308, %v2426
        %v2442 = vmul.f32 %v2310, %v2421
        %v2443 = vmul.f32 %v2312, %v2427
        %v2444 = vmul.f32 %v2314, %v2428
        %v2445 = vmul.f32 %v2316, %v2429
        %v2446 = vadd.f32 %v2413, %v2438
        %v2447 = vadd.f32 %v2414, %v2439
        %v2448 = vadd.f32 %v2415, %v2440
        %v2449 = vadd.f32 %v2416, %v2441
        %v2450 = vadd.f32 %v2417, %v2442
        %v2451 = vadd.f32 %v2418, %v2443
        %v2452 = vadd.f32 %v2419, %v2444
        %v2453 = vadd.f32 %v2420, %v2445
        %v2454 = vtanh.pop %v2446
        %v2455 = vtanh.pop %v2447
        %v2456 = vtanh.pop %v2448
        %v2457 = vtanh.pop %v2449
        %v2458 = vtanh.pop %v2450
        %v2459 = vtanh.pop %v2451
        %v2460 = vtanh.pop %v2452
        %v2461 = vtanh.pop %v2453
        %v2470 = vrot.slane %v2454, 1
        %v2471 = vrot.slane %v2455, 1
        %v2472 = vrot.slane %v2456, 1
        %v2473 = vrot.slane %v2457, 1
        %v2474 = vrot.slane %v2458, 1
        %v2475 = vrot.slane %v2459, 1
        %v2476 = vrot.slane %v2460, 1
        %v2477 = vrot.slane %v2461, 1
        %v2486 = vsub.f32 %v2092, %v2470
        %v2487 = vsub.f32 %v2093, %v2471
        %v2488 = vsub.f32 %v2094, %v2472
        %v2489 = vsub.f32 %v2095, %v2473
        %v2490 = vsub.f32 %v2096, %v2474
        %v2491 = vsub.f32 %v2097, %v2475
        %v2492 = vsub.f32 %v2098, %v2476
        %v2493 = vsub.f32 %v2099, %v2477
        %v2502 = vrot.slane %v2486, 7
        %v2503 = vrot.slane %v2487, 7
        %v2504 = vrot.slane %v2488, 7
        %v2505 = vrot.slane %v2489, 7
        %v2506 = vrot.slane %v2490, 7
        %v2507 = vrot.slane %v2491, 7
        %v2508 = vrot.slane %v2492, 7
        %v2509 = vrot.slane %v2493, 7
        %v2518 = vmul.f32 %v2390, %v2502
        %v2519 = vmul.f32 %v2392, %v2503
        %v2520 = vmul.f32 %v2394, %v2504
        %v2521 = vmul.f32 %v2396, %v2505
        %v2522 = vmul.f32 %v2398, %v2506
        %v2523 = vmul.f32 %v2400, %v2507
        %v2524 = vmul.f32 %v2402, %v2508
        %v2525 = vmul.f32 %v2404, %v2509
        %v2526 = vadd.f32 %v2454, %v2518
        %v2527 = vadd.f32 %v2455, %v2519
        %v2528 = vadd.f32 %v2456, %v2520
        %v2529 = vadd.f32 %v2457, %v2521
        %v2530 = vadd.f32 %v2458, %v2522
        %v2531 = vadd.f32 %v2459, %v2523
        %v2532 = vadd.f32 %v2460, %v2524
        %v2533 = vadd.f32 %v2461, %v2525
        %2534 = vst [vmem:[%s243] sm:$0x10] %v2526
        %2535 = vst [vmem:[%s243 + $0x8] sm:$0x10] %v2527
        %2536 = vst [vmem:[%s243 + $0x10] sm:$0x10] %v2528
        %2537 = vst [vmem:[%s243 + $0x18] sm:$0x10] %v2529
        %2538 = vst [vmem:[%s243 + $0x20] sm:$0x10] %v2530
        %2539 = vst [vmem:[%s243 + $0x28] sm:$0x10] %v2531
        %2540 = vst [vmem:[%s243 + $0x30] sm:$0x10] %v2532
        %2541 = vst [vmem:[%s243 + $0x38] sm:$0x10] %v2533
        %v2542 = vpack.c.bf16 %v2526, %v2526
        %v2543 = vpack.c.bf16 %v2527, %v2527
        %v2544 = vpack.c.bf16 %v2528, %v2528
        %v2545 = vpack.c.bf16 %v2529, %v2529
        %v2546 = vpack.c.bf16 %v2530, %v2530
        %v2547 = vpack.c.bf16 %v2531, %v2531
        %v2548 = vpack.c.bf16 %v2532, %v2532
        %v2549 = vpack.c.bf16 %v2533, %v2533
        %v2558 = vunpack.c.l.b16 %v2542
        %v2559 = vunpack.c.l.b16 %v2543
        %v2560 = vunpack.c.l.b16 %v2544
        %v2561 = vunpack.c.l.b16 %v2545
        %v2562 = vunpack.c.l.b16 %v2546
        %v2563 = vunpack.c.l.b16 %v2547
        %v2564 = vunpack.c.l.b16 %v2548
        %v2565 = vunpack.c.l.b16 %v2549
        %v2566 = vrot.slane %v2558, 4
        %v2567 = vrot.slane %v2559, 3
        %v2568 = vsel %vm744, %v2567, %v2566
        %v2569 = vrot.slane %v2560, 2
        %v2570 = vsel %vm747, %v2569, %v2568
        %v2571 = vrot.slane %v2561, 1
        %v2572 = vsel %vm750, %v2571, %v2570
        %v2573 = vsel %vm753, %v2562, %v2572
        %v2574 = vrot.slane %v2563, 7
        %v2575 = vsel %vm756, %v2574, %v2573
        %v2576 = vrot.slane %v2564, 6
        %v2577 = vsel %vm759, %v2576, %v2575
        %v2578 = vrot.slane %v2565, 5
        %v2579 = vsel %vm762, %v2578, %v2577
        %v2580 = vpack.c.b16 %v2579, %v2579
        %2582 = vmatprep.subr.bf16.mxu0 %v395
        %2583 = vmatpush1.bf16.msra.mxu0 %v394
        %2584 = vmatprep.subr.bf16.mxu0 %v392
        %2585 = vmatpush1.bf16.msra.mxu0 %v391
        %2586 = vmatprep.subr.bf16.mxu0 %v389
        %2587 = vmatpush1.bf16.msra.mxu0 %v388
        %2588 = vmatprep.subr.bf16.mxu0 %v386
        %2589 = vmatpush1.bf16.msra.mxu0 %v385
        %2590 = vmatprep.subr.bf16.mxu0 %v383
        %2591 = vmatpush1.bf16.msra.mxu0 %v382
        %2592 = vmatprep.subr.bf16.mxu0 %v380
        %2593 = vmatpush1.bf16.msra.mxu0 %v379
        %2594 = vmatprep.subr.bf16.mxu0 %v377
        %2595 = vmatpush1.bf16.msra.mxu0 %v376
        %2596 = vmatprep.subr.bf16.mxu0 %v374
        %2597 = vmatpush1.bf16.msra.mxu0 %v373
        %2598 = vmatprep.subr.bf16.mxu0 0
        %2599 = vmatpush2.bf16.msra.mxu0 0
        %2600 = vmatprep.subr.bf16.mxu0 0
        %2601 = vmatpush2.bf16.msra.mxu0 0
        %2602 = vmatprep.subr.bf16.mxu0 0
        %2603 = vmatpush2.bf16.msra.mxu0 0
        %2604 = vmatprep.subr.bf16.mxu0 0
        %2605 = vmatpush2.bf16.msra.mxu0 0
        %2606 = vmatprep.subr.bf16.mxu0 0
        %2607 = vmatpush2.bf16.msra.mxu0 0
        %2608 = vmatprep.subr.bf16.mxu0 0
        %2609 = vmatpush2.bf16.msra.mxu0 0
        %2610 = vmatprep.subr.bf16.mxu0 0
        %2611 = vmatpush2.bf16.msra.mxu0 0
        %2612 = vmatprep.subr.bf16.mxu0 0
        %2613 = vmatpush2.bf16.msra.mxu0 0
        %2614 = vmatprep.mubr.bf16.mxu0 0
        %2615 = vmatmul.mubr.bf16.gmra.mxu0 %v2580
        %v2616 = vpop.f32.mrf.mxu0
        %v2617 = vadd.f32 0.0, %v2616
        %v2618 = vpop.f32.mrf.mxu0
        %v2619 = vadd.f32 0.0, %v2618
        %v2620 = vpop.f32.mrf.mxu0
        %v2621 = vpop.f32.mrf.mxu0
        %2622 = vdwg.mxu0
        %2623 = vmatprep.subr.bf16.mxu0 0
        %2624 = vmatpush1.bf16.msra.mxu0 %v396
        %2625 = vmatprep.subr.bf16.mxu0 0
        %2626 = vmatpush1.bf16.msra.mxu0 %v393
        %2627 = vmatprep.subr.bf16.mxu0 0
        %2628 = vmatpush1.bf16.msra.mxu0 %v390
        %2629 = vmatprep.subr.bf16.mxu0 0
        %2630 = vmatpush1.bf16.msra.mxu0 %v387
        %2631 = vmatprep.subr.bf16.mxu0 0
        %2632 = vmatpush1.bf16.msra.mxu0 %v384
        %2633 = vmatprep.subr.bf16.mxu0 0
        %2634 = vmatpush1.bf16.msra.mxu0 %v381
        %2635 = vmatprep.subr.bf16.mxu0 0
        %2636 = vmatpush1.bf16.msra.mxu0 %v378
        %2637 = vmatprep.subr.bf16.mxu0 0
        %2638 = vmatpush1.bf16.msra.mxu0 %v375
        %2639 = vmatprep.subr.bf16.mxu0 0
        %2640 = vmatpush2.bf16.msra.mxu0 0
        %2641 = vmatprep.subr.bf16.mxu0 0
        %2642 = vmatpush2.bf16.msra.mxu0 0
        %2643 = vmatprep.subr.bf16.mxu0 0
        %2644 = vmatpush2.bf16.msra.mxu0 0
        %2645 = vmatprep.subr.bf16.mxu0 0
        %2646 = vmatpush2.bf16.msra.mxu0 0
        %2647 = vmatprep.subr.bf16.mxu0 0
        %2648 = vmatpush2.bf16.msra.mxu0 0
        %2649 = vmatprep.subr.bf16.mxu0 0
        %2650 = vmatpush2.bf16.msra.mxu0 0
        %2651 = vmatprep.subr.bf16.mxu0 0
        %2652 = vmatpush2.bf16.msra.mxu0 0
        %2653 = vmatprep.subr.bf16.mxu0 0
        %2654 = vmatpush2.bf16.msra.mxu0 0
        %2655 = vmatprep.mubr.bf16.mxu0 0
        %2656 = vmatmul.mubr.bf16.gmra.mxu0 %v2580
        %v2657 = vpop.f32.mrf.mxu0
        %v2658 = vadd.f32 0.0, %v2657
        %v2659 = vpop.f32.mrf.mxu0
        %v2660 = vpop.f32.mrf.mxu0
        %v2661 = vpop.f32.mrf.mxu0
        %2662 = vdwg.mxu0
        %v2663 = vld [vmem:[%s224] sm:$0x4]
        %v2664 = vld [vmem:[%s224 + $0xc] sm:$0x4]
        %v2665 = vld [vmem:[%s224 + $0x18] sm:$0x4]
        %v2666 = vld [vmem:[%s224 + $0x24] sm:$0x4]
        %v2667 = vld [vmem:[%s224 + $0x30] sm:$0x4]
        %v2668 = vld [vmem:[%s224 + $0x3c] sm:$0x4]
        %v2669 = vld [vmem:[%s224 + $0x48] sm:$0x4]
        %v2670 = vld [vmem:[%s224 + $0x54] sm:$0x4]
        %v2671 = vunpack.c.l.bf16 %v2663
        %v2672 = vunpack.c.l.bf16 %v2664
        %v2673 = vunpack.c.l.bf16 %v2665
        %v2674 = vunpack.c.l.bf16 %v2666
        %v2675 = vunpack.c.l.bf16 %v2667
        %v2676 = vunpack.c.l.bf16 %v2668
        %v2677 = vunpack.c.l.bf16 %v2669
        %v2678 = vunpack.c.l.bf16 %v2670
        %v2680 = vrot.slane %v2617, 3
        %v2681 = vrot.slane %v2617, 4
        %v2682 = vrot.slane %v2617, 5
        %v2683 = vrot.slane %v2617, 6
        %v2684 = vrot.slane %v2617, 7
        %v2685 = vrot.slane %v2617, 1
        %v2686 = vrot.slane %v2617, 2
        %v2695 = vadd.f32 %v2671, %v2680
        %v2696 = vadd.f32 %v2672, %v2681
        %v2697 = vadd.f32 %v2673, %v2682
        %v2698 = vadd.f32 %v2674, %v2683
        %v2699 = vadd.f32 %v2675, %v2684
        %v2700 = vadd.f32 %v2676, %v2617
        %v2701 = vadd.f32 %v2677, %v2685
        %v2702 = vadd.f32 %v2678, %v2686
        %v2703 = vxor.u32 %v2695, 2147483648
        %v2704 = vxor.u32 %v2696, 2147483648
        %v2705 = vxor.u32 %v2697, 2147483648
        %v2706 = vxor.u32 %v2698, 2147483648
        %v2707 = vxor.u32 %v2699, 2147483648
        %v2708 = vxor.u32 %v2700, 2147483648
        %v2709 = vxor.u32 %v2701, 2147483648
        %v2710 = vxor.u32 %v2702, 2147483648
        %v2711 = vmul.f32 %v2703, 1.442695
        %v2712 = vpow.pop %v2711
        %v2713 = vmul.f32 %v2704, 1.442695
        %v2714 = vpow.pop %v2713
        %v2715 = vmul.f32 %v2705, 1.442695
        %v2716 = vpow.pop %v2715
        %v2717 = vmul.f32 %v2706, 1.442695
        %v2718 = vpow.pop %v2717
        %v2719 = vmul.f32 %v2707, 1.442695
        %v2720 = vpow.pop %v2719
        %v2721 = vmul.f32 %v2708, 1.442695
        %v2722 = vpow.pop %v2721
        %v2723 = vmul.f32 %v2709, 1.442695
        %v2724 = vpow.pop %v2723
        %v2725 = vmul.f32 %v2710, 1.442695
        %v2726 = vpow.pop %v2725
        %v2727 = vadd.f32 %v2712, 1.0
        %v2728 = vadd.f32 %v2714, 1.0
        %v2729 = vadd.f32 %v2716, 1.0
        %v2730 = vadd.f32 %v2718, 1.0
        %v2731 = vadd.f32 %v2720, 1.0
        %v2732 = vadd.f32 %v2722, 1.0
        %v2733 = vadd.f32 %v2724, 1.0
        %v2734 = vadd.f32 %v2726, 1.0
        %v2735 = vrcp.pop %v2727
        %v2736 = vmul.f32 1.0, %v2735
        %v2737 = vrcp.pop %v2728
        %v2738 = vmul.f32 1.0, %v2737
        %v2739 = vrcp.pop %v2729
        %v2740 = vmul.f32 1.0, %v2739
        %v2741 = vrcp.pop %v2730
        %v2742 = vmul.f32 1.0, %v2741
        %v2743 = vrcp.pop %v2731
        %v2744 = vmul.f32 1.0, %v2743
        %v2745 = vrcp.pop %v2732
        %v2746 = vmul.f32 1.0, %v2745
        %v2747 = vrcp.pop %v2733
        %v2748 = vmul.f32 1.0, %v2747
        %v2749 = vrcp.pop %v2734
        %v2750 = vmul.f32 1.0, %v2749
        %v2751 = vld [vmem:[%s224 + $0x4] sm:$0x4]
        %v2752 = vld [vmem:[%s224 + $0x10] sm:$0x4]
        %v2753 = vld [vmem:[%s224 + $0x1c] sm:$0x4]
        %v2754 = vld [vmem:[%s224 + $0x28] sm:$0x4]
        %v2755 = vld [vmem:[%s224 + $0x34] sm:$0x4]
        %v2756 = vld [vmem:[%s224 + $0x40] sm:$0x4]
        %v2757 = vld [vmem:[%s224 + $0x4c] sm:$0x4]
        %v2758 = vld [vmem:[%s224 + $0x58] sm:$0x4]
        %v2759 = vunpack.c.l.bf16 %v2751
        %v2760 = vunpack.c.l.bf16 %v2752
        %v2761 = vunpack.c.l.bf16 %v2753
        %v2762 = vunpack.c.l.bf16 %v2754
        %v2763 = vunpack.c.l.bf16 %v2755
        %v2764 = vunpack.c.l.bf16 %v2756
        %v2765 = vunpack.c.l.bf16 %v2757
        %v2766 = vunpack.c.l.bf16 %v2758
        %v2768 = vrot.slane %v2619, 3
        %v2769 = vrot.slane %v2619, 4
        %v2770 = vrot.slane %v2619, 5
        %v2771 = vrot.slane %v2619, 6
        %v2772 = vrot.slane %v2619, 7
        %v2773 = vrot.slane %v2619, 1
        %v2774 = vrot.slane %v2619, 2
        %v2783 = vadd.f32 %v2759, %v2768
        %v2784 = vadd.f32 %v2760, %v2769
        %v2785 = vadd.f32 %v2761, %v2770
        %v2786 = vadd.f32 %v2762, %v2771
        %v2787 = vadd.f32 %v2763, %v2772
        %v2788 = vadd.f32 %v2764, %v2619
        %v2789 = vadd.f32 %v2765, %v2773
        %v2790 = vadd.f32 %v2766, %v2774
        %v2791 = vxor.u32 %v2783, 2147483648
        %v2792 = vxor.u32 %v2784, 2147483648
        %v2793 = vxor.u32 %v2785, 2147483648
        %v2794 = vxor.u32 %v2786, 2147483648
        %v2795 = vxor.u32 %v2787, 2147483648
        %v2796 = vxor.u32 %v2788, 2147483648
        %v2797 = vxor.u32 %v2789, 2147483648
        %v2798 = vxor.u32 %v2790, 2147483648
        %v2799 = vmul.f32 %v2791, 1.442695
        %v2800 = vpow.pop %v2799
        %v2801 = vmul.f32 %v2792, 1.442695
        %v2802 = vpow.pop %v2801
        %v2803 = vmul.f32 %v2793, 1.442695
        %v2804 = vpow.pop %v2803
        %v2805 = vmul.f32 %v2794, 1.442695
        %v2806 = vpow.pop %v2805
        %v2807 = vmul.f32 %v2795, 1.442695
        %v2808 = vpow.pop %v2807
        %v2809 = vmul.f32 %v2796, 1.442695
        %v2810 = vpow.pop %v2809
        %v2811 = vmul.f32 %v2797, 1.442695
        %v2812 = vpow.pop %v2811
        %v2813 = vmul.f32 %v2798, 1.442695
        %v2814 = vpow.pop %v2813
        %v2815 = vadd.f32 %v2800, 1.0
        %v2816 = vadd.f32 %v2802, 1.0
        %v2817 = vadd.f32 %v2804, 1.0
        %v2818 = vadd.f32 %v2806, 1.0
        %v2819 = vadd.f32 %v2808, 1.0
        %v2820 = vadd.f32 %v2810, 1.0
        %v2821 = vadd.f32 %v2812, 1.0
        %v2822 = vadd.f32 %v2814, 1.0
        %v2823 = vrcp.pop %v2815
        %v2824 = vmul.f32 1.0, %v2823
        %v2825 = vrcp.pop %v2816
        %v2826 = vmul.f32 1.0, %v2825
        %v2827 = vrcp.pop %v2817
        %v2828 = vmul.f32 1.0, %v2827
        %v2829 = vrcp.pop %v2818
        %v2830 = vmul.f32 1.0, %v2829
        %v2831 = vrcp.pop %v2819
        %v2832 = vmul.f32 1.0, %v2831
        %v2833 = vrcp.pop %v2820
        %v2834 = vmul.f32 1.0, %v2833
        %v2835 = vrcp.pop %v2821
        %v2836 = vmul.f32 1.0, %v2835
        %v2837 = vrcp.pop %v2822
        %v2838 = vmul.f32 1.0, %v2837
        %v2839 = vld [vmem:[%s224 + $0x8] sm:$0x4]
        %v2840 = vld [vmem:[%s224 + $0x14] sm:$0x4]
        %v2841 = vld [vmem:[%s224 + $0x20] sm:$0x4]
        %v2842 = vld [vmem:[%s224 + $0x2c] sm:$0x4]
        %v2843 = vld [vmem:[%s224 + $0x38] sm:$0x4]
        %v2844 = vld [vmem:[%s224 + $0x44] sm:$0x4]
        %v2845 = vld [vmem:[%s224 + $0x50] sm:$0x4]
        %v2846 = vld [vmem:[%s224 + $0x5c] sm:$0x4]
        %v2847 = vunpack.c.l.bf16 %v2839
        %v2848 = vunpack.c.l.bf16 %v2840
        %v2849 = vunpack.c.l.bf16 %v2841
        %v2850 = vunpack.c.l.bf16 %v2842
        %v2851 = vunpack.c.l.bf16 %v2843
        %v2852 = vunpack.c.l.bf16 %v2844
        %v2853 = vunpack.c.l.bf16 %v2845
        %v2854 = vunpack.c.l.bf16 %v2846
        %v2855 = vadd.f32 %v2658, %v289
        %v2857 = vrot.slane %v2855, 3
        %v2858 = vrot.slane %v2855, 4
        %v2859 = vrot.slane %v2855, 5
        %v2860 = vrot.slane %v2855, 6
        %v2861 = vrot.slane %v2855, 7
        %v2862 = vrot.slane %v2855, 1
        %v2863 = vrot.slane %v2855, 2
        %v2872 = vmul.f32 %v2736, %v2857
        %v2873 = vmul.f32 %v2738, %v2858
        %v2874 = vmul.f32 %v2740, %v2859
        %v2875 = vmul.f32 %v2742, %v2860
        %v2876 = vmul.f32 %v2744, %v2861
        %v2877 = vmul.f32 %v2746, %v2855
        %v2878 = vmul.f32 %v2748, %v2862
        %v2879 = vmul.f32 %v2750, %v2863
        %v2880 = vadd.f32 %v2847, %v2872
        %v2881 = vadd.f32 %v2848, %v2873
        %v2882 = vadd.f32 %v2849, %v2874
        %v2883 = vadd.f32 %v2850, %v2875
        %v2884 = vadd.f32 %v2851, %v2876
        %v2885 = vadd.f32 %v2852, %v2877
        %v2886 = vadd.f32 %v2853, %v2878
        %v2887 = vadd.f32 %v2854, %v2879
        %v2888 = vtanh.pop %v2880
        %v2889 = vtanh.pop %v2881
        %v2890 = vtanh.pop %v2882
        %v2891 = vtanh.pop %v2883
        %v2892 = vtanh.pop %v2884
        %v2893 = vtanh.pop %v2885
        %v2894 = vtanh.pop %v2886
        %v2895 = vtanh.pop %v2887
        %v2904 = vrot.slane %v2888, 1
        %v2905 = vrot.slane %v2889, 1
        %v2906 = vrot.slane %v2890, 1
        %v2907 = vrot.slane %v2891, 1
        %v2908 = vrot.slane %v2892, 1
        %v2909 = vrot.slane %v2893, 1
        %v2910 = vrot.slane %v2894, 1
        %v2911 = vrot.slane %v2895, 1
        %v2920 = vsub.f32 %v2526, %v2904
        %v2921 = vsub.f32 %v2527, %v2905
        %v2922 = vsub.f32 %v2528, %v2906
        %v2923 = vsub.f32 %v2529, %v2907
        %v2924 = vsub.f32 %v2530, %v2908
        %v2925 = vsub.f32 %v2531, %v2909
        %v2926 = vsub.f32 %v2532, %v2910
        %v2927 = vsub.f32 %v2533, %v2911
        %v2936 = vrot.slane %v2920, 7
        %v2937 = vrot.slane %v2921, 7
        %v2938 = vrot.slane %v2922, 7
        %v2939 = vrot.slane %v2923, 7
        %v2940 = vrot.slane %v2924, 7
        %v2941 = vrot.slane %v2925, 7
        %v2942 = vrot.slane %v2926, 7
        %v2943 = vrot.slane %v2927, 7
        %v2952 = vmul.f32 %v2824, %v2936
        %v2953 = vmul.f32 %v2826, %v2937
        %v2954 = vmul.f32 %v2828, %v2938
        %v2955 = vmul.f32 %v2830, %v2939
        %v2956 = vmul.f32 %v2832, %v2940
        %v2957 = vmul.f32 %v2834, %v2941
        %v2958 = vmul.f32 %v2836, %v2942
        %v2959 = vmul.f32 %v2838, %v2943
        %v2960 = vadd.f32 %v2888, %v2952
        %v2961 = vadd.f32 %v2889, %v2953
        %v2962 = vadd.f32 %v2890, %v2954
        %v2963 = vadd.f32 %v2891, %v2955
        %v2964 = vadd.f32 %v2892, %v2956
        %v2965 = vadd.f32 %v2893, %v2957
        %v2966 = vadd.f32 %v2894, %v2958
        %v2967 = vadd.f32 %v2895, %v2959
        %2968 = vst [vmem:[%s243] sm:$0x20] %v2960
        %2969 = vst [vmem:[%s243 + $0x8] sm:$0x20] %v2961
        %2970 = vst [vmem:[%s243 + $0x10] sm:$0x20] %v2962
        %2971 = vst [vmem:[%s243 + $0x18] sm:$0x20] %v2963
        %2972 = vst [vmem:[%s243 + $0x20] sm:$0x20] %v2964
        %2973 = vst [vmem:[%s243 + $0x28] sm:$0x20] %v2965
        %2974 = vst [vmem:[%s243 + $0x30] sm:$0x20] %v2966
        %2975 = vst [vmem:[%s243 + $0x38] sm:$0x20] %v2967
        %v2976 = vpack.c.bf16 %v2960, %v2960
        %v2977 = vpack.c.bf16 %v2961, %v2961
        %v2978 = vpack.c.bf16 %v2962, %v2962
        %v2979 = vpack.c.bf16 %v2963, %v2963
        %v2980 = vpack.c.bf16 %v2964, %v2964
        %v2981 = vpack.c.bf16 %v2965, %v2965
        %v2982 = vpack.c.bf16 %v2966, %v2966
        %v2983 = vpack.c.bf16 %v2967, %v2967
        %v2992 = vunpack.c.l.b16 %v2976
        %v2993 = vunpack.c.l.b16 %v2977
        %v2994 = vunpack.c.l.b16 %v2978
        %v2995 = vunpack.c.l.b16 %v2979
        %v2996 = vunpack.c.l.b16 %v2980
        %v2997 = vunpack.c.l.b16 %v2981
        %v2998 = vunpack.c.l.b16 %v2982
        %v2999 = vunpack.c.l.b16 %v2983
        %v3000 = vrot.slane %v2992, 5
        %v3001 = vrot.slane %v2993, 4
        %v3002 = vsel %vm744, %v3001, %v3000
        %v3003 = vrot.slane %v2994, 3
        %v3004 = vsel %vm747, %v3003, %v3002
        %v3005 = vrot.slane %v2995, 2
        %v3006 = vsel %vm750, %v3005, %v3004
        %v3007 = vrot.slane %v2996, 1
        %v3008 = vsel %vm753, %v3007, %v3006
        %v3009 = vsel %vm756, %v2997, %v3008
        %v3010 = vrot.slane %v2998, 7
        %v3011 = vsel %vm759, %v3010, %v3009
        %v3012 = vrot.slane %v2999, 6
        %v3013 = vsel %vm762, %v3012, %v3011
        %v3014 = vpack.c.b16 %v3013, %v3013
        %3016 = vmatprep.subr.bf16.mxu0 %v395
        %3017 = vmatpush1.bf16.msra.mxu0 %v394
        %3018 = vmatprep.subr.bf16.mxu0 %v392
        %3019 = vmatpush1.bf16.msra.mxu0 %v391
        %3020 = vmatprep.subr.bf16.mxu0 %v389
        %3021 = vmatpush1.bf16.msra.mxu0 %v388
        %3022 = vmatprep.subr.bf16.mxu0 %v386
        %3023 = vmatpush1.bf16.msra.mxu0 %v385
        %3024 = vmatprep.subr.bf16.mxu0 %v383
        %3025 = vmatpush1.bf16.msra.mxu0 %v382
        %3026 = vmatprep.subr.bf16.mxu0 %v380
        %3027 = vmatpush1.bf16.msra.mxu0 %v379
        %3028 = vmatprep.subr.bf16.mxu0 %v377
        %3029 = vmatpush1.bf16.msra.mxu0 %v376
        %3030 = vmatprep.subr.bf16.mxu0 %v374
        %3031 = vmatpush1.bf16.msra.mxu0 %v373
        %3032 = vmatprep.subr.bf16.mxu0 0
        %3033 = vmatpush2.bf16.msra.mxu0 0
        %3034 = vmatprep.subr.bf16.mxu0 0
        %3035 = vmatpush2.bf16.msra.mxu0 0
        %3036 = vmatprep.subr.bf16.mxu0 0
        %3037 = vmatpush2.bf16.msra.mxu0 0
        %3038 = vmatprep.subr.bf16.mxu0 0
        %3039 = vmatpush2.bf16.msra.mxu0 0
        %3040 = vmatprep.subr.bf16.mxu0 0
        %3041 = vmatpush2.bf16.msra.mxu0 0
        %3042 = vmatprep.subr.bf16.mxu0 0
        %3043 = vmatpush2.bf16.msra.mxu0 0
        %3044 = vmatprep.subr.bf16.mxu0 0
        %3045 = vmatpush2.bf16.msra.mxu0 0
        %3046 = vmatprep.subr.bf16.mxu0 0
        %3047 = vmatpush2.bf16.msra.mxu0 0
        %3048 = vmatprep.mubr.bf16.mxu0 0
        %3049 = vmatmul.mubr.bf16.gmra.mxu0 %v3014
        %v3050 = vpop.f32.mrf.mxu0
        %v3051 = vadd.f32 0.0, %v3050
        %v3052 = vpop.f32.mrf.mxu0
        %v3053 = vadd.f32 0.0, %v3052
        %v3054 = vpop.f32.mrf.mxu0
        %v3055 = vpop.f32.mrf.mxu0
        %3056 = vdwg.mxu0
        %3057 = vmatprep.subr.bf16.mxu0 0
        %3058 = vmatpush1.bf16.msra.mxu0 %v396
        %3059 = vmatprep.subr.bf16.mxu0 0
        %3060 = vmatpush1.bf16.msra.mxu0 %v393
        %3061 = vmatprep.subr.bf16.mxu0 0
        %3062 = vmatpush1.bf16.msra.mxu0 %v390
        %3063 = vmatprep.subr.bf16.mxu0 0
        %3064 = vmatpush1.bf16.msra.mxu0 %v387
        %3065 = vmatprep.subr.bf16.mxu0 0
        %3066 = vmatpush1.bf16.msra.mxu0 %v384
        %3067 = vmatprep.subr.bf16.mxu0 0
        %3068 = vmatpush1.bf16.msra.mxu0 %v381
        %3069 = vmatprep.subr.bf16.mxu0 0
        %3070 = vmatpush1.bf16.msra.mxu0 %v378
        %3071 = vmatprep.subr.bf16.mxu0 0
        %3072 = vmatpush1.bf16.msra.mxu0 %v375
        %3073 = vmatprep.subr.bf16.mxu0 0
        %3074 = vmatpush2.bf16.msra.mxu0 0
        %3075 = vmatprep.subr.bf16.mxu0 0
        %3076 = vmatpush2.bf16.msra.mxu0 0
        %3077 = vmatprep.subr.bf16.mxu0 0
        %3078 = vmatpush2.bf16.msra.mxu0 0
        %3079 = vmatprep.subr.bf16.mxu0 0
        %3080 = vmatpush2.bf16.msra.mxu0 0
        %3081 = vmatprep.subr.bf16.mxu0 0
        %3082 = vmatpush2.bf16.msra.mxu0 0
        %3083 = vmatprep.subr.bf16.mxu0 0
        %3084 = vmatpush2.bf16.msra.mxu0 0
        %3085 = vmatprep.subr.bf16.mxu0 0
        %3086 = vmatpush2.bf16.msra.mxu0 0
        %3087 = vmatprep.subr.bf16.mxu0 0
        %3088 = vmatpush2.bf16.msra.mxu0 0
        %3089 = vmatprep.mubr.bf16.mxu0 0
        %3090 = vmatmul.mubr.bf16.gmra.mxu0 %v3014
        %v3091 = vpop.f32.mrf.mxu0
        %v3092 = vadd.f32 0.0, %v3091
        %v3093 = vpop.f32.mrf.mxu0
        %v3094 = vpop.f32.mrf.mxu0
        %v3095 = vpop.f32.mrf.mxu0
        %3096 = vdwg.mxu0
        %v3097 = vld [vmem:[%s224] sm:$0x8]
        %v3098 = vld [vmem:[%s224 + $0xc] sm:$0x8]
        %v3099 = vld [vmem:[%s224 + $0x18] sm:$0x8]
        %v3100 = vld [vmem:[%s224 + $0x24] sm:$0x8]
        %v3101 = vld [vmem:[%s224 + $0x30] sm:$0x8]
        %v3102 = vld [vmem:[%s224 + $0x3c] sm:$0x8]
        %v3103 = vld [vmem:[%s224 + $0x48] sm:$0x8]
        %v3104 = vld [vmem:[%s224 + $0x54] sm:$0x8]
        %v3105 = vunpack.c.l.bf16 %v3097
        %v3106 = vunpack.c.l.bf16 %v3098
        %v3107 = vunpack.c.l.bf16 %v3099
        %v3108 = vunpack.c.l.bf16 %v3100
        %v3109 = vunpack.c.l.bf16 %v3101
        %v3110 = vunpack.c.l.bf16 %v3102
        %v3111 = vunpack.c.l.bf16 %v3103
        %v3112 = vunpack.c.l.bf16 %v3104
        %v3114 = vrot.slane %v3051, 2
        %v3115 = vrot.slane %v3051, 3
        %v3116 = vrot.slane %v3051, 4
        %v3117 = vrot.slane %v3051, 5
        %v3118 = vrot.slane %v3051, 6
        %v3119 = vrot.slane %v3051, 7
        %v3120 = vrot.slane %v3051, 1
        %v3129 = vadd.f32 %v3105, %v3114
        %v3130 = vadd.f32 %v3106, %v3115
        %v3131 = vadd.f32 %v3107, %v3116
        %v3132 = vadd.f32 %v3108, %v3117
        %v3133 = vadd.f32 %v3109, %v3118
        %v3134 = vadd.f32 %v3110, %v3119
        %v3135 = vadd.f32 %v3111, %v3051
        %v3136 = vadd.f32 %v3112, %v3120
        %v3137 = vxor.u32 %v3129, 2147483648
        %v3138 = vxor.u32 %v3130, 2147483648
        %v3139 = vxor.u32 %v3131, 2147483648
        %v3140 = vxor.u32 %v3132, 2147483648
        %v3141 = vxor.u32 %v3133, 2147483648
        %v3142 = vxor.u32 %v3134, 2147483648
        %v3143 = vxor.u32 %v3135, 2147483648
        %v3144 = vxor.u32 %v3136, 2147483648
        %v3145 = vmul.f32 %v3137, 1.442695
        %v3146 = vpow.pop %v3145
        %v3147 = vmul.f32 %v3138, 1.442695
        %v3148 = vpow.pop %v3147
        %v3149 = vmul.f32 %v3139, 1.442695
        %v3150 = vpow.pop %v3149
        %v3151 = vmul.f32 %v3140, 1.442695
        %v3152 = vpow.pop %v3151
        %v3153 = vmul.f32 %v3141, 1.442695
        %v3154 = vpow.pop %v3153
        %v3155 = vmul.f32 %v3142, 1.442695
        %v3156 = vpow.pop %v3155
        %v3157 = vmul.f32 %v3143, 1.442695
        %v3158 = vpow.pop %v3157
        %v3159 = vmul.f32 %v3144, 1.442695
        %v3160 = vpow.pop %v3159
        %v3161 = vadd.f32 %v3146, 1.0
        %v3162 = vadd.f32 %v3148, 1.0
        %v3163 = vadd.f32 %v3150, 1.0
        %v3164 = vadd.f32 %v3152, 1.0
        %v3165 = vadd.f32 %v3154, 1.0
        %v3166 = vadd.f32 %v3156, 1.0
        %v3167 = vadd.f32 %v3158, 1.0
        %v3168 = vadd.f32 %v3160, 1.0
        %v3169 = vrcp.pop %v3161
        %v3170 = vmul.f32 1.0, %v3169
        %v3171 = vrcp.pop %v3162
        %v3172 = vmul.f32 1.0, %v3171
        %v3173 = vrcp.pop %v3163
        %v3174 = vmul.f32 1.0, %v3173
        %v3175 = vrcp.pop %v3164
        %v3176 = vmul.f32 1.0, %v3175
        %v3177 = vrcp.pop %v3165
        %v3178 = vmul.f32 1.0, %v3177
        %v3179 = vrcp.pop %v3166
        %v3180 = vmul.f32 1.0, %v3179
        %v3181 = vrcp.pop %v3167
        %v3182 = vmul.f32 1.0, %v3181
        %v3183 = vrcp.pop %v3168
        %v3184 = vmul.f32 1.0, %v3183
        %v3185 = vld [vmem:[%s224 + $0x4] sm:$0x8]
        %v3186 = vld [vmem:[%s224 + $0x10] sm:$0x8]
        %v3187 = vld [vmem:[%s224 + $0x1c] sm:$0x8]
        %v3188 = vld [vmem:[%s224 + $0x28] sm:$0x8]
        %v3189 = vld [vmem:[%s224 + $0x34] sm:$0x8]
        %v3190 = vld [vmem:[%s224 + $0x40] sm:$0x8]
        %v3191 = vld [vmem:[%s224 + $0x4c] sm:$0x8]
        %v3192 = vld [vmem:[%s224 + $0x58] sm:$0x8]
        %v3193 = vunpack.c.l.bf16 %v3185
        %v3194 = vunpack.c.l.bf16 %v3186
        %v3195 = vunpack.c.l.bf16 %v3187
        %v3196 = vunpack.c.l.bf16 %v3188
        %v3197 = vunpack.c.l.bf16 %v3189
        %v3198 = vunpack.c.l.bf16 %v3190
        %v3199 = vunpack.c.l.bf16 %v3191
        %v3200 = vunpack.c.l.bf16 %v3192
        %v3202 = vrot.slane %v3053, 2
        %v3203 = vrot.slane %v3053, 3
        %v3204 = vrot.slane %v3053, 4
        %v3205 = vrot.slane %v3053, 5
        %v3206 = vrot.slane %v3053, 6
        %v3207 = vrot.slane %v3053, 7
        %v3208 = vrot.slane %v3053, 1
        %v3217 = vadd.f32 %v3193, %v3202
        %v3218 = vadd.f32 %v3194, %v3203
        %v3219 = vadd.f32 %v3195, %v3204
        %v3220 = vadd.f32 %v3196, %v3205
        %v3221 = vadd.f32 %v3197, %v3206
        %v3222 = vadd.f32 %v3198, %v3207
        %v3223 = vadd.f32 %v3199, %v3053
        %v3224 = vadd.f32 %v3200, %v3208
        %v3225 = vxor.u32 %v3217, 2147483648
        %v3226 = vxor.u32 %v3218, 2147483648
        %v3227 = vxor.u32 %v3219, 2147483648
        %v3228 = vxor.u32 %v3220, 2147483648
        %v3229 = vxor.u32 %v3221, 2147483648
        %v3230 = vxor.u32 %v3222, 2147483648
        %v3231 = vxor.u32 %v3223, 2147483648
        %v3232 = vxor.u32 %v3224, 2147483648
        %v3233 = vmul.f32 %v3225, 1.442695
        %v3234 = vpow.pop %v3233
        %v3235 = vmul.f32 %v3226, 1.442695
        %v3236 = vpow.pop %v3235
        %v3237 = vmul.f32 %v3227, 1.442695
        %v3238 = vpow.pop %v3237
        %v3239 = vmul.f32 %v3228, 1.442695
        %v3240 = vpow.pop %v3239
        %v3241 = vmul.f32 %v3229, 1.442695
        %v3242 = vpow.pop %v3241
        %v3243 = vmul.f32 %v3230, 1.442695
        %v3244 = vpow.pop %v3243
        %v3245 = vmul.f32 %v3231, 1.442695
        %v3246 = vpow.pop %v3245
        %v3247 = vmul.f32 %v3232, 1.442695
        %v3248 = vpow.pop %v3247
        %v3249 = vadd.f32 %v3234, 1.0
        %v3250 = vadd.f32 %v3236, 1.0
        %v3251 = vadd.f32 %v3238, 1.0
        %v3252 = vadd.f32 %v3240, 1.0
        %v3253 = vadd.f32 %v3242, 1.0
        %v3254 = vadd.f32 %v3244, 1.0
        %v3255 = vadd.f32 %v3246, 1.0
        %v3256 = vadd.f32 %v3248, 1.0
        %v3257 = vrcp.pop %v3249
        %v3258 = vmul.f32 1.0, %v3257
        %v3259 = vrcp.pop %v3250
        %v3260 = vmul.f32 1.0, %v3259
        %v3261 = vrcp.pop %v3251
        %v3262 = vmul.f32 1.0, %v3261
        %v3263 = vrcp.pop %v3252
        %v3264 = vmul.f32 1.0, %v3263
        %v3265 = vrcp.pop %v3253
        %v3266 = vmul.f32 1.0, %v3265
        %v3267 = vrcp.pop %v3254
        %v3268 = vmul.f32 1.0, %v3267
        %v3269 = vrcp.pop %v3255
        %v3270 = vmul.f32 1.0, %v3269
        %v3271 = vrcp.pop %v3256
        %v3272 = vmul.f32 1.0, %v3271
        %v3273 = vld [vmem:[%s224 + $0x8] sm:$0x8]
        %v3274 = vld [vmem:[%s224 + $0x14] sm:$0x8]
        %v3275 = vld [vmem:[%s224 + $0x20] sm:$0x8]
        %v3276 = vld [vmem:[%s224 + $0x2c] sm:$0x8]
        %v3277 = vld [vmem:[%s224 + $0x38] sm:$0x8]
        %v3278 = vld [vmem:[%s224 + $0x44] sm:$0x8]
        %v3279 = vld [vmem:[%s224 + $0x50] sm:$0x8]
        %v3280 = vld [vmem:[%s224 + $0x5c] sm:$0x8]
        %v3281 = vunpack.c.l.bf16 %v3273
        %v3282 = vunpack.c.l.bf16 %v3274
        %v3283 = vunpack.c.l.bf16 %v3275
        %v3284 = vunpack.c.l.bf16 %v3276
        %v3285 = vunpack.c.l.bf16 %v3277
        %v3286 = vunpack.c.l.bf16 %v3278
        %v3287 = vunpack.c.l.bf16 %v3279
        %v3288 = vunpack.c.l.bf16 %v3280
        %v3289 = vadd.f32 %v3092, %v289
        %v3291 = vrot.slane %v3289, 2
        %v3292 = vrot.slane %v3289, 3
        %v3293 = vrot.slane %v3289, 4
        %v3294 = vrot.slane %v3289, 5
        %v3295 = vrot.slane %v3289, 6
        %v3296 = vrot.slane %v3289, 7
        %v3297 = vrot.slane %v3289, 1
        %v3306 = vmul.f32 %v3170, %v3291
        %v3307 = vmul.f32 %v3172, %v3292
        %v3308 = vmul.f32 %v3174, %v3293
        %v3309 = vmul.f32 %v3176, %v3294
        %v3310 = vmul.f32 %v3178, %v3295
        %v3311 = vmul.f32 %v3180, %v3296
        %v3312 = vmul.f32 %v3182, %v3289
        %v3313 = vmul.f32 %v3184, %v3297
        %v3314 = vadd.f32 %v3281, %v3306
        %v3315 = vadd.f32 %v3282, %v3307
        %v3316 = vadd.f32 %v3283, %v3308
        %v3317 = vadd.f32 %v3284, %v3309
        %v3318 = vadd.f32 %v3285, %v3310
        %v3319 = vadd.f32 %v3286, %v3311
        %v3320 = vadd.f32 %v3287, %v3312
        %v3321 = vadd.f32 %v3288, %v3313
        %v3322 = vtanh.pop %v3314
        %v3323 = vtanh.pop %v3315
        %v3324 = vtanh.pop %v3316
        %v3325 = vtanh.pop %v3317
        %v3326 = vtanh.pop %v3318
        %v3327 = vtanh.pop %v3319
        %v3328 = vtanh.pop %v3320
        %v3329 = vtanh.pop %v3321
        %v3338 = vrot.slane %v3322, 1
        %v3339 = vrot.slane %v3323, 1
        %v3340 = vrot.slane %v3324, 1
        %v3341 = vrot.slane %v3325, 1
        %v3342 = vrot.slane %v3326, 1
        %v3343 = vrot.slane %v3327, 1
        %v3344 = vrot.slane %v3328, 1
        %v3345 = vrot.slane %v3329, 1
        %v3354 = vsub.f32 %v2960, %v3338
        %v3355 = vsub.f32 %v2961, %v3339
        %v3356 = vsub.f32 %v2962, %v3340
        %v3357 = vsub.f32 %v2963, %v3341
        %v3358 = vsub.f32 %v2964, %v3342
        %v3359 = vsub.f32 %v2965, %v3343
        %v3360 = vsub.f32 %v2966, %v3344
        %v3361 = vsub.f32 %v2967, %v3345
        %v3370 = vrot.slane %v3354, 7
        %v3371 = vrot.slane %v3355, 7
        %v3372 = vrot.slane %v3356, 7
        %v3373 = vrot.slane %v3357, 7
        %v3374 = vrot.slane %v3358, 7
        %v3375 = vrot.slane %v3359, 7
        %v3376 = vrot.slane %v3360, 7
        %v3377 = vrot.slane %v3361, 7
        %v3386 = vmul.f32 %v3258, %v3370
        %v3387 = vmul.f32 %v3260, %v3371
        %v3388 = vmul.f32 %v3262, %v3372
        %v3389 = vmul.f32 %v3264, %v3373
        %v3390 = vmul.f32 %v3266, %v3374
        %v3391 = vmul.f32 %v3268, %v3375
        %v3392 = vmul.f32 %v3270, %v3376
        %v3393 = vmul.f32 %v3272, %v3377
        %v3394 = vadd.f32 %v3322, %v3386
        %v3395 = vadd.f32 %v3323, %v3387
        %v3396 = vadd.f32 %v3324, %v3388
        %v3397 = vadd.f32 %v3325, %v3389
        %v3398 = vadd.f32 %v3326, %v3390
        %v3399 = vadd.f32 %v3327, %v3391
        %v3400 = vadd.f32 %v3328, %v3392
        %v3401 = vadd.f32 %v3329, %v3393
        %3402 = vst [vmem:[%s243] sm:$0x40] %v3394
        %3403 = vst [vmem:[%s243 + $0x8] sm:$0x40] %v3395
        %3404 = vst [vmem:[%s243 + $0x10] sm:$0x40] %v3396
        %3405 = vst [vmem:[%s243 + $0x18] sm:$0x40] %v3397
        %3406 = vst [vmem:[%s243 + $0x20] sm:$0x40] %v3398
        %3407 = vst [vmem:[%s243 + $0x28] sm:$0x40] %v3399
        %3408 = vst [vmem:[%s243 + $0x30] sm:$0x40] %v3400
        %3409 = vst [vmem:[%s243 + $0x38] sm:$0x40] %v3401
        %v3410 = vpack.c.bf16 %v3394, %v3394
        %v3411 = vpack.c.bf16 %v3395, %v3395
        %v3412 = vpack.c.bf16 %v3396, %v3396
        %v3413 = vpack.c.bf16 %v3397, %v3397
        %v3414 = vpack.c.bf16 %v3398, %v3398
        %v3415 = vpack.c.bf16 %v3399, %v3399
        %v3416 = vpack.c.bf16 %v3400, %v3400
        %v3417 = vpack.c.bf16 %v3401, %v3401
        %v3426 = vunpack.c.l.b16 %v3410
        %v3427 = vunpack.c.l.b16 %v3411
        %v3428 = vunpack.c.l.b16 %v3412
        %v3429 = vunpack.c.l.b16 %v3413
        %v3430 = vunpack.c.l.b16 %v3414
        %v3431 = vunpack.c.l.b16 %v3415
        %v3432 = vunpack.c.l.b16 %v3416
        %v3433 = vunpack.c.l.b16 %v3417
        %v3434 = vrot.slane %v3426, 6
        %v3435 = vrot.slane %v3427, 5
        %v3436 = vsel %vm744, %v3435, %v3434
        %v3437 = vrot.slane %v3428, 4
        %v3438 = vsel %vm747, %v3437, %v3436
        %v3439 = vrot.slane %v3429, 3
        %v3440 = vsel %vm750, %v3439, %v3438
        %v3441 = vrot.slane %v3430, 2
        %v3442 = vsel %vm753, %v3441, %v3440
        %v3443 = vrot.slane %v3431, 1
        %v3444 = vsel %vm756, %v3443, %v3442
        %v3445 = vsel %vm759, %v3432, %v3444
        %v3446 = vrot.slane %v3433, 7
        %v3447 = vsel %vm762, %v3446, %v3445
        %v3448 = vpack.c.b16 %v3447, %v3447
        %3450 = vmatprep.subr.bf16.mxu0 %v395
        %3451 = vmatpush1.bf16.msra.mxu0 %v394
        %3452 = vmatprep.subr.bf16.mxu0 %v392
        %3453 = vmatpush1.bf16.msra.mxu0 %v391
        %3454 = vmatprep.subr.bf16.mxu0 %v389
        %3455 = vmatpush1.bf16.msra.mxu0 %v388
        %3456 = vmatprep.subr.bf16.mxu0 %v386
        %3457 = vmatpush1.bf16.msra.mxu0 %v385
        %3458 = vmatprep.subr.bf16.mxu0 %v383
        %3459 = vmatpush1.bf16.msra.mxu0 %v382
        %3460 = vmatprep.subr.bf16.mxu0 %v380
        %3461 = vmatpush1.bf16.msra.mxu0 %v379
        %3462 = vmatprep.subr.bf16.mxu0 %v377
        %3463 = vmatpush1.bf16.msra.mxu0 %v376
        %3464 = vmatprep.subr.bf16.mxu0 %v374
        %3465 = vmatpush1.bf16.msra.mxu0 %v373
        %3466 = vmatprep.subr.bf16.mxu0 0
        %3467 = vmatpush2.bf16.msra.mxu0 0
        %3468 = vmatprep.subr.bf16.mxu0 0
        %3469 = vmatpush2.bf16.msra.mxu0 0
        %3470 = vmatprep.subr.bf16.mxu0 0
        %3471 = vmatpush2.bf16.msra.mxu0 0
        %3472 = vmatprep.subr.bf16.mxu0 0
        %3473 = vmatpush2.bf16.msra.mxu0 0
        %3474 = vmatprep.subr.bf16.mxu0 0
        %3475 = vmatpush2.bf16.msra.mxu0 0
        %3476 = vmatprep.subr.bf16.mxu0 0
        %3477 = vmatpush2.bf16.msra.mxu0 0
        %3478 = vmatprep.subr.bf16.mxu0 0
        %3479 = vmatpush2.bf16.msra.mxu0 0
        %3480 = vmatprep.subr.bf16.mxu0 0
        %3481 = vmatpush2.bf16.msra.mxu0 0
        %3482 = vmatprep.mubr.bf16.mxu0 0
        %3483 = vmatmul.mubr.bf16.gmra.mxu0 %v3448
        %v3484 = vpop.f32.mrf.mxu0
        %v3485 = vadd.f32 0.0, %v3484
        %v3486 = vpop.f32.mrf.mxu0
        %v3487 = vadd.f32 0.0, %v3486
        %v3488 = vpop.f32.mrf.mxu0
        %v3489 = vpop.f32.mrf.mxu0
        %3490 = vdwg.mxu0
        %3491 = vmatprep.subr.bf16.mxu0 0
        %3492 = vmatpush1.bf16.msra.mxu0 %v396
        %3493 = vmatprep.subr.bf16.mxu0 0
        %3494 = vmatpush1.bf16.msra.mxu0 %v393
        %3495 = vmatprep.subr.bf16.mxu0 0
        %3496 = vmatpush1.bf16.msra.mxu0 %v390
        %3497 = vmatprep.subr.bf16.mxu0 0
        %3498 = vmatpush1.bf16.msra.mxu0 %v387
        %3499 = vmatprep.subr.bf16.mxu0 0
        %3500 = vmatpush1.bf16.msra.mxu0 %v384
        %3501 = vmatprep.subr.bf16.mxu0 0
        %3502 = vmatpush1.bf16.msra.mxu0 %v381
        %3503 = vmatprep.subr.bf16.mxu0 0
        %3504 = vmatpush1.bf16.msra.mxu0 %v378
        %3505 = vmatprep.subr.bf16.mxu0 0
        %3506 = vmatpush1.bf16.msra.mxu0 %v375
        %3507 = vmatprep.subr.bf16.mxu0 0
        %3508 = vmatpush2.bf16.msra.mxu0 0
        %3509 = vmatprep.subr.bf16.mxu0 0
        %3510 = vmatpush2.bf16.msra.mxu0 0
        %3511 = vmatprep.subr.bf16.mxu0 0
        %3512 = vmatpush2.bf16.msra.mxu0 0
        %3513 = vmatprep.subr.bf16.mxu0 0
        %3514 = vmatpush2.bf16.msra.mxu0 0
        %3515 = vmatprep.subr.bf16.mxu0 0
        %3516 = vmatpush2.bf16.msra.mxu0 0
        %3517 = vmatprep.subr.bf16.mxu0 0
        %3518 = vmatpush2.bf16.msra.mxu0 0
        %3519 = vmatprep.subr.bf16.mxu0 0
        %3520 = vmatpush2.bf16.msra.mxu0 0
        %3521 = vmatprep.subr.bf16.mxu0 0
        %3522 = vmatpush2.bf16.msra.mxu0 0
        %3523 = vmatprep.mubr.bf16.mxu0 0
        %3524 = vmatmul.mubr.bf16.gmra.mxu0 %v3448
        %v3525 = vpop.f32.mrf.mxu0
        %v3526 = vadd.f32 0.0, %v3525
        %v3527 = vpop.f32.mrf.mxu0
        %v3528 = vpop.f32.mrf.mxu0
        %v3529 = vpop.f32.mrf.mxu0
        %3530 = vdwg.mxu0
        %v3531 = vld [vmem:[%s224] sm:$0x8]
        %v3532 = vld [vmem:[%s224 + $0xc] sm:$0x8]
        %v3533 = vld [vmem:[%s224 + $0x18] sm:$0x8]
        %v3534 = vld [vmem:[%s224 + $0x24] sm:$0x8]
        %v3535 = vld [vmem:[%s224 + $0x30] sm:$0x8]
        %v3536 = vld [vmem:[%s224 + $0x3c] sm:$0x8]
        %v3537 = vld [vmem:[%s224 + $0x48] sm:$0x8]
        %v3538 = vld [vmem:[%s224 + $0x54] sm:$0x8]
        %v3539 = vunpack.c.l.bf16 %v3531
        %v3540 = vunpack.c.l.bf16 %v3532
        %v3541 = vunpack.c.l.bf16 %v3533
        %v3542 = vunpack.c.l.bf16 %v3534
        %v3543 = vunpack.c.l.bf16 %v3535
        %v3544 = vunpack.c.l.bf16 %v3536
        %v3545 = vunpack.c.l.bf16 %v3537
        %v3546 = vunpack.c.l.bf16 %v3538
        %v3548 = vrot.slane %v3485, 1
        %v3549 = vrot.slane %v3485, 2
        %v3550 = vrot.slane %v3485, 3
        %v3551 = vrot.slane %v3485, 4
        %v3552 = vrot.slane %v3485, 5
        %v3553 = vrot.slane %v3485, 6
        %v3554 = vrot.slane %v3485, 7
        %v3563 = vadd.f32 %v3539, %v3548
        %v3564 = vadd.f32 %v3540, %v3549
        %v3565 = vadd.f32 %v3541, %v3550
        %v3566 = vadd.f32 %v3542, %v3551
        %v3567 = vadd.f32 %v3543, %v3552
        %v3568 = vadd.f32 %v3544, %v3553
        %v3569 = vadd.f32 %v3545, %v3554
        %v3570 = vadd.f32 %v3546, %v3485
        %v3571 = vxor.u32 %v3563, 2147483648
        %v3572 = vxor.u32 %v3564, 2147483648
        %v3573 = vxor.u32 %v3565, 2147483648
        %v3574 = vxor.u32 %v3566, 2147483648
        %v3575 = vxor.u32 %v3567, 2147483648
        %v3576 = vxor.u32 %v3568, 2147483648
        %v3577 = vxor.u32 %v3569, 2147483648
        %v3578 = vxor.u32 %v3570, 2147483648
        %v3579 = vmul.f32 %v3571, 1.442695
        %v3580 = vpow.pop %v3579
        %v3581 = vmul.f32 %v3572, 1.442695
        %v3582 = vpow.pop %v3581
        %v3583 = vmul.f32 %v3573, 1.442695
        %v3584 = vpow.pop %v3583
        %v3585 = vmul.f32 %v3574, 1.442695
        %v3586 = vpow.pop %v3585
        %v3587 = vmul.f32 %v3575, 1.442695
        %v3588 = vpow.pop %v3587
        %v3589 = vmul.f32 %v3576, 1.442695
        %v3590 = vpow.pop %v3589
        %v3591 = vmul.f32 %v3577, 1.442695
        %v3592 = vpow.pop %v3591
        %v3593 = vmul.f32 %v3578, 1.442695
        %v3594 = vpow.pop %v3593
        %v3595 = vadd.f32 %v3580, 1.0
        %v3596 = vadd.f32 %v3582, 1.0
        %v3597 = vadd.f32 %v3584, 1.0
        %v3598 = vadd.f32 %v3586, 1.0
        %v3599 = vadd.f32 %v3588, 1.0
        %v3600 = vadd.f32 %v3590, 1.0
        %v3601 = vadd.f32 %v3592, 1.0
        %v3602 = vadd.f32 %v3594, 1.0
        %v3603 = vrcp.pop %v3595
        %v3604 = vmul.f32 1.0, %v3603
        %v3605 = vrcp.pop %v3596
        %v3606 = vmul.f32 1.0, %v3605
        %v3607 = vrcp.pop %v3597
        %v3608 = vmul.f32 1.0, %v3607
        %v3609 = vrcp.pop %v3598
        %v3610 = vmul.f32 1.0, %v3609
        %v3611 = vrcp.pop %v3599
        %v3612 = vmul.f32 1.0, %v3611
        %v3613 = vrcp.pop %v3600
        %v3614 = vmul.f32 1.0, %v3613
        %v3615 = vrcp.pop %v3601
        %v3616 = vmul.f32 1.0, %v3615
        %v3617 = vrcp.pop %v3602
        %v3618 = vmul.f32 1.0, %v3617
        %v3619 = vld [vmem:[%s224 + $0x4] sm:$0x8]
        %v3620 = vld [vmem:[%s224 + $0x10] sm:$0x8]
        %v3621 = vld [vmem:[%s224 + $0x1c] sm:$0x8]
        %v3622 = vld [vmem:[%s224 + $0x28] sm:$0x8]
        %v3623 = vld [vmem:[%s224 + $0x34] sm:$0x8]
        %v3624 = vld [vmem:[%s224 + $0x40] sm:$0x8]
        %v3625 = vld [vmem:[%s224 + $0x4c] sm:$0x8]
        %v3626 = vld [vmem:[%s224 + $0x58] sm:$0x8]
        %v3627 = vunpack.c.l.bf16 %v3619
        %v3628 = vunpack.c.l.bf16 %v3620
        %v3629 = vunpack.c.l.bf16 %v3621
        %v3630 = vunpack.c.l.bf16 %v3622
        %v3631 = vunpack.c.l.bf16 %v3623
        %v3632 = vunpack.c.l.bf16 %v3624
        %v3633 = vunpack.c.l.bf16 %v3625
        %v3634 = vunpack.c.l.bf16 %v3626
        %v3636 = vrot.slane %v3487, 1
        %v3637 = vrot.slane %v3487, 2
        %v3638 = vrot.slane %v3487, 3
        %v3639 = vrot.slane %v3487, 4
        %v3640 = vrot.slane %v3487, 5
        %v3641 = vrot.slane %v3487, 6
        %v3642 = vrot.slane %v3487, 7
        %v3651 = vadd.f32 %v3627, %v3636
        %v3652 = vadd.f32 %v3628, %v3637
        %v3653 = vadd.f32 %v3629, %v3638
        %v3654 = vadd.f32 %v3630, %v3639
        %v3655 = vadd.f32 %v3631, %v3640
        %v3656 = vadd.f32 %v3632, %v3641
        %v3657 = vadd.f32 %v3633, %v3642
        %v3658 = vadd.f32 %v3634, %v3487
        %v3659 = vxor.u32 %v3651, 2147483648
        %v3660 = vxor.u32 %v3652, 2147483648
        %v3661 = vxor.u32 %v3653, 2147483648
        %v3662 = vxor.u32 %v3654, 2147483648
        %v3663 = vxor.u32 %v3655, 2147483648
        %v3664 = vxor.u32 %v3656, 2147483648
        %v3665 = vxor.u32 %v3657, 2147483648
        %v3666 = vxor.u32 %v3658, 2147483648
        %v3667 = vmul.f32 %v3659, 1.442695
        %v3668 = vpow.pop %v3667
        %v3669 = vmul.f32 %v3660, 1.442695
        %v3670 = vpow.pop %v3669
        %v3671 = vmul.f32 %v3661, 1.442695
        %v3672 = vpow.pop %v3671
        %v3673 = vmul.f32 %v3662, 1.442695
        %v3674 = vpow.pop %v3673
        %v3675 = vmul.f32 %v3663, 1.442695
        %v3676 = vpow.pop %v3675
        %v3677 = vmul.f32 %v3664, 1.442695
        %v3678 = vpow.pop %v3677
        %v3679 = vmul.f32 %v3665, 1.442695
        %v3680 = vpow.pop %v3679
        %v3681 = vmul.f32 %v3666, 1.442695
        %v3682 = vpow.pop %v3681
        %v3683 = vadd.f32 %v3668, 1.0
        %v3684 = vadd.f32 %v3670, 1.0
        %v3685 = vadd.f32 %v3672, 1.0
        %v3686 = vadd.f32 %v3674, 1.0
        %v3687 = vadd.f32 %v3676, 1.0
        %v3688 = vadd.f32 %v3678, 1.0
        %v3689 = vadd.f32 %v3680, 1.0
        %v3690 = vadd.f32 %v3682, 1.0
        %v3691 = vrcp.pop %v3683
        %v3692 = vmul.f32 1.0, %v3691
        %v3693 = vrcp.pop %v3684
        %v3694 = vmul.f32 1.0, %v3693
        %v3695 = vrcp.pop %v3685
        %v3696 = vmul.f32 1.0, %v3695
        %v3697 = vrcp.pop %v3686
        %v3698 = vmul.f32 1.0, %v3697
        %v3699 = vrcp.pop %v3687
        %v3700 = vmul.f32 1.0, %v3699
        %v3701 = vrcp.pop %v3688
        %v3702 = vmul.f32 1.0, %v3701
        %v3703 = vrcp.pop %v3689
        %v3704 = vmul.f32 1.0, %v3703
        %v3705 = vrcp.pop %v3690
        %v3706 = vmul.f32 1.0, %v3705
        %v3707 = vld [vmem:[%s224 + $0x8] sm:$0x8]
        %v3708 = vld [vmem:[%s224 + $0x14] sm:$0x8]
        %v3709 = vld [vmem:[%s224 + $0x20] sm:$0x8]
        %v3710 = vld [vmem:[%s224 + $0x2c] sm:$0x8]
        %v3711 = vld [vmem:[%s224 + $0x38] sm:$0x8]
        %v3712 = vld [vmem:[%s224 + $0x44] sm:$0x8]
        %v3713 = vld [vmem:[%s224 + $0x50] sm:$0x8]
        %v3714 = vld [vmem:[%s224 + $0x5c] sm:$0x8]
        %v3715 = vunpack.c.l.bf16 %v3707
        %v3716 = vunpack.c.l.bf16 %v3708
        %v3717 = vunpack.c.l.bf16 %v3709
        %v3718 = vunpack.c.l.bf16 %v3710
        %v3719 = vunpack.c.l.bf16 %v3711
        %v3720 = vunpack.c.l.bf16 %v3712
        %v3721 = vunpack.c.l.bf16 %v3713
        %v3722 = vunpack.c.l.bf16 %v3714
        %v3723 = vadd.f32 %v3526, %v289
        %v3725 = vrot.slane %v3723, 1
        %v3726 = vrot.slane %v3723, 2
        %v3727 = vrot.slane %v3723, 3
        %v3728 = vrot.slane %v3723, 4
        %v3729 = vrot.slane %v3723, 5
        %v3730 = vrot.slane %v3723, 6
        %v3731 = vrot.slane %v3723, 7
        %v3740 = vmul.f32 %v3604, %v3725
        %v3741 = vmul.f32 %v3606, %v3726
        %v3742 = vmul.f32 %v3608, %v3727
        %v3743 = vmul.f32 %v3610, %v3728
        %v3744 = vmul.f32 %v3612, %v3729
        %v3745 = vmul.f32 %v3614, %v3730
        %v3746 = vmul.f32 %v3616, %v3731
        %v3747 = vmul.f32 %v3618, %v3723
        %v3748 = vadd.f32 %v3715, %v3740
        %v3749 = vadd.f32 %v3716, %v3741
        %v3750 = vadd.f32 %v3717, %v3742
        %v3751 = vadd.f32 %v3718, %v3743
        %v3752 = vadd.f32 %v3719, %v3744
        %v3753 = vadd.f32 %v3720, %v3745
        %v3754 = vadd.f32 %v3721, %v3746
        %v3755 = vadd.f32 %v3722, %v3747
        %v3756 = vtanh.pop %v3748
        %v3757 = vtanh.pop %v3749
        %v3758 = vtanh.pop %v3750
        %v3759 = vtanh.pop %v3751
        %v3760 = vtanh.pop %v3752
        %v3761 = vtanh.pop %v3753
        %v3762 = vtanh.pop %v3754
        %v3763 = vtanh.pop %v3755
        %v3772 = vrot.slane %v3756, 1
        %v3773 = vrot.slane %v3757, 1
        %v3774 = vrot.slane %v3758, 1
        %v3775 = vrot.slane %v3759, 1
        %v3776 = vrot.slane %v3760, 1
        %v3777 = vrot.slane %v3761, 1
        %v3778 = vrot.slane %v3762, 1
        %v3779 = vrot.slane %v3763, 1
        %v3788 = vsub.f32 %v3394, %v3772
        %v3789 = vsub.f32 %v3395, %v3773
        %v3790 = vsub.f32 %v3396, %v3774
        %v3791 = vsub.f32 %v3397, %v3775
        %v3792 = vsub.f32 %v3398, %v3776
        %v3793 = vsub.f32 %v3399, %v3777
        %v3794 = vsub.f32 %v3400, %v3778
        %v3795 = vsub.f32 %v3401, %v3779
        %v3804 = vrot.slane %v3788, 7
        %v3805 = vrot.slane %v3789, 7
        %v3806 = vrot.slane %v3790, 7
        %v3807 = vrot.slane %v3791, 7
        %v3808 = vrot.slane %v3792, 7
        %v3809 = vrot.slane %v3793, 7
        %v3810 = vrot.slane %v3794, 7
        %v3811 = vrot.slane %v3795, 7
        %v3820 = vmul.f32 %v3692, %v3804
        %v3821 = vmul.f32 %v3694, %v3805
        %v3822 = vmul.f32 %v3696, %v3806
        %v3823 = vmul.f32 %v3698, %v3807
        %v3824 = vmul.f32 %v3700, %v3808
        %v3825 = vmul.f32 %v3702, %v3809
        %v3826 = vmul.f32 %v3704, %v3810
        %v3827 = vmul.f32 %v3706, %v3811
        %v3828 = vadd.f32 %v3756, %v3820
        %v3829 = vadd.f32 %v3757, %v3821
        %v3830 = vadd.f32 %v3758, %v3822
        %v3831 = vadd.f32 %v3759, %v3823
        %v3832 = vadd.f32 %v3760, %v3824
        %v3833 = vadd.f32 %v3761, %v3825
        %v3834 = vadd.f32 %v3762, %v3826
        %v3835 = vadd.f32 %v3763, %v3827
        %3836 = vst [vmem:[%s243] sm:$0x80] %v3828
        %3837 = vst [vmem:[%s243 + $0x8] sm:$0x80] %v3829
        %3838 = vst [vmem:[%s243 + $0x10] sm:$0x80] %v3830
        %3839 = vst [vmem:[%s243 + $0x18] sm:$0x80] %v3831
        %3840 = vst [vmem:[%s243 + $0x20] sm:$0x80] %v3832
        %3841 = vst [vmem:[%s243 + $0x28] sm:$0x80] %v3833
        %3842 = vst [vmem:[%s243 + $0x30] sm:$0x80] %v3834
        %3843 = vst [vmem:[%s243 + $0x38] sm:$0x80] %v3835
        %v3852 = vrot.slane %v3829, 7
        %v3853 = vrot.slane %v3830, 6
        %v3854 = vsel %vm744, %v3853, %v3852
        %v3855 = vrot.slane %v3831, 5
        %v3856 = vsel %vm747, %v3855, %v3854
        %v3857 = vrot.slane %v3832, 4
        %v3858 = vsel %vm750, %v3857, %v3856
        %v3859 = vrot.slane %v3833, 3
        %v3860 = vsel %vm753, %v3859, %v3858
        %v3861 = vrot.slane %v3834, 2
        %v3862 = vsel %vm756, %v3861, %v3860
        %v3863 = vrot.slane %v3835, 1
        %v3864 = vsel %vm759, %v3863, %v3862
        %3867 = vst [vmem:[#allocation2 - $0x7] sm:$0x80] %v3828
        %3868 = vst [vmem:[#allocation2 + $0x1] sm:$0x7f] %v3864
        %s3869 = sand.u32 %s106, 1
        %s3870 = sand.u32 %s106, 1
        %s3871 = smul.addr %s3870, 64
        %s3872 = scalar_lea.vmem [#allocation4], %s3871
        // Predicated region
        $region63: #{gru_encoder_t_forward.1} parent=53 // pred_check
          %p3873 = pneg %p116
        $region64: #{gru_encoder_t_forward.1} parent=53 // pred_check_branch
          %3875 = sbr.rel (%p3873) target = $region66
        $region65: #{gru_encoder_t_forward.1} parent=53 // pred_region
          %s3876 = smul.u32 8, %s18
          %s3877 = smul.addr %s3876, 3
          %s3878 = sadd.s32 %s19, %s3877
          %s3879 = smul.addr %s3878, 8
          %s3880 = scalar_lea.vmem %s3, %s3879
          // Predicated region
          $region67: #{gru_encoder_t_forward.1} parent=65 // pred_check
            _
          $region68: #{gru_encoder_t_forward.1} parent=65 // pred_check_branch
            %3882 = sbr.rel (0) target = $region70
          $region69: #{gru_encoder_t_forward.1} parent=65 // pred_region
            // Predicated region
            $region71: #{gru_encoder_t_forward.1} parent=69 // pred_check
              _
            $region72: #{gru_encoder_t_forward.1} parent=69 // pred_check_branch
              %3884 = sbr.rel (0) target = $region74
            $region73: #{gru_encoder_t_forward.1} parent=69 // pred_region
              // Predicated region
              $region86: #{gru_encoder_t_forward.1} parent=73 // pred_check
                _
              $region87: #{gru_encoder_t_forward.1} parent=73 // pred_check_branch
                %3914 = sbr.rel (0) target = $region89
              $region88: #{gru_encoder_t_forward.1} parent=73 // pred_region
                loop: start=0, step=1, limit=1
                $region90: #{gru_encoder_t_forward.1} parent=88 // loop_pre_header
                  _
                $region91: #{gru_encoder_t_forward.1} parent=88 // loop_header
                  %s3916 = sphi 0, %s3920
                  %p3917 = scmp.ge.s32.totalorder %s3916, 1
                  %s3921 = sphi %s3872, %s3872
                  %s3922 = sphi %s3880, %s3880
                $region92: #{gru_encoder_t_forward.1} parent=88 // loop_header_branch
                  %3919 = sbr.rel (%p3917) target = $region96
                $region93: #{gru_encoder_t_forward.1} parent=88 // loop_body
                  %v3923 = vld [vmem:[%s3921] sm:$0xff]
                  %3924 = vst [vmem:[%s3922] sm:$0xff] %v3923
                  %v3925 = vld [vmem:[%s3921 + $0x8] sm:$0xff]
                  %3926 = vst [vmem:[%s3922 + $0x18] sm:$0xff] %v3925
                  %v3927 = vld [vmem:[%s3921 + $0x10] sm:$0xff]
                  %3928 = vst [vmem:[%s3922 + $0x30] sm:$0xff] %v3927
                  %v3929 = vld [vmem:[%s3921 + $0x18] sm:$0xff]
                  %3930 = vst [vmem:[%s3922 + $0x48] sm:$0xff] %v3929
                  %v3931 = vld [vmem:[%s3921 + $0x20] sm:$0xff]
                  %3932 = vst [vmem:[%s3922 + $0x60] sm:$0xff] %v3931
                  %v3933 = vld [vmem:[%s3921 + $0x28] sm:$0xff]
                  %3934 = vst [vmem:[%s3922 + $0x78] sm:$0xff] %v3933
                  %v3935 = vld [vmem:[%s3921 + $0x30] sm:$0xff]
                  %3936 = vst [vmem:[%s3922 + $0x90] sm:$0xff] %v3935
                  %v3937 = vld [vmem:[%s3921 + $0x38] sm:$0xff]
                  %3938 = vst [vmem:[%s3922 + $0xa8] sm:$0xff] %v3937
                $region94: #{gru_encoder_t_forward.1} parent=88 // loop_footer
                  %s3920 = sadd.s32 1, %s3916
                $region95: #{gru_encoder_t_forward.1} parent=88 // loop_footer_branch
                  %3915 = sbr.rel target = $region91
                $region96: #{gru_encoder_t_forward.1} parent=88 // loop_exit
                  _
              $region89: #{gru_encoder_t_forward.1} parent=73 // pred_fallthru
                _
              // Predicated region
              $region97: #{gru_encoder_t_forward.1} parent=73 // pred_check
                _
              $region98: #{gru_encoder_t_forward.1} parent=73 // pred_check_branch
                %3940 = sbr.rel target = $region100
              $region99: #{gru_encoder_t_forward.1} parent=73 // pred_region
                _
              $region100: #{gru_encoder_t_forward.1} parent=73 // pred_fallthru
                _
            $region74: #{gru_encoder_t_forward.1} parent=69 // pred_fallthru
              _
            // Predicated region
            $region75: #{gru_encoder_t_forward.1} parent=69 // pred_check
              _
            $region76: #{gru_encoder_t_forward.1} parent=69 // pred_check_branch
              %3886 = sbr.rel target = $region78
            $region77: #{gru_encoder_t_forward.1} parent=69 // pred_region
              %s3888 = ssub.s32 256, 1
              loop: start=0, step=1, limit=1
              $region79: #{gru_encoder_t_forward.1} parent=77 // loop_pre_header
                _
              $region80: #{gru_encoder_t_forward.1} parent=77 // loop_header
                %s3890 = sphi 0, %s3894
                %p3891 = scmp.ge.s32.totalorder %s3890, 1
                %s3895 = sphi %s3872, %s3872
                %s3896 = sphi %s3880, %s3880
              $region81: #{gru_encoder_t_forward.1} parent=77 // loop_header_branch
                %3893 = sbr.rel (%p3891) target = $region85
              $region82: #{gru_encoder_t_forward.1} parent=77 // loop_body
                %v3897 = vld [vmem:[%s3895] sm:%s3888]
                %3898 = vst [vmem:[%s3896] sm:%s3888] %v3897
                %v3899 = vld [vmem:[%s3895 + $0x8] sm:%s3888]
                %3900 = vst [vmem:[%s3896 + $0x18] sm:%s3888] %v3899
                %v3901 = vld [vmem:[%s3895 + $0x10] sm:%s3888]
                %3902 = vst [vmem:[%s3896 + $0x30] sm:%s3888] %v3901
                %v3903 = vld [vmem:[%s3895 + $0x18] sm:%s3888]
                %3904 = vst [vmem:[%s3896 + $0x48] sm:%s3888] %v3903
                %v3905 = vld [vmem:[%s3895 + $0x20] sm:%s3888]
                %3906 = vst [vmem:[%s3896 + $0x60] sm:%s3888] %v3905
                %v3907 = vld [vmem:[%s3895 + $0x28] sm:%s3888]
                %3908 = vst [vmem:[%s3896 + $0x78] sm:%s3888] %v3907
                %v3909 = vld [vmem:[%s3895 + $0x30] sm:%s3888]
                %3910 = vst [vmem:[%s3896 + $0x90] sm:%s3888] %v3909
                %v3911 = vld [vmem:[%s3895 + $0x38] sm:%s3888]
                %3912 = vst [vmem:[%s3896 + $0xa8] sm:%s3888] %v3911
              $region83: #{gru_encoder_t_forward.1} parent=77 // loop_footer
                %s3894 = sadd.s32 1, %s3890
              $region84: #{gru_encoder_t_forward.1} parent=77 // loop_footer_branch
                %3889 = sbr.rel target = $region80
              $region85: #{gru_encoder_t_forward.1} parent=77 // loop_exit
                _
            $region78: #{gru_encoder_t_forward.1} parent=69 // pred_fallthru
              _
          $region70: #{gru_encoder_t_forward.1} parent=65 // pred_fallthru
            _
          %3941 = vnop
        $region66: #{gru_encoder_t_forward.1} parent=53 // pred_fallthru
          _
      $region54: #{gru_encoder_t_forward.1} parent=5 // pred_fallthru
        _
      %p3942 = scmp.le.s32.totalorder 2, %s9
      // Predicated region
      $region101: #{gru_encoder_t_forward.1} parent=5 // pred_check
        %p3943 = pneg %p3942
      $region102: #{gru_encoder_t_forward.1} parent=5 // pred_check_branch
        %3945 = sbr.rel (%p3943) target = $region104
      $region103: #{gru_encoder_t_forward.1} parent=5 // pred_region
        %s3946 = ssub.s32 %s9, 2
        // Predicated region
        $region105: #{gru_encoder_t_forward.1} parent=103 // pred_check
          %p3947 = pneg %p122
        $region106: #{gru_encoder_t_forward.1} parent=103 // pred_check_branch
          %3949 = sbr.rel (%p3947) target = $region108
        $region107: #{gru_encoder_t_forward.1} parent=103 // pred_region
          %s3950 = sand.u32 %s107, 1
          %s3951 = sand.u32 %s107, 1
          %s3952 = smul.addr %s3951, 64
          %s3953 = scalar_lea.vmem [#allocation4], %s3952
        $region108: #{gru_encoder_t_forward.1} parent=103 // pred_fallthru
          _
      $region104: #{gru_encoder_t_forward.1} parent=5 // pred_fallthru
        _
    $region6: #{gru_encoder_t_forward.1} parent=1 // loop_footer
      %s13 = sadd.s32 1, %s9
    $region7: #{gru_encoder_t_forward.1} parent=1 // loop_footer_branch
      %8 = sbr.rel target = $region3
    $region8: #{gru_encoder_t_forward.1} parent=1 // loop_exit
      _

</llo_original>
